<compile_context>
chip_gen: v7x
topology: tpu7x:2x2x1
jax: 0.10.0
libtpu: 0.0.40
codegen_flags: <defaults>
</compile_context>

<pallas_src>
import jax
import jax.numpy as jnp
from jax.experimental import pallas as pl
from jax.experimental.pallas import tpu as pltpu

TB = 512          # batch tile (multiple of 256 -> good MXU M on v6e/v7x, 4x128 on v5e)
HID_PAD = 128     # fc2/fc3 hidden dim padded 64 -> 128
CLS_PAD = 128     # class dim padded 10 -> 128 (lane-dense output)
NEG_INF = -1e30   # bias for padded classes so they vanish from the softmax


def mlp_kernel(x_ref, w1_ref, b1_ref, w2_ref, b2_ref, w3_ref, b3_ref, o_ref):
    # fc1 + ReLU  (bf16 MXU matmul, f32 accumulation)
    h1 = jnp.dot(x_ref[...], w1_ref[...], preferred_element_type=jnp.float32)
    h1 = jnp.maximum(h1 + b1_ref[...], 0.0)

    # fc2 + ReLU  (hidden padded to 128 lanes; padded cols are exactly 0)
    h2 = jnp.dot(h1.astype(jnp.bfloat16), w2_ref[...],
                 preferred_element_type=jnp.float32)
    h2 = jnp.maximum(h2 + b2_ref[...], 0.0)

    # fc3  (classes padded to 128 lanes; padded logits ~= -1e30)
    logits = jnp.dot(h2.astype(jnp.bfloat16), w3_ref[...],
                     preferred_element_type=jnp.float32)
    logits = logits + b3_ref[...]

    # LogSoftmax over dim=1 (lane dimension), fused epilogue kept in f32.
    m = jnp.max(logits, axis=-1, keepdims=True)
    shifted = logits - m
    lse = jnp.log(jnp.sum(jnp.exp(shifted), axis=-1, keepdims=True))
    o_ref[...] = shifted - lse


def custom_network_forward(x, w1, b1, w2, b2, w3, b3, *, tb=TB):
    """x: (B, 784) f32.  Weights in (in_features, out_features) layout:
       w1 (784,128) b1 (1,128), w2 (128,64) b2 (1,64), w3 (64,10) b3 (1,10).
       Returns (B, 10) f32 log-probabilities."""
    B = x.shape[0]

    # --- host-side prep: bf16 cast + lane padding -------------------------
    x_bf = x.astype(jnp.bfloat16)
    w1_bf = w1.astype(jnp.bfloat16)                                   # (784,128)
    b1_f = b1.astype(jnp.float32)                                     # (1,128)

    w2_p = jnp.zeros((128, HID_PAD), jnp.float32).at[:, :64].set(w2)
    b2_p = jnp.zeros((1, HID_PAD), jnp.float32).at[:, :64].set(b2)
    w3_p = jnp.zeros((HID_PAD, CLS_PAD), jnp.float32).at[:64, :10].set(w3)
    b3_p = jnp.full((1, CLS_PAD), NEG_INF, jnp.float32).at[:, :10].set(b3)
    w2_bf = w2_p.astype(jnp.bfloat16)
    w3_bf = w3_p.astype(jnp.bfloat16)

    # pad batch up to a multiple of the batch tile (extra rows are sliced off)
    n_tiles = pl.cdiv(B, tb)
    Bp = n_tiles * tb
    if Bp != B:
        x_bf = jnp.pad(x_bf, ((0, Bp - B), (0, 0)))

    const = lambda i: (0, 0)   # weights/biases resident across grid steps

    out = pl.pallas_call(
        mlp_kernel,
        out_shape=jax.ShapeDtypeStruct((Bp, CLS_PAD), jnp.float32),
        grid_spec=pltpu.PrefetchScalarGridSpec(
            num_scalar_prefetch=0,
            grid=(n_tiles,),
            in_specs=[
                pl.BlockSpec((tb, 784), lambda i: (i, 0)),        # x tile streamed
                pl.BlockSpec((784, 128), const),                  # w1
                pl.BlockSpec((1, 128), const),                    # b1
                pl.BlockSpec((128, HID_PAD), const),              # w2 (padded)
                pl.BlockSpec((1, HID_PAD), const),                # b2 (padded)
                pl.BlockSpec((HID_PAD, CLS_PAD), const),          # w3 (padded)
                pl.BlockSpec((1, CLS_PAD), const),                # b3 (padded)
            ],
            out_specs=pl.BlockSpec((tb, CLS_PAD), lambda i: (i, 0)),
        ),
        compiler_params=pltpu.CompilerParams(
            dimension_semantics=("parallel",),   # megacore sharding on v7x
        ),
    )(x_bf, w1_bf, b1_f, w2_bf, b2_p, w3_bf, b3_p)

    return out[:B, :10]


def init_linear(key, fan_in, fan_out):
    # Deterministic init mimicking nn.Linear default: U(-1/sqrt(fan_in), +1/sqrt(fan_in))
    kw, kb = jax.random.split(key)
    bound = 1.0 / jnp.sqrt(jnp.float32(fan_in))
    w = jax.random.uniform(kw, (fan_in, fan_out), jnp.float32, -bound, bound)
    b = jax.random.uniform(kb, (1, fan_out), jnp.float32, -bound, bound)
    return w, b


if __name__ == "__main__":
    key = jax.random.PRNGKey(0)
    kx, k1, k2, k3 = jax.random.split(key, 4)

    B = 8  # small batch (kernel pads to one TB=512 tile internally)
    x = jax.random.normal(kx, (B, 784), jnp.float32)

    w1, b1 = init_linear(k1, 784, 128)
    w2, b2 = init_linear(k2, 128, 64)
    w3, b3 = init_linear(k3, 64, 10)

    out = custom_network_forward(x, w1, b1, w2, b2, w3, b3)
    out = jax.block_until_ready(out)
    assert out.shape == (B, 10)

    # Pure-JAX reference with the same bf16-input / f32-accumulate math.
    xb = x.astype(jnp.bfloat16)
    h = jnp.maximum(jnp.dot(xb, w1.astype(jnp.bfloat16),
                            preferred_element_type=jnp.float32) + b1, 0.0)
    h = jnp.maximum(jnp.dot(h.astype(jnp.bfloat16), w2.astype(jnp.bfloat16),
                            preferred_element_type=jnp.float32) + b2, 0.0)
    logits = jnp.dot(h.astype(jnp.bfloat16), w3.astype(jnp.bfloat16),
                     preferred_element_type=jnp.float32) + b3
    ref = jax.nn.log_softmax(logits, axis=1)
    assert jnp.allclose(out, ref, atol=1e-2, rtol=1e-2), "mismatch vs reference"

    print("KERNEL_OK")
</pallas_src>

<mosaic_0001>
module attributes {stable_mosaic.version = 11 : i64} {
  func.func @mlp_kernel(%arg0: i32, %arg1: memref<512x784xbf16, #tpu.memory_space<vmem>>, %arg2: memref<784x128xbf16, #tpu.memory_space<vmem>>, %arg3: memref<1x128xf32, #tpu.memory_space<vmem>>, %arg4: memref<128x128xbf16, #tpu.memory_space<vmem>>, %arg5: memref<1x128xf32, #tpu.memory_space<vmem>>, %arg6: memref<128x128xbf16, #tpu.memory_space<vmem>>, %arg7: memref<1x128xf32, #tpu.memory_space<vmem>>, %arg8: memref<512x128xf32, #tpu.memory_space<vmem>>) attributes {dimension_semantics = [#tpu.dimension_semantics<parallel>], iteration_bounds = array<i64: 1>, scalar_prefetch = 0 : i64, scratch_operands = 0 : i64, tpu.core_type = #tpu.core_type<tc>, window_params = [{transform_indices = @transform_0, window_bounds = array<i64: 512, 784>}, {pipeline_mode = #tpu.pipeline_mode<synchronous>, transform_indices = @transform_1, window_bounds = array<i64: 784, 128>}, {pipeline_mode = #tpu.pipeline_mode<synchronous>, transform_indices = @transform_2, window_bounds = array<i64: 1, 128>}, {pipeline_mode = #tpu.pipeline_mode<synchronous>, transform_indices = @transform_3, window_bounds = array<i64: 128, 128>}, {pipeline_mode = #tpu.pipeline_mode<synchronous>, transform_indices = @transform_4, window_bounds = array<i64: 1, 128>}, {pipeline_mode = #tpu.pipeline_mode<synchronous>, transform_indices = @transform_5, window_bounds = array<i64: 128, 128>}, {pipeline_mode = #tpu.pipeline_mode<synchronous>, transform_indices = @transform_6, window_bounds = array<i64: 1, 128>}, {transform_indices = @transform_7, window_bounds = array<i64: 512, 128>}]} {
    %c0 = arith.constant 0 : index
    %c0_0 = arith.constant 0 : index
    %0 = vector.load %arg1[%c0, %c0_0] : memref<512x784xbf16, #tpu.memory_space<vmem>>, vector<512x784xbf16>
    %c0_1 = arith.constant 0 : index
    %c0_2 = arith.constant 0 : index
    %1 = vector.load %arg2[%c0_1, %c0_2] : memref<784x128xbf16, #tpu.memory_space<vmem>>, vector<784x128xbf16>
    %cst = arith.constant dense<0.000000e+00> : vector<512x128xf32>
    %2 = tpu.matmul %0, %1, %cst {dimension_numbers = #tpu.dot_dimension_numbers<[1], [0], [0], [1], [0, 0, 1, 1], [], []>} : vector<512x784xbf16>, vector<784x128xbf16>, vector<512x128xf32> -> vector<512x128xf32>
    %c0_3 = arith.constant 0 : index
    %c0_4 = arith.constant 0 : index
    %3 = vector.load %arg3[%c0_3, %c0_4] : memref<1x128xf32, #tpu.memory_space<vmem>>, vector<1x128xf32>
    %4 = vector.broadcast %3 : vector<1x128xf32> to vector<512x128xf32>
    %5 = arith.addf %2, %4 : vector<512x128xf32>
    %cst_5 = arith.constant 0.000000e+00 : f32
    %6 = vector.broadcast %cst_5 : f32 to vector<512x128xf32>
    %7 = arith.maximumf %5, %6 : vector<512x128xf32>
    %8 = arith.truncf %7 : vector<512x128xf32> to vector<512x128xbf16>
    %c0_6 = arith.constant 0 : index
    %c0_7 = arith.constant 0 : index
    %9 = vector.load %arg4[%c0_6, %c0_7] : memref<128x128xbf16, #tpu.memory_space<vmem>>, vector<128x128xbf16>
    %cst_8 = arith.constant dense<0.000000e+00> : vector<512x128xf32>
    %10 = tpu.matmul %8, %9, %cst_8 {dimension_numbers = #tpu.dot_dimension_numbers<[1], [0], [0], [1], [0, 0, 1, 1], [], []>} : vector<512x128xbf16>, vector<128x128xbf16>, vector<512x128xf32> -> vector<512x128xf32>
    %c0_9 = arith.constant 0 : index
    %c0_10 = arith.constant 0 : index
    %11 = vector.load %arg5[%c0_9, %c0_10] : memref<1x128xf32, #tpu.memory_space<vmem>>, vector<1x128xf32>
    %12 = vector.broadcast %11 : vector<1x128xf32> to vector<512x128xf32>
    %13 = arith.addf %10, %12 : vector<512x128xf32>
    %cst_11 = arith.constant 0.000000e+00 : f32
    %14 = vector.broadcast %cst_11 : f32 to vector<512x128xf32>
    %15 = arith.maximumf %13, %14 : vector<512x128xf32>
    %16 = arith.truncf %15 : vector<512x128xf32> to vector<512x128xbf16>
    %c0_12 = arith.constant 0 : index
    %c0_13 = arith.constant 0 : index
    %17 = vector.load %arg6[%c0_12, %c0_13] : memref<128x128xbf16, #tpu.memory_space<vmem>>, vector<128x128xbf16>
    %cst_14 = arith.constant dense<0.000000e+00> : vector<512x128xf32>
    %18 = tpu.matmul %16, %17, %cst_14 {dimension_numbers = #tpu.dot_dimension_numbers<[1], [0], [0], [1], [0, 0, 1, 1], [], []>} : vector<512x128xbf16>, vector<128x128xbf16>, vector<512x128xf32> -> vector<512x128xf32>
    %c0_15 = arith.constant 0 : index
    %c0_16 = arith.constant 0 : index
    %19 = vector.load %arg7[%c0_15, %c0_16] : memref<1x128xf32, #tpu.memory_space<vmem>>, vector<1x128xf32>
    %20 = vector.broadcast %19 : vector<1x128xf32> to vector<512x128xf32>
    %21 = arith.addf %18, %20 : vector<512x128xf32>
    %cst_17 = arith.constant dense<0xFF800000> : vector<512xf32>
    %22 = vector.multi_reduction <maximumf>, %21, %cst_17 [1] : vector<512x128xf32> to vector<512xf32>
    %23 = vector.shape_cast %22 : vector<512xf32> to vector<512x1xf32>
    %24 = vector.broadcast %23 : vector<512x1xf32> to vector<512x128xf32>
    %25 = arith.subf %21, %24 : vector<512x128xf32>
    %26 = math.exp %25 : vector<512x128xf32>
    %cst_18 = arith.constant dense<0.000000e+00> : vector<512xf32>
    %27 = vector.multi_reduction <add>, %26, %cst_18 [1] : vector<512x128xf32> to vector<512xf32>
    %28 = vector.shape_cast %27 : vector<512xf32> to vector<512x1xf32>
    %29 = math.log %28 : vector<512x1xf32>
    %30 = vector.broadcast %29 : vector<512x1xf32> to vector<512x128xf32>
    %31 = arith.subf %25, %30 : vector<512x128xf32>
    %c0_19 = arith.constant 0 : index
    %c0_20 = arith.constant 0 : index
    %32 = vector.load %arg8[%c0_19, %c0_20] : memref<512x128xf32, #tpu.memory_space<vmem>>, vector<512x128xf32>
    tpu.vector_store %arg8[%c0_19, %c0_20], %31 {strides = array<i32>} : memref<512x128xf32, #tpu.memory_space<vmem>>, vector<512x128xf32>,
    return
  }
  func.func @transform_0(%arg0: i32) -> (i32, i32) {
    %c0_i32 = arith.constant 0 : i32
    %c0_i32_0 = arith.constant 0 : i32
    return %arg0, %c0_i32 : i32, i32
  }
  func.func @transform_1(%arg0: i32) -> (i32, i32) {
    %c0_i32 = arith.constant 0 : i32
    %c0_i32_0 = arith.constant 0 : i32
    %c0_i32_1 = arith.constant 0 : i32
    return %c0_i32, %c0_i32_0 : i32, i32
  }
  func.func @transform_2(%arg0: i32) -> (i32, i32) {
    %c0_i32 = arith.constant 0 : i32
    %c0_i32_0 = arith.constant 0 : i32
    %c0_i32_1 = arith.constant 0 : i32
    return %c0_i32, %c0_i32_0 : i32, i32
  }
  func.func @transform_3(%arg0: i32) -> (i32, i32) {
    %c0_i32 = arith.constant 0 : i32
    %c0_i32_0 = arith.constant 0 : i32
    %c0_i32_1 = arith.constant 0 : i32
    return %c0_i32, %c0_i32_0 : i32, i32
  }
  func.func @transform_4(%arg0: i32) -> (i32, i32) {
    %c0_i32 = arith.constant 0 : i32
    %c0_i32_0 = arith.constant 0 : i32
    %c0_i32_1 = arith.constant 0 : i32
    return %c0_i32, %c0_i32_0 : i32, i32
  }
  func.func @transform_5(%arg0: i32) -> (i32, i32) {
    %c0_i32 = arith.constant 0 : i32
    %c0_i32_0 = arith.constant 0 : i32
    %c0_i32_1 = arith.constant 0 : i32
    return %c0_i32, %c0_i32_0 : i32, i32
  }
  func.func @transform_6(%arg0: i32) -> (i32, i32) {
    %c0_i32 = arith.constant 0 : i32
    %c0_i32_0 = arith.constant 0 : i32
    %c0_i32_1 = arith.constant 0 : i32
    return %c0_i32, %c0_i32_0 : i32, i32
  }
  func.func @transform_7(%arg0: i32) -> (i32, i32) {
    %c0_i32 = arith.constant 0 : i32
    %c0_i32_0 = arith.constant 0 : i32
    return %arg0, %c0_i32 : i32, i32
  }
}

</mosaic_0001>

<llo_original>
// kernel: tpu_custom_call.1
$region0: #{tpu_custom_call.1}
  #allocation0 [shape = 'u32[]', space=smem, size = 0x4, offset = 0x4, fixed_abs, tag = 'smem constant byte address 0x4 - core index']
  #allocation1 [shape = 'u32[144,128]{1,0:T(1,128)}', space=vmem, size = 0x12000, scoped, tag = 'internal scratch']
  %s0 = inlined_call_operand.vmem [shape: bf16[512,784], index: 0, kind: input, shape index: {}]
  %s1 = inlined_call_operand.vmem [shape: bf16[784,128], index: 1, kind: input, shape index: {}]
  %s2 = inlined_call_operand.vmem [shape: f32[1,128], index: 2, kind: input, shape index: {}]
  %s3 = inlined_call_operand.vmem [shape: bf16[128,128], index: 3, kind: input, shape index: {}]
  %s4 = inlined_call_operand.vmem [shape: f32[1,128], index: 4, kind: input, shape index: {}]
  %s5 = inlined_call_operand.vmem [shape: bf16[128,128], index: 5, kind: input, shape index: {}]
  %s6 = inlined_call_operand.vmem [shape: f32[1,128], index: 6, kind: input, shape index: {}]
  %s7 = inlined_call_operand.hbm [shape: f32[512,128], index: 7, kind: output, shape index: {}]
  %s8 = sld [smem:[#allocation0]]
  $region38: #{tpu_custom_call.1} parent=0
    _
  %s10 = ssub.s32 1, %s8
  %s11 = scalar_select 0, %s10, %s8
  $region1: #{tpu_custom_call.1} parent=0
    #allocation2 [shape = 'u8[262144]{0}', space=vmem, size = 0x40000, scoped, tag = 'output window, operand 0, single buffered']
    #allocation3 [shape = 's32[1]{0}', space=sflag, size = 0x4, scoped, tag = 'scoped memory for tpu_custom_call.1']
    %12 = vsyncpa [#allocation3], 0
    // Predicated region
    $region2: #{tpu_custom_call.1} parent=1 // pred_check
      _
    $region3: #{tpu_custom_call.1} parent=1 // pred_check_branch
      %14 = sbr.rel (0) target = $region5
    $region4: #{tpu_custom_call.1} parent=1 // pred_region
      _
    $region5: #{tpu_custom_call.1} parent=1 // pred_fallthru
      _
    // Predicated region
    $region6: #{tpu_custom_call.1} parent=1 // pred_check
      _
    $region7: #{tpu_custom_call.1} parent=1 // pred_check_branch
      %16 = sbr.rel (0) target = $region9
    $region8: #{tpu_custom_call.1} parent=1 // pred_region
      _
    $region9: #{tpu_custom_call.1} parent=1 // pred_fallthru
      _
    // Predicated region
    $region10: #{tpu_custom_call.1} parent=1 // pred_check
      _
    $region11: #{tpu_custom_call.1} parent=1 // pred_check_branch
      %18 = sbr.rel (0) target = $region13
    $region12: #{tpu_custom_call.1} parent=1 // pred_region
      _
    $region13: #{tpu_custom_call.1} parent=1 // pred_fallthru
      _
    // Predicated region
    $region14: #{tpu_custom_call.1} parent=1 // pred_check
      _
    $region15: #{tpu_custom_call.1} parent=1 // pred_check_branch
      %20 = sbr.rel (0) target = $region17
    $region16: #{tpu_custom_call.1} parent=1 // pred_region
      _
    $region17: #{tpu_custom_call.1} parent=1 // pred_fallthru
      _
    // Predicated region
    $region18: #{tpu_custom_call.1} parent=1 // pred_check
      _
    $region19: #{tpu_custom_call.1} parent=1 // pred_check_branch
      %22 = sbr.rel (0) target = $region21
    $region20: #{tpu_custom_call.1} parent=1 // pred_region
      _
    $region21: #{tpu_custom_call.1} parent=1 // pred_fallthru
      _
    // Predicated region
    $region22: #{tpu_custom_call.1} parent=1 // pred_check
      _
    $region23: #{tpu_custom_call.1} parent=1 // pred_check_branch
      %24 = sbr.rel (0) target = $region25
    $region24: #{tpu_custom_call.1} parent=1 // pred_region
      _
    $region25: #{tpu_custom_call.1} parent=1 // pred_fallthru
      _
    // Predicated region
    $region26: #{tpu_custom_call.1} parent=1 // pred_check
      _
    $region27: #{tpu_custom_call.1} parent=1 // pred_check_branch
      %26 = sbr.rel (0) target = $region29
    $region28: #{tpu_custom_call.1} parent=1 // pred_region
      _
    $region29: #{tpu_custom_call.1} parent=1 // pred_fallthru
      _
    %v28 = vld [vmem:[%s0] sm:$0xff]
    %v29 = vld [vmem:[%s0 + $0x8] sm:$0xff]
    %v30 = vld [vmem:[%s0 + $0x10] sm:$0xff]
    %v31 = vld [vmem:[%s0 + $0x18] sm:$0xf]
    %v32 = vld [vmem:[%s0 + $0x1c] sm:$0xff]
    %v33 = vld [vmem:[%s0 + $0x24] sm:$0xff]
    %v34 = vld [vmem:[%s0 + $0x2c] sm:$0xff]
    %v35 = vld [vmem:[%s0 + $0x34] sm:$0xf]
    %v36 = vld [vmem:[%s0 + $0x38] sm:$0xff]
    %v37 = vld [vmem:[%s0 + $0x40] sm:$0xff]
    %v38 = vld [vmem:[%s0 + $0x48] sm:$0xff]
    %v39 = vld [vmem:[%s0 + $0x50] sm:$0xf]
    %v40 = vld [vmem:[%s0 + $0x54] sm:$0xff]
    %v41 = vld [vmem:[%s0 + $0x5c] sm:$0xff]
    %v42 = vld [vmem:[%s0 + $0x64] sm:$0xff]
    %v43 = vld [vmem:[%s0 + $0x6c] sm:$0xf]
    %v44 = vld [vmem:[%s0 + $0x70] sm:$0xff]
    %v45 = vld [vmem:[%s0 + $0x78] sm:$0xff]
    %v46 = vld [vmem:[%s0 + $0x80] sm:$0xff]
    %v47 = vld [vmem:[%s0 + $0x88] sm:$0xf]
    %v48 = vld [vmem:[%s0 + $0x8c] sm:$0xff]
    %v49 = vld [vmem:[%s0 + $0x94] sm:$0xff]
    %v50 = vld [vmem:[%s0 + $0x9c] sm:$0xff]
    %v51 = vld [vmem:[%s0 + $0xa4] sm:$0xf]
    %v52 = vld [vmem:[%s0 + $0xa8] sm:$0xff]
    %v53 = vld [vmem:[%s0 + $0xb0] sm:$0xff]
    %v54 = vld [vmem:[%s0 + $0xb8] sm:$0xff]
    %v55 = vld [vmem:[%s0 + $0xc0] sm:$0xf]
    %v56 = vld [vmem:[%s0 + $0xc4] sm:$0xff]
    %v57 = vld [vmem:[%s0 + $0xcc] sm:$0xff]
    %v58 = vld [vmem:[%s0 + $0xd4] sm:$0xff]
    %v59 = vld [vmem:[%s0 + $0xdc] sm:$0xf]
    %v60 = vld [vmem:[%s0 + $0xe0] sm:$0xff]
    %v61 = vld [vmem:[%s0 + $0xe8] sm:$0xff]
    %v62 = vld [vmem:[%s0 + $0xf0] sm:$0xff]
    %v63 = vld [vmem:[%s0 + $0xf8] sm:$0xf]
    %v64 = vld [vmem:[%s0 + $0xfc] sm:$0xff]
    %v65 = vld [vmem:[%s0 + $0x104] sm:$0xff]
    %v66 = vld [vmem:[%s0 + $0x10c] sm:$0xff]
    %v67 = vld [vmem:[%s0 + $0x114] sm:$0xf]
    %v68 = vld [vmem:[%s0 + $0x118] sm:$0xff]
    %v69 = vld [vmem:[%s0 + $0x120] sm:$0xff]
    %v70 = vld [vmem:[%s0 + $0x128] sm:$0xff]
    %v71 = vld [vmem:[%s0 + $0x130] sm:$0xf]
    %v72 = vld [vmem:[%s0 + $0x134] sm:$0xff]
    %v73 = vld [vmem:[%s0 + $0x13c] sm:$0xff]
    %v74 = vld [vmem:[%s0 + $0x144] sm:$0xff]
    %v75 = vld [vmem:[%s0 + $0x14c] sm:$0xf]
    %v76 = vld [vmem:[%s0 + $0x150] sm:$0xff]
    %v77 = vld [vmem:[%s0 + $0x158] sm:$0xff]
    %v78 = vld [vmem:[%s0 + $0x160] sm:$0xff]
    %v79 = vld [vmem:[%s0 + $0x168] sm:$0xf]
    %v80 = vld [vmem:[%s0 + $0x16c] sm:$0xff]
    %v81 = vld [vmem:[%s0 + $0x174] sm:$0xff]
    %v82 = vld [vmem:[%s0 + $0x17c] sm:$0xff]
    %v83 = vld [vmem:[%s0 + $0x184] sm:$0xf]
    %v84 = vld [vmem:[%s0 + $0x188] sm:$0xff]
    %v85 = vld [vmem:[%s0 + $0x190] sm:$0xff]
    %v86 = vld [vmem:[%s0 + $0x198] sm:$0xff]
    %v87 = vld [vmem:[%s0 + $0x1a0] sm:$0xf]
    %v88 = vld [vmem:[%s0 + $0x1a4] sm:$0xff]
    %v89 = vld [vmem:[%s0 + $0x1ac] sm:$0xff]
    %v90 = vld [vmem:[%s0 + $0x1b4] sm:$0xff]
    %v91 = vld [vmem:[%s0 + $0x1bc] sm:$0xf]
    %v92 = vld [vmem:[%s0 + $0x1c0] sm:$0xff]
    %v93 = vld [vmem:[%s0 + $0x1c8] sm:$0xff]
    %v94 = vld [vmem:[%s0 + $0x1d0] sm:$0xff]
    %v95 = vld [vmem:[%s0 + $0x1d8] sm:$0xf]
    %v96 = vld [vmem:[%s0 + $0x1dc] sm:$0xff]
    %v97 = vld [vmem:[%s0 + $0x1e4] sm:$0xff]
    %v98 = vld [vmem:[%s0 + $0x1ec] sm:$0xff]
    %v99 = vld [vmem:[%s0 + $0x1f4] sm:$0xf]
    %v100 = vld [vmem:[%s0 + $0x1f8] sm:$0xff]
    %v101 = vld [vmem:[%s0 + $0x200] sm:$0xff]
    %v102 = vld [vmem:[%s0 + $0x208] sm:$0xff]
    %v103 = vld [vmem:[%s0 + $0x210] sm:$0xf]
    %v104 = vld [vmem:[%s0 + $0x214] sm:$0xff]
    %v105 = vld [vmem:[%s0 + $0x21c] sm:$0xff]
    %v106 = vld [vmem:[%s0 + $0x224] sm:$0xff]
    %v107 = vld [vmem:[%s0 + $0x22c] sm:$0xf]
    %v108 = vld [vmem:[%s0 + $0x230] sm:$0xff]
    %v109 = vld [vmem:[%s0 + $0x238] sm:$0xff]
    %v110 = vld [vmem:[%s0 + $0x240] sm:$0xff]
    %v111 = vld [vmem:[%s0 + $0x248] sm:$0xf]
    %v112 = vld [vmem:[%s0 + $0x24c] sm:$0xff]
    %v113 = vld [vmem:[%s0 + $0x254] sm:$0xff]
    %v114 = vld [vmem:[%s0 + $0x25c] sm:$0xff]
    %v115 = vld [vmem:[%s0 + $0x264] sm:$0xf]
    %v116 = vld [vmem:[%s0 + $0x268] sm:$0xff]
    %v117 = vld [vmem:[%s0 + $0x270] sm:$0xff]
    %v118 = vld [vmem:[%s0 + $0x278] sm:$0xff]
    %v119 = vld [vmem:[%s0 + $0x280] sm:$0xf]
    %v120 = vld [vmem:[%s0 + $0x284] sm:$0xff]
    %v121 = vld [vmem:[%s0 + $0x28c] sm:$0xff]
    %v122 = vld [vmem:[%s0 + $0x294] sm:$0xff]
    %v123 = vld [vmem:[%s0 + $0x29c] sm:$0xf]
    %v124 = vld [vmem:[%s0 + $0x2a0] sm:$0xff]
    %v125 = vld [vmem:[%s0 + $0x2a8] sm:$0xff]
    %v126 = vld [vmem:[%s0 + $0x2b0] sm:$0xff]
    %v127 = vld [vmem:[%s0 + $0x2b8] sm:$0xf]
    %v128 = vld [vmem:[%s0 + $0x2bc] sm:$0xff]
    %v129 = vld [vmem:[%s0 + $0x2c4] sm:$0xff]
    %v130 = vld [vmem:[%s0 + $0x2cc] sm:$0xff]
    %v131 = vld [vmem:[%s0 + $0x2d4] sm:$0xf]
    %v132 = vld [vmem:[%s0 + $0x2d8] sm:$0xff]
    %v133 = vld [vmem:[%s0 + $0x2e0] sm:$0xff]
    %v134 = vld [vmem:[%s0 + $0x2e8] sm:$0xff]
    %v135 = vld [vmem:[%s0 + $0x2f0] sm:$0xf]
    %v136 = vld [vmem:[%s0 + $0x2f4] sm:$0xff]
    %v137 = vld [vmem:[%s0 + $0x2fc] sm:$0xff]
    %v138 = vld [vmem:[%s0 + $0x304] sm:$0xff]
    %v139 = vld [vmem:[%s0 + $0x30c] sm:$0xf]
    %v140 = vld [vmem:[%s0 + $0x310] sm:$0xff]
    %v141 = vld [vmem:[%s0 + $0x318] sm:$0xff]
    %v142 = vld [vmem:[%s0 + $0x320] sm:$0xff]
    %v143 = vld [vmem:[%s0 + $0x328] sm:$0xf]
    %v144 = vld [vmem:[%s0 + $0x32c] sm:$0xff]
    %v145 = vld [vmem:[%s0 + $0x334] sm:$0xff]
    %v146 = vld [vmem:[%s0 + $0x33c] sm:$0xff]
    %v147 = vld [vmem:[%s0 + $0x344] sm:$0xf]
    %v148 = vld [vmem:[%s0 + $0x348] sm:$0xff]
    %v149 = vld [vmem:[%s0 + $0x350] sm:$0xff]
    %v150 = vld [vmem:[%s0 + $0x358] sm:$0xff]
    %v151 = vld [vmem:[%s0 + $0x360] sm:$0xf]
    %v152 = vld [vmem:[%s0 + $0x364] sm:$0xff]
    %v153 = vld [vmem:[%s0 + $0x36c] sm:$0xff]
    %v154 = vld [vmem:[%s0 + $0x374] sm:$0xff]
    %v155 = vld [vmem:[%s0 + $0x37c] sm:$0xf]
    %v156 = vld [vmem:[%s0 + $0x380] sm:$0xff]
    %v157 = vld [vmem:[%s0 + $0x388] sm:$0xff]
    %v158 = vld [vmem:[%s0 + $0x390] sm:$0xff]
    %v159 = vld [vmem:[%s0 + $0x398] sm:$0xf]
    %v160 = vld [vmem:[%s0 + $0x39c] sm:$0xff]
    %v161 = vld [vmem:[%s0 + $0x3a4] sm:$0xff]
    %v162 = vld [vmem:[%s0 + $0x3ac] sm:$0xff]
    %v163 = vld [vmem:[%s0 + $0x3b4] sm:$0xf]
    %v164 = vld [vmem:[%s0 + $0x3b8] sm:$0xff]
    %v165 = vld [vmem:[%s0 + $0x3c0] sm:$0xff]
    %v166 = vld [vmem:[%s0 + $0x3c8] sm:$0xff]
    %v167 = vld [vmem:[%s0 + $0x3d0] sm:$0xf]
    %v168 = vld [vmem:[%s0 + $0x3d4] sm:$0xff]
    %v169 = vld [vmem:[%s0 + $0x3dc] sm:$0xff]
    %v170 = vld [vmem:[%s0 + $0x3e4] sm:$0xff]
    %v171 = vld [vmem:[%s0 + $0x3ec] sm:$0xf]
    %v172 = vld [vmem:[%s0 + $0x3f0] sm:$0xff]
    %v173 = vld [vmem:[%s0 + $0x3f8] sm:$0xff]
    %v174 = vld [vmem:[%s0 + $0x400] sm:$0xff]
    %v175 = vld [vmem:[%s0 + $0x408] sm:$0xf]
    %v176 = vld [vmem:[%s0 + $0x40c] sm:$0xff]
    %v177 = vld [vmem:[%s0 + $0x414] sm:$0xff]
    %v178 = vld [vmem:[%s0 + $0x41c] sm:$0xff]
    %v179 = vld [vmem:[%s0 + $0x424] sm:$0xf]
    %v180 = vld [vmem:[%s0 + $0x428] sm:$0xff]
    %v181 = vld [vmem:[%s0 + $0x430] sm:$0xff]
    %v182 = vld [vmem:[%s0 + $0x438] sm:$0xff]
    %v183 = vld [vmem:[%s0 + $0x440] sm:$0xf]
    %v184 = vld [vmem:[%s0 + $0x444] sm:$0xff]
    %v185 = vld [vmem:[%s0 + $0x44c] sm:$0xff]
    %v186 = vld [vmem:[%s0 + $0x454] sm:$0xff]
    %v187 = vld [vmem:[%s0 + $0x45c] sm:$0xf]
    %v188 = vld [vmem:[%s0 + $0x460] sm:$0xff]
    %v189 = vld [vmem:[%s0 + $0x468] sm:$0xff]
    %v190 = vld [vmem:[%s0 + $0x470] sm:$0xff]
    %v191 = vld [vmem:[%s0 + $0x478] sm:$0xf]
    %v192 = vld [vmem:[%s0 + $0x47c] sm:$0xff]
    %v193 = vld [vmem:[%s0 + $0x484] sm:$0xff]
    %v194 = vld [vmem:[%s0 + $0x48c] sm:$0xff]
    %v195 = vld [vmem:[%s0 + $0x494] sm:$0xf]
    %v196 = vld [vmem:[%s0 + $0x498] sm:$0xff]
    %v197 = vld [vmem:[%s0 + $0x4a0] sm:$0xff]
    %v198 = vld [vmem:[%s0 + $0x4a8] sm:$0xff]
    %v199 = vld [vmem:[%s0 + $0x4b0] sm:$0xf]
    %v200 = vld [vmem:[%s0 + $0x4b4] sm:$0xff]
    %v201 = vld [vmem:[%s0 + $0x4bc] sm:$0xff]
    %v202 = vld [vmem:[%s0 + $0x4c4] sm:$0xff]
    %v203 = vld [vmem:[%s0 + $0x4cc] sm:$0xf]
    %v204 = vld [vmem:[%s0 + $0x4d0] sm:$0xff]
    %v205 = vld [vmem:[%s0 + $0x4d8] sm:$0xff]
    %v206 = vld [vmem:[%s0 + $0x4e0] sm:$0xff]
    %v207 = vld [vmem:[%s0 + $0x4e8] sm:$0xf]
    %v208 = vld [vmem:[%s0 + $0x4ec] sm:$0xff]
    %v209 = vld [vmem:[%s0 + $0x4f4] sm:$0xff]
    %v210 = vld [vmem:[%s0 + $0x4fc] sm:$0xff]
    %v211 = vld [vmem:[%s0 + $0x504] sm:$0xf]
    %v212 = vld [vmem:[%s0 + $0x508] sm:$0xff]
    %v213 = vld [vmem:[%s0 + $0x510] sm:$0xff]
    %v214 = vld [vmem:[%s0 + $0x518] sm:$0xff]
    %v215 = vld [vmem:[%s0 + $0x520] sm:$0xf]
    %v216 = vld [vmem:[%s0 + $0x524] sm:$0xff]
    %v217 = vld [vmem:[%s0 + $0x52c] sm:$0xff]
    %v218 = vld [vmem:[%s0 + $0x534] sm:$0xff]
    %v219 = vld [vmem:[%s0 + $0x53c] sm:$0xf]
    %v220 = vld [vmem:[%s0 + $0x540] sm:$0xff]
    %v221 = vld [vmem:[%s0 + $0x548] sm:$0xff]
    %v222 = vld [vmem:[%s0 + $0x550] sm:$0xff]
    %v223 = vld [vmem:[%s0 + $0x558] sm:$0xf]
    %v224 = vld [vmem:[%s0 + $0x55c] sm:$0xff]
    %v225 = vld [vmem:[%s0 + $0x564] sm:$0xff]
    %v226 = vld [vmem:[%s0 + $0x56c] sm:$0xff]
    %v227 = vld [vmem:[%s0 + $0x574] sm:$0xf]
    %v228 = vld [vmem:[%s0 + $0x578] sm:$0xff]
    %v229 = vld [vmem:[%s0 + $0x580] sm:$0xff]
    %v230 = vld [vmem:[%s0 + $0x588] sm:$0xff]
    %v231 = vld [vmem:[%s0 + $0x590] sm:$0xf]
    %v232 = vld [vmem:[%s0 + $0x594] sm:$0xff]
    %v233 = vld [vmem:[%s0 + $0x59c] sm:$0xff]
    %v234 = vld [vmem:[%s0 + $0x5a4] sm:$0xff]
    %v235 = vld [vmem:[%s0 + $0x5ac] sm:$0xf]
    %v236 = vld [vmem:[%s0 + $0x5b0] sm:$0xff]
    %v237 = vld [vmem:[%s0 + $0x5b8] sm:$0xff]
    %v238 = vld [vmem:[%s0 + $0x5c0] sm:$0xff]
    %v239 = vld [vmem:[%s0 + $0x5c8] sm:$0xf]
    %v240 = vld [vmem:[%s0 + $0x5cc] sm:$0xff]
    %v241 = vld [vmem:[%s0 + $0x5d4] sm:$0xff]
    %v242 = vld [vmem:[%s0 + $0x5dc] sm:$0xff]
    %v243 = vld [vmem:[%s0 + $0x5e4] sm:$0xf]
    %v244 = vld [vmem:[%s0 + $0x5e8] sm:$0xff]
    %v245 = vld [vmem:[%s0 + $0x5f0] sm:$0xff]
    %v246 = vld [vmem:[%s0 + $0x5f8] sm:$0xff]
    %v247 = vld [vmem:[%s0 + $0x600] sm:$0xf]
    %v248 = vld [vmem:[%s0 + $0x604] sm:$0xff]
    %v249 = vld [vmem:[%s0 + $0x60c] sm:$0xff]
    %v250 = vld [vmem:[%s0 + $0x614] sm:$0xff]
    %v251 = vld [vmem:[%s0 + $0x61c] sm:$0xf]
    %v252 = vld [vmem:[%s0 + $0x620] sm:$0xff]
    %v253 = vld [vmem:[%s0 + $0x628] sm:$0xff]
    %v254 = vld [vmem:[%s0 + $0x630] sm:$0xff]
    %v255 = vld [vmem:[%s0 + $0x638] sm:$0xf]
    %v256 = vld [vmem:[%s0 + $0x63c] sm:$0xff]
    %v257 = vld [vmem:[%s0 + $0x644] sm:$0xff]
    %v258 = vld [vmem:[%s0 + $0x64c] sm:$0xff]
    %v259 = vld [vmem:[%s0 + $0x654] sm:$0xf]
    %v260 = vld [vmem:[%s0 + $0x658] sm:$0xff]
    %v261 = vld [vmem:[%s0 + $0x660] sm:$0xff]
    %v262 = vld [vmem:[%s0 + $0x668] sm:$0xff]
    %v263 = vld [vmem:[%s0 + $0x670] sm:$0xf]
    %v264 = vld [vmem:[%s0 + $0x674] sm:$0xff]
    %v265 = vld [vmem:[%s0 + $0x67c] sm:$0xff]
    %v266 = vld [vmem:[%s0 + $0x684] sm:$0xff]
    %v267 = vld [vmem:[%s0 + $0x68c] sm:$0xf]
    %v268 = vld [vmem:[%s0 + $0x690] sm:$0xff]
    %v269 = vld [vmem:[%s0 + $0x698] sm:$0xff]
    %v270 = vld [vmem:[%s0 + $0x6a0] sm:$0xff]
    %v271 = vld [vmem:[%s0 + $0x6a8] sm:$0xf]
    %v272 = vld [vmem:[%s0 + $0x6ac] sm:$0xff]
    %v273 = vld [vmem:[%s0 + $0x6b4] sm:$0xff]
    %v274 = vld [vmem:[%s0 + $0x6bc] sm:$0xff]
    %v275 = vld [vmem:[%s0 + $0x6c4] sm:$0xf]
    %v276 = vld [vmem:[%s0 + $0x6c8] sm:$0xff]
    %v277 = vld [vmem:[%s0 + $0x6d0] sm:$0xff]
    %v278 = vld [vmem:[%s0 + $0x6d8] sm:$0xff]
    %v279 = vld [vmem:[%s0 + $0x6e0] sm:$0xf]
    %v280 = vld [vmem:[%s0 + $0x6e4] sm:$0xff]
    %v281 = vld [vmem:[%s0 + $0x6ec] sm:$0xff]
    %v282 = vld [vmem:[%s0 + $0x6f4] sm:$0xff]
    %v283 = vld [vmem:[%s0 + $0x6fc] sm:$0xf]
    %v284 = vld [vmem:[%s1] sm:$0xf]
    %v285 = vld [vmem:[%s1 + $0x4] sm:$0xf]
    %v286 = vld [vmem:[%s1 + $0x8] sm:$0xf]
    %v287 = vld [vmem:[%s1 + $0xc] sm:$0xf]
    %v288 = vld [vmem:[%s1 + $0x10] sm:$0xf]
    %v289 = vld [vmem:[%s1 + $0x14] sm:$0xf]
    %v290 = vld [vmem:[%s1 + $0x18] sm:$0xf]
    %v291 = vld [vmem:[%s1 + $0x1c] sm:$0xf]
    %v292 = vld [vmem:[%s1 + $0x20] sm:$0xf]
    %v293 = vld [vmem:[%s1 + $0x24] sm:$0xf]
    %v294 = vld [vmem:[%s1 + $0x28] sm:$0xf]
    %v295 = vld [vmem:[%s1 + $0x2c] sm:$0xf]
    %v296 = vld [vmem:[%s1 + $0x30] sm:$0xf]
    %v297 = vld [vmem:[%s1 + $0x34] sm:$0xf]
    %v298 = vld [vmem:[%s1 + $0x38] sm:$0xf]
    %v299 = vld [vmem:[%s1 + $0x3c] sm:$0xf]
    %v300 = vld [vmem:[%s1 + $0x40] sm:$0xf]
    %v301 = vld [vmem:[%s1 + $0x44] sm:$0xf]
    %v302 = vld [vmem:[%s1 + $0x48] sm:$0xf]
    %v303 = vld [vmem:[%s1 + $0x4c] sm:$0xf]
    %v304 = vld [vmem:[%s1 + $0x50] sm:$0xf]
    %v305 = vld [vmem:[%s1 + $0x54] sm:$0xf]
    %v306 = vld [vmem:[%s1 + $0x58] sm:$0xf]
    %v307 = vld [vmem:[%s1 + $0x5c] sm:$0xf]
    %v308 = vld [vmem:[%s1 + $0x60] sm:$0xf]
    %v309 = vld [vmem:[%s1 + $0x64] sm:$0xf]
    %v310 = vld [vmem:[%s1 + $0x68] sm:$0xf]
    %v311 = vld [vmem:[%s1 + $0x6c] sm:$0xf]
    %v312 = vld [vmem:[%s1 + $0x70] sm:$0xf]
    %v313 = vld [vmem:[%s1 + $0x74] sm:$0xf]
    %v314 = vld [vmem:[%s1 + $0x78] sm:$0xf]
    %v315 = vld [vmem:[%s1 + $0x7c] sm:$0xf]
    %v316 = vld [vmem:[%s1 + $0x80] sm:$0xf]
    %v317 = vld [vmem:[%s1 + $0x84] sm:$0xf]
    %v318 = vld [vmem:[%s1 + $0x88] sm:$0xf]
    %v319 = vld [vmem:[%s1 + $0x8c] sm:$0xf]
    %v320 = vld [vmem:[%s1 + $0x90] sm:$0xf]
    %v321 = vld [vmem:[%s1 + $0x94] sm:$0xf]
    %v322 = vld [vmem:[%s1 + $0x98] sm:$0xf]
    %v323 = vld [vmem:[%s1 + $0x9c] sm:$0xf]
    %v324 = vld [vmem:[%s1 + $0xa0] sm:$0xf]
    %v325 = vld [vmem:[%s1 + $0xa4] sm:$0xf]
    %v326 = vld [vmem:[%s1 + $0xa8] sm:$0xf]
    %v327 = vld [vmem:[%s1 + $0xac] sm:$0xf]
    %v328 = vld [vmem:[%s1 + $0xb0] sm:$0xf]
    %v329 = vld [vmem:[%s1 + $0xb4] sm:$0xf]
    %v330 = vld [vmem:[%s1 + $0xb8] sm:$0xf]
    %v331 = vld [vmem:[%s1 + $0xbc] sm:$0xf]
    %v332 = vld [vmem:[%s1 + $0xc0] sm:$0xf]
    %v333 = vld [vmem:[%s1 + $0xc4] sm:$0xf]
    %v334 = vld [vmem:[%s1 + $0xc8] sm:$0xf]
    %v335 = vld [vmem:[%s1 + $0xcc] sm:$0xf]
    %v336 = vld [vmem:[%s1 + $0xd0] sm:$0xf]
    %v337 = vld [vmem:[%s1 + $0xd4] sm:$0xf]
    %v338 = vld [vmem:[%s1 + $0xd8] sm:$0xf]
    %v339 = vld [vmem:[%s1 + $0xdc] sm:$0xf]
    %v340 = vld [vmem:[%s1 + $0xe0] sm:$0xf]
    %v341 = vld [vmem:[%s1 + $0xe4] sm:$0xf]
    %v342 = vld [vmem:[%s1 + $0xe8] sm:$0xf]
    %v343 = vld [vmem:[%s1 + $0xec] sm:$0xf]
    %v344 = vld [vmem:[%s1 + $0xf0] sm:$0xf]
    %v345 = vld [vmem:[%s1 + $0xf4] sm:$0xf]
    %v346 = vld [vmem:[%s1 + $0xf8] sm:$0xf]
    %v347 = vld [vmem:[%s1 + $0xfc] sm:$0xf]
    %v348 = vld [vmem:[%s1 + $0x100] sm:$0xf]
    %v349 = vld [vmem:[%s1 + $0x104] sm:$0xf]
    %v350 = vld [vmem:[%s1 + $0x108] sm:$0xf]
    %v351 = vld [vmem:[%s1 + $0x10c] sm:$0xf]
    %v352 = vld [vmem:[%s1 + $0x110] sm:$0xf]
    %v353 = vld [vmem:[%s1 + $0x114] sm:$0xf]
    %v354 = vld [vmem:[%s1 + $0x118] sm:$0xf]
    %v355 = vld [vmem:[%s1 + $0x11c] sm:$0xf]
    %v356 = vld [vmem:[%s1 + $0x120] sm:$0xf]
    %v357 = vld [vmem:[%s1 + $0x124] sm:$0xf]
    %v358 = vld [vmem:[%s1 + $0x128] sm:$0xf]
    %v359 = vld [vmem:[%s1 + $0x12c] sm:$0xf]
    %v360 = vld [vmem:[%s1 + $0x130] sm:$0xf]
    %v361 = vld [vmem:[%s1 + $0x134] sm:$0xf]
    %v362 = vld [vmem:[%s1 + $0x138] sm:$0xf]
    %v363 = vld [vmem:[%s1 + $0x13c] sm:$0xf]
    %v364 = vld [vmem:[%s1 + $0x140] sm:$0xf]
    %v365 = vld [vmem:[%s1 + $0x144] sm:$0xf]
    %v366 = vld [vmem:[%s1 + $0x148] sm:$0xf]
    %v367 = vld [vmem:[%s1 + $0x14c] sm:$0xf]
    %v368 = vld [vmem:[%s1 + $0x150] sm:$0xf]
    %v369 = vld [vmem:[%s1 + $0x154] sm:$0xf]
    %v370 = vld [vmem:[%s1 + $0x158] sm:$0xf]
    %v371 = vld [vmem:[%s1 + $0x15c] sm:$0xf]
    %v372 = vld [vmem:[%s1 + $0x160] sm:$0xf]
    %v373 = vld [vmem:[%s1 + $0x164] sm:$0xf]
    %v374 = vld [vmem:[%s1 + $0x168] sm:$0xf]
    %v375 = vld [vmem:[%s1 + $0x16c] sm:$0xf]
    %v376 = vld [vmem:[%s1 + $0x170] sm:$0xf]
    %v377 = vld [vmem:[%s1 + $0x174] sm:$0xf]
    %v378 = vld [vmem:[%s1 + $0x178] sm:$0xf]
    %v379 = vld [vmem:[%s1 + $0x17c] sm:$0xf]
    %v380 = vld [vmem:[%s1 + $0x180] sm:$0xf]
    %v381 = vld [vmem:[%s1 + $0x184] sm:$0xf]
    %v382 = vld [vmem:[%s2] sm:$0x1]
    %v384 = vlaneseq
    %v385 = vshrl.u32 %v384, 7
    %v386 = vsub.s32 0, %v385
    %v387 = vrot.slane %v382, %v386
    %v645 = vunpack.c.l.b16 %v28
    %v646 = vunpack.c.h.b16 %v28
    %v647 = vunpack.c.l.b16 %v29
    %v648 = vunpack.c.h.b16 %v29
    %v649 = vunpack.c.l.b16 %v30
    %v650 = vunpack.c.h.b16 %v30
    %v651 = vunpack.c.l.b16 %v31
    %v652 = vunpack.c.l.b16 %v32
    %v653 = vunpack.c.h.b16 %v32
    %v654 = vunpack.c.l.b16 %v33
    %v655 = vunpack.c.h.b16 %v33
    %v656 = vunpack.c.l.b16 %v34
    %v657 = vunpack.c.h.b16 %v34
    %v658 = vunpack.c.l.b16 %v35
    %v659 = vunpack.c.l.b16 %v36
    %v660 = vunpack.c.h.b16 %v36
    %v661 = vunpack.c.l.b16 %v37
    %v662 = vunpack.c.h.b16 %v37
    %v663 = vunpack.c.l.b16 %v38
    %v664 = vunpack.c.h.b16 %v38
    %v665 = vunpack.c.l.b16 %v39
    %v666 = vunpack.c.l.b16 %v40
    %v667 = vunpack.c.h.b16 %v40
    %v668 = vunpack.c.l.b16 %v41
    %v669 = vunpack.c.h.b16 %v41
    %v670 = vunpack.c.l.b16 %v42
    %v671 = vunpack.c.h.b16 %v42
    %v672 = vunpack.c.l.b16 %v43
    %v673 = vunpack.c.l.b16 %v44
    %v674 = vunpack.c.h.b16 %v44
    %v675 = vunpack.c.l.b16 %v45
    %v676 = vunpack.c.h.b16 %v45
    %v677 = vunpack.c.l.b16 %v46
    %v678 = vunpack.c.h.b16 %v46
    %v679 = vunpack.c.l.b16 %v47
    %v680 = vunpack.c.l.b16 %v48
    %v681 = vunpack.c.h.b16 %v48
    %v682 = vunpack.c.l.b16 %v49
    %v683 = vunpack.c.h.b16 %v49
    %v684 = vunpack.c.l.b16 %v50
    %v685 = vunpack.c.h.b16 %v50
    %v686 = vunpack.c.l.b16 %v51
    %v687 = vunpack.c.l.b16 %v52
    %v688 = vunpack.c.h.b16 %v52
    %v689 = vunpack.c.l.b16 %v53
    %v690 = vunpack.c.h.b16 %v53
    %v691 = vunpack.c.l.b16 %v54
    %v692 = vunpack.c.h.b16 %v54
    %v693 = vunpack.c.l.b16 %v55
    %v694 = vunpack.c.l.b16 %v56
    %v695 = vunpack.c.h.b16 %v56
    %v696 = vunpack.c.l.b16 %v57
    %v697 = vunpack.c.h.b16 %v57
    %v698 = vunpack.c.l.b16 %v58
    %v699 = vunpack.c.h.b16 %v58
    %v700 = vunpack.c.l.b16 %v59
    %v701 = vunpack.c.l.b16 %v60
    %v702 = vunpack.c.h.b16 %v60
    %v703 = vunpack.c.l.b16 %v61
    %v704 = vunpack.c.h.b16 %v61
    %v705 = vunpack.c.l.b16 %v62
    %v706 = vunpack.c.h.b16 %v62
    %v707 = vunpack.c.l.b16 %v63
    %v708 = vunpack.c.l.b16 %v64
    %v709 = vunpack.c.h.b16 %v64
    %v710 = vunpack.c.l.b16 %v65
    %v711 = vunpack.c.h.b16 %v65
    %v712 = vunpack.c.l.b16 %v66
    %v713 = vunpack.c.h.b16 %v66
    %v714 = vunpack.c.l.b16 %v67
    %v715 = vunpack.c.l.b16 %v68
    %v716 = vunpack.c.h.b16 %v68
    %v717 = vunpack.c.l.b16 %v69
    %v718 = vunpack.c.h.b16 %v69
    %v719 = vunpack.c.l.b16 %v70
    %v720 = vunpack.c.h.b16 %v70
    %v721 = vunpack.c.l.b16 %v71
    %v722 = vunpack.c.l.b16 %v72
    %v723 = vunpack.c.h.b16 %v72
    %v724 = vunpack.c.l.b16 %v73
    %v725 = vunpack.c.h.b16 %v73
    %v726 = vunpack.c.l.b16 %v74
    %v727 = vunpack.c.h.b16 %v74
    %v728 = vunpack.c.l.b16 %v75
    %v729 = vunpack.c.l.b16 %v76
    %v730 = vunpack.c.h.b16 %v76
    %v731 = vunpack.c.l.b16 %v77
    %v732 = vunpack.c.h.b16 %v77
    %v733 = vunpack.c.l.b16 %v78
    %v734 = vunpack.c.h.b16 %v78
    %v735 = vunpack.c.l.b16 %v79
    %v736 = vunpack.c.l.b16 %v80
    %v737 = vunpack.c.h.b16 %v80
    %v738 = vunpack.c.l.b16 %v81
    %v739 = vunpack.c.h.b16 %v81
    %v740 = vunpack.c.l.b16 %v82
    %v741 = vunpack.c.h.b16 %v82
    %v742 = vunpack.c.l.b16 %v83
    %v743 = vunpack.c.l.b16 %v84
    %v744 = vunpack.c.h.b16 %v84
    %v745 = vunpack.c.l.b16 %v85
    %v746 = vunpack.c.h.b16 %v85
    %v747 = vunpack.c.l.b16 %v86
    %v748 = vunpack.c.h.b16 %v86
    %v749 = vunpack.c.l.b16 %v87
    %v750 = vunpack.c.l.b16 %v88
    %v751 = vunpack.c.h.b16 %v88
    %v752 = vunpack.c.l.b16 %v89
    %v753 = vunpack.c.h.b16 %v89
    %v754 = vunpack.c.l.b16 %v90
    %v755 = vunpack.c.h.b16 %v90
    %v756 = vunpack.c.l.b16 %v91
    %v757 = vunpack.c.l.b16 %v92
    %v758 = vunpack.c.h.b16 %v92
    %v759 = vunpack.c.l.b16 %v93
    %v760 = vunpack.c.h.b16 %v93
    %v761 = vunpack.c.l.b16 %v94
    %v762 = vunpack.c.h.b16 %v94
    %v763 = vunpack.c.l.b16 %v95
    %v764 = vunpack.c.l.b16 %v96
    %v765 = vunpack.c.h.b16 %v96
    %v766 = vunpack.c.l.b16 %v97
    %v767 = vunpack.c.h.b16 %v97
    %v768 = vunpack.c.l.b16 %v98
    %v769 = vunpack.c.h.b16 %v98
    %v770 = vunpack.c.l.b16 %v99
    %v771 = vunpack.c.l.b16 %v100
    %v772 = vunpack.c.h.b16 %v100
    %v773 = vunpack.c.l.b16 %v101
    %v774 = vunpack.c.h.b16 %v101
    %v775 = vunpack.c.l.b16 %v102
    %v776 = vunpack.c.h.b16 %v102
    %v777 = vunpack.c.l.b16 %v103
    %v778 = vunpack.c.l.b16 %v104
    %v779 = vunpack.c.h.b16 %v104
    %v780 = vunpack.c.l.b16 %v105
    %v781 = vunpack.c.h.b16 %v105
    %v782 = vunpack.c.l.b16 %v106
    %v783 = vunpack.c.h.b16 %v106
    %v784 = vunpack.c.l.b16 %v107
    %v785 = vunpack.c.l.b16 %v108
    %v786 = vunpack.c.h.b16 %v108
    %v787 = vunpack.c.l.b16 %v109
    %v788 = vunpack.c.h.b16 %v109
    %v789 = vunpack.c.l.b16 %v110
    %v790 = vunpack.c.h.b16 %v110
    %v791 = vunpack.c.l.b16 %v111
    %v792 = vunpack.c.l.b16 %v112
    %v793 = vunpack.c.h.b16 %v112
    %v794 = vunpack.c.l.b16 %v113
    %v795 = vunpack.c.h.b16 %v113
    %v796 = vunpack.c.l.b16 %v114
    %v797 = vunpack.c.h.b16 %v114
    %v798 = vunpack.c.l.b16 %v115
    %v799 = vunpack.c.l.b16 %v116
    %v800 = vunpack.c.h.b16 %v116
    %v801 = vunpack.c.l.b16 %v117
    %v802 = vunpack.c.h.b16 %v117
    %v803 = vunpack.c.l.b16 %v118
    %v804 = vunpack.c.h.b16 %v118
    %v805 = vunpack.c.l.b16 %v119
    %v806 = vunpack.c.l.b16 %v120
    %v807 = vunpack.c.h.b16 %v120
    %v808 = vunpack.c.l.b16 %v121
    %v809 = vunpack.c.h.b16 %v121
    %v810 = vunpack.c.l.b16 %v122
    %v811 = vunpack.c.h.b16 %v122
    %v812 = vunpack.c.l.b16 %v123
    %v813 = vunpack.c.l.b16 %v124
    %v814 = vunpack.c.h.b16 %v124
    %v815 = vunpack.c.l.b16 %v125
    %v816 = vunpack.c.h.b16 %v125
    %v817 = vunpack.c.l.b16 %v126
    %v818 = vunpack.c.h.b16 %v126
    %v819 = vunpack.c.l.b16 %v127
    %v820 = vunpack.c.l.b16 %v128
    %v821 = vunpack.c.h.b16 %v128
    %v822 = vunpack.c.l.b16 %v129
    %v823 = vunpack.c.h.b16 %v129
    %v824 = vunpack.c.l.b16 %v130
    %v825 = vunpack.c.h.b16 %v130
    %v826 = vunpack.c.l.b16 %v131
    %v827 = vunpack.c.l.b16 %v132
    %v828 = vunpack.c.h.b16 %v132
    %v829 = vunpack.c.l.b16 %v133
    %v830 = vunpack.c.h.b16 %v133
    %v831 = vunpack.c.l.b16 %v134
    %v832 = vunpack.c.h.b16 %v134
    %v833 = vunpack.c.l.b16 %v135
    %v834 = vunpack.c.l.b16 %v136
    %v835 = vunpack.c.h.b16 %v136
    %v836 = vunpack.c.l.b16 %v137
    %v837 = vunpack.c.h.b16 %v137
    %v838 = vunpack.c.l.b16 %v138
    %v839 = vunpack.c.h.b16 %v138
    %v840 = vunpack.c.l.b16 %v139
    %v841 = vunpack.c.l.b16 %v140
    %v842 = vunpack.c.h.b16 %v140
    %v843 = vunpack.c.l.b16 %v141
    %v844 = vunpack.c.h.b16 %v141
    %v845 = vunpack.c.l.b16 %v142
    %v846 = vunpack.c.h.b16 %v142
    %v847 = vunpack.c.l.b16 %v143
    %v848 = vunpack.c.l.b16 %v144
    %v849 = vunpack.c.h.b16 %v144
    %v850 = vunpack.c.l.b16 %v145
    %v851 = vunpack.c.h.b16 %v145
    %v852 = vunpack.c.l.b16 %v146
    %v853 = vunpack.c.h.b16 %v146
    %v854 = vunpack.c.l.b16 %v147
    %v855 = vunpack.c.l.b16 %v148
    %v856 = vunpack.c.h.b16 %v148
    %v857 = vunpack.c.l.b16 %v149
    %v858 = vunpack.c.h.b16 %v149
    %v859 = vunpack.c.l.b16 %v150
    %v860 = vunpack.c.h.b16 %v150
    %v861 = vunpack.c.l.b16 %v151
    %v862 = vunpack.c.l.b16 %v152
    %v863 = vunpack.c.h.b16 %v152
    %v864 = vunpack.c.l.b16 %v153
    %v865 = vunpack.c.h.b16 %v153
    %v866 = vunpack.c.l.b16 %v154
    %v867 = vunpack.c.h.b16 %v154
    %v868 = vunpack.c.l.b16 %v155
    %v869 = vunpack.c.l.b16 %v156
    %v870 = vunpack.c.h.b16 %v156
    %v871 = vunpack.c.l.b16 %v157
    %v872 = vunpack.c.h.b16 %v157
    %v873 = vunpack.c.l.b16 %v158
    %v874 = vunpack.c.h.b16 %v158
    %v875 = vunpack.c.l.b16 %v159
    %v876 = vunpack.c.l.b16 %v160
    %v877 = vunpack.c.h.b16 %v160
    %v878 = vunpack.c.l.b16 %v161
    %v879 = vunpack.c.h.b16 %v161
    %v880 = vunpack.c.l.b16 %v162
    %v881 = vunpack.c.h.b16 %v162
    %v882 = vunpack.c.l.b16 %v163
    %v883 = vunpack.c.l.b16 %v164
    %v884 = vunpack.c.h.b16 %v164
    %v885 = vunpack.c.l.b16 %v165
    %v886 = vunpack.c.h.b16 %v165
    %v887 = vunpack.c.l.b16 %v166
    %v888 = vunpack.c.h.b16 %v166
    %v889 = vunpack.c.l.b16 %v167
    %v890 = vunpack.c.l.b16 %v168
    %v891 = vunpack.c.h.b16 %v168
    %v892 = vunpack.c.l.b16 %v169
    %v893 = vunpack.c.h.b16 %v169
    %v894 = vunpack.c.l.b16 %v170
    %v895 = vunpack.c.h.b16 %v170
    %v896 = vunpack.c.l.b16 %v171
    %v897 = vunpack.c.l.b16 %v172
    %v898 = vunpack.c.h.b16 %v172
    %v899 = vunpack.c.l.b16 %v173
    %v900 = vunpack.c.h.b16 %v173
    %v901 = vunpack.c.l.b16 %v174
    %v902 = vunpack.c.h.b16 %v174
    %v903 = vunpack.c.l.b16 %v175
    %v904 = vunpack.c.l.b16 %v176
    %v905 = vunpack.c.h.b16 %v176
    %v906 = vunpack.c.l.b16 %v177
    %v907 = vunpack.c.h.b16 %v177
    %v908 = vunpack.c.l.b16 %v178
    %v909 = vunpack.c.h.b16 %v178
    %v910 = vunpack.c.l.b16 %v179
    %v911 = vunpack.c.l.b16 %v180
    %v912 = vunpack.c.h.b16 %v180
    %v913 = vunpack.c.l.b16 %v181
    %v914 = vunpack.c.h.b16 %v181
    %v915 = vunpack.c.l.b16 %v182
    %v916 = vunpack.c.h.b16 %v182
    %v917 = vunpack.c.l.b16 %v183
    %v918 = vunpack.c.l.b16 %v184
    %v919 = vunpack.c.h.b16 %v184
    %v920 = vunpack.c.l.b16 %v185
    %v921 = vunpack.c.h.b16 %v185
    %v922 = vunpack.c.l.b16 %v186
    %v923 = vunpack.c.h.b16 %v186
    %v924 = vunpack.c.l.b16 %v187
    %v925 = vunpack.c.l.b16 %v188
    %v926 = vunpack.c.h.b16 %v188
    %v927 = vunpack.c.l.b16 %v189
    %v928 = vunpack.c.h.b16 %v189
    %v929 = vunpack.c.l.b16 %v190
    %v930 = vunpack.c.h.b16 %v190
    %v931 = vunpack.c.l.b16 %v191
    %v932 = vunpack.c.l.b16 %v192
    %v933 = vunpack.c.h.b16 %v192
    %v934 = vunpack.c.l.b16 %v193
    %v935 = vunpack.c.h.b16 %v193
    %v936 = vunpack.c.l.b16 %v194
    %v937 = vunpack.c.h.b16 %v194
    %v938 = vunpack.c.l.b16 %v195
    %v939 = vunpack.c.l.b16 %v196
    %v940 = vunpack.c.h.b16 %v196
    %v941 = vunpack.c.l.b16 %v197
    %v942 = vunpack.c.h.b16 %v197
    %v943 = vunpack.c.l.b16 %v198
    %v944 = vunpack.c.h.b16 %v198
    %v945 = vunpack.c.l.b16 %v199
    %v946 = vunpack.c.l.b16 %v200
    %v947 = vunpack.c.h.b16 %v200
    %v948 = vunpack.c.l.b16 %v201
    %v949 = vunpack.c.h.b16 %v201
    %v950 = vunpack.c.l.b16 %v202
    %v951 = vunpack.c.h.b16 %v202
    %v952 = vunpack.c.l.b16 %v203
    %v953 = vunpack.c.l.b16 %v204
    %v954 = vunpack.c.h.b16 %v204
    %v955 = vunpack.c.l.b16 %v205
    %v956 = vunpack.c.h.b16 %v205
    %v957 = vunpack.c.l.b16 %v206
    %v958 = vunpack.c.h.b16 %v206
    %v959 = vunpack.c.l.b16 %v207
    %v960 = vunpack.c.l.b16 %v208
    %v961 = vunpack.c.h.b16 %v208
    %v962 = vunpack.c.l.b16 %v209
    %v963 = vunpack.c.h.b16 %v209
    %v964 = vunpack.c.l.b16 %v210
    %v965 = vunpack.c.h.b16 %v210
    %v966 = vunpack.c.l.b16 %v211
    %v967 = vunpack.c.l.b16 %v212
    %v968 = vunpack.c.h.b16 %v212
    %v969 = vunpack.c.l.b16 %v213
    %v970 = vunpack.c.h.b16 %v213
    %v971 = vunpack.c.l.b16 %v214
    %v972 = vunpack.c.h.b16 %v214
    %v973 = vunpack.c.l.b16 %v215
    %v974 = vunpack.c.l.b16 %v216
    %v975 = vunpack.c.h.b16 %v216
    %v976 = vunpack.c.l.b16 %v217
    %v977 = vunpack.c.h.b16 %v217
    %v978 = vunpack.c.l.b16 %v218
    %v979 = vunpack.c.h.b16 %v218
    %v980 = vunpack.c.l.b16 %v219
    %v981 = vunpack.c.l.b16 %v220
    %v982 = vunpack.c.h.b16 %v220
    %v983 = vunpack.c.l.b16 %v221
    %v984 = vunpack.c.h.b16 %v221
    %v985 = vunpack.c.l.b16 %v222
    %v986 = vunpack.c.h.b16 %v222
    %v987 = vunpack.c.l.b16 %v223
    %v988 = vunpack.c.l.b16 %v224
    %v989 = vunpack.c.h.b16 %v224
    %v990 = vunpack.c.l.b16 %v225
    %v991 = vunpack.c.h.b16 %v225
    %v992 = vunpack.c.l.b16 %v226
    %v993 = vunpack.c.h.b16 %v226
    %v994 = vunpack.c.l.b16 %v227
    %v995 = vunpack.c.l.b16 %v228
    %v996 = vunpack.c.h.b16 %v228
    %v997 = vunpack.c.l.b16 %v229
    %v998 = vunpack.c.h.b16 %v229
    %v999 = vunpack.c.l.b16 %v230
    %v1000 = vunpack.c.h.b16 %v230
    %v1001 = vunpack.c.l.b16 %v231
    %v1002 = vunpack.c.l.b16 %v232
    %v1003 = vunpack.c.h.b16 %v232
    %v1004 = vunpack.c.l.b16 %v233
    %v1005 = vunpack.c.h.b16 %v233
    %v1006 = vunpack.c.l.b16 %v234
    %v1007 = vunpack.c.h.b16 %v234
    %v1008 = vunpack.c.l.b16 %v235
    %v1009 = vunpack.c.l.b16 %v236
    %v1010 = vunpack.c.h.b16 %v236
    %v1011 = vunpack.c.l.b16 %v237
    %v1012 = vunpack.c.h.b16 %v237
    %v1013 = vunpack.c.l.b16 %v238
    %v1014 = vunpack.c.h.b16 %v238
    %v1015 = vunpack.c.l.b16 %v239
    %v1016 = vunpack.c.l.b16 %v240
    %v1017 = vunpack.c.h.b16 %v240
    %v1018 = vunpack.c.l.b16 %v241
    %v1019 = vunpack.c.h.b16 %v241
    %v1020 = vunpack.c.l.b16 %v242
    %v1021 = vunpack.c.h.b16 %v242
    %v1022 = vunpack.c.l.b16 %v243
    %v1023 = vunpack.c.l.b16 %v244
    %v1024 = vunpack.c.h.b16 %v244
    %v1025 = vunpack.c.l.b16 %v245
    %v1026 = vunpack.c.h.b16 %v245
    %v1027 = vunpack.c.l.b16 %v246
    %v1028 = vunpack.c.h.b16 %v246
    %v1029 = vunpack.c.l.b16 %v247
    %v1030 = vunpack.c.l.b16 %v248
    %v1031 = vunpack.c.h.b16 %v248
    %v1032 = vunpack.c.l.b16 %v249
    %v1033 = vunpack.c.h.b16 %v249
    %v1034 = vunpack.c.l.b16 %v250
    %v1035 = vunpack.c.h.b16 %v250
    %v1036 = vunpack.c.l.b16 %v251
    %v1037 = vunpack.c.l.b16 %v252
    %v1038 = vunpack.c.h.b16 %v252
    %v1039 = vunpack.c.l.b16 %v253
    %v1040 = vunpack.c.h.b16 %v253
    %v1041 = vunpack.c.l.b16 %v254
    %v1042 = vunpack.c.h.b16 %v254
    %v1043 = vunpack.c.l.b16 %v255
    %v1044 = vunpack.c.l.b16 %v256
    %v1045 = vunpack.c.h.b16 %v256
    %v1046 = vunpack.c.l.b16 %v257
    %v1047 = vunpack.c.h.b16 %v257
    %v1048 = vunpack.c.l.b16 %v258
    %v1049 = vunpack.c.h.b16 %v258
    %v1050 = vunpack.c.l.b16 %v259
    %v1051 = vunpack.c.l.b16 %v260
    %v1052 = vunpack.c.h.b16 %v260
    %v1053 = vunpack.c.l.b16 %v261
    %v1054 = vunpack.c.h.b16 %v261
    %v1055 = vunpack.c.l.b16 %v262
    %v1056 = vunpack.c.h.b16 %v262
    %v1057 = vunpack.c.l.b16 %v263
    %v1058 = vunpack.c.l.b16 %v264
    %v1059 = vunpack.c.h.b16 %v264
    %v1060 = vunpack.c.l.b16 %v265
    %v1061 = vunpack.c.h.b16 %v265
    %v1062 = vunpack.c.l.b16 %v266
    %v1063 = vunpack.c.h.b16 %v266
    %v1064 = vunpack.c.l.b16 %v267
    %v1065 = vunpack.c.l.b16 %v268
    %v1066 = vunpack.c.h.b16 %v268
    %v1067 = vunpack.c.l.b16 %v269
    %v1068 = vunpack.c.h.b16 %v269
    %v1069 = vunpack.c.l.b16 %v270
    %v1070 = vunpack.c.h.b16 %v270
    %v1071 = vunpack.c.l.b16 %v271
    %v1072 = vunpack.c.l.b16 %v272
    %v1073 = vunpack.c.h.b16 %v272
    %v1074 = vunpack.c.l.b16 %v273
    %v1075 = vunpack.c.h.b16 %v273
    %v1076 = vunpack.c.l.b16 %v274
    %v1077 = vunpack.c.h.b16 %v274
    %v1078 = vunpack.c.l.b16 %v275
    %v1079 = vunpack.c.l.b16 %v276
    %v1080 = vunpack.c.h.b16 %v276
    %v1081 = vunpack.c.l.b16 %v277
    %v1082 = vunpack.c.h.b16 %v277
    %v1083 = vunpack.c.l.b16 %v278
    %v1084 = vunpack.c.h.b16 %v278
    %v1085 = vunpack.c.l.b16 %v279
    %v1086 = vunpack.c.l.b16 %v280
    %v1087 = vunpack.c.h.b16 %v280
    %v1088 = vunpack.c.l.b16 %v281
    %v1089 = vunpack.c.h.b16 %v281
    %v1090 = vunpack.c.l.b16 %v282
    %v1091 = vunpack.c.h.b16 %v282
    %v1092 = vunpack.c.l.b16 %v283
    %v1093 = vpack.c.b16 %v652, %v645
    %v1094 = vpack.c.b16 %v653, %v646
    %v1095 = vpack.c.b16 %v654, %v647
    %v1096 = vpack.c.b16 %v655, %v648
    %v1097 = vpack.c.b16 %v656, %v649
    %v1098 = vpack.c.b16 %v657, %v650
    %v1099 = vpack.c.b16 %v658, %v651
    %v1100 = vpack.c.b16 %v666, %v659
    %v1101 = vpack.c.b16 %v667, %v660
    %v1102 = vpack.c.b16 %v668, %v661
    %v1103 = vpack.c.b16 %v669, %v662
    %v1104 = vpack.c.b16 %v670, %v663
    %v1105 = vpack.c.b16 %v671, %v664
    %v1106 = vpack.c.b16 %v672, %v665
    %v1107 = vpack.c.b16 %v680, %v673
    %v1108 = vpack.c.b16 %v681, %v674
    %v1109 = vpack.c.b16 %v682, %v675
    %v1110 = vpack.c.b16 %v683, %v676
    %v1111 = vpack.c.b16 %v684, %v677
    %v1112 = vpack.c.b16 %v685, %v678
    %v1113 = vpack.c.b16 %v686, %v679
    %v1114 = vpack.c.b16 %v694, %v687
    %v1115 = vpack.c.b16 %v695, %v688
    %v1116 = vpack.c.b16 %v696, %v689
    %v1117 = vpack.c.b16 %v697, %v690
    %v1118 = vpack.c.b16 %v698, %v691
    %v1119 = vpack.c.b16 %v699, %v692
    %v1120 = vpack.c.b16 %v700, %v693
    %v1121 = vpack.c.b16 %v708, %v701
    %v1122 = vpack.c.b16 %v709, %v702
    %v1123 = vpack.c.b16 %v710, %v703
    %v1124 = vpack.c.b16 %v711, %v704
    %v1125 = vpack.c.b16 %v712, %v705
    %v1126 = vpack.c.b16 %v713, %v706
    %v1127 = vpack.c.b16 %v714, %v707
    %v1128 = vpack.c.b16 %v722, %v715
    %v1129 = vpack.c.b16 %v723, %v716
    %v1130 = vpack.c.b16 %v724, %v717
    %v1131 = vpack.c.b16 %v725, %v718
    %v1132 = vpack.c.b16 %v726, %v719
    %v1133 = vpack.c.b16 %v727, %v720
    %v1134 = vpack.c.b16 %v728, %v721
    %v1135 = vpack.c.b16 %v736, %v729
    %v1136 = vpack.c.b16 %v737, %v730
    %v1137 = vpack.c.b16 %v738, %v731
    %v1138 = vpack.c.b16 %v739, %v732
    %v1139 = vpack.c.b16 %v740, %v733
    %v1140 = vpack.c.b16 %v741, %v734
    %v1141 = vpack.c.b16 %v742, %v735
    %v1142 = vpack.c.b16 %v750, %v743
    %v1143 = vpack.c.b16 %v751, %v744
    %v1144 = vpack.c.b16 %v752, %v745
    %v1145 = vpack.c.b16 %v753, %v746
    %v1146 = vpack.c.b16 %v754, %v747
    %v1147 = vpack.c.b16 %v755, %v748
    %v1148 = vpack.c.b16 %v756, %v749
    %v1149 = vpack.c.b16 %v764, %v757
    %v1150 = vpack.c.b16 %v765, %v758
    %v1151 = vpack.c.b16 %v766, %v759
    %v1152 = vpack.c.b16 %v767, %v760
    %v1153 = vpack.c.b16 %v768, %v761
    %v1154 = vpack.c.b16 %v769, %v762
    %v1155 = vpack.c.b16 %v770, %v763
    %v1156 = vpack.c.b16 %v778, %v771
    %v1157 = vpack.c.b16 %v779, %v772
    %v1158 = vpack.c.b16 %v780, %v773
    %v1159 = vpack.c.b16 %v781, %v774
    %v1160 = vpack.c.b16 %v782, %v775
    %v1161 = vpack.c.b16 %v783, %v776
    %v1162 = vpack.c.b16 %v784, %v777
    %v1163 = vpack.c.b16 %v792, %v785
    %v1164 = vpack.c.b16 %v793, %v786
    %v1165 = vpack.c.b16 %v794, %v787
    %v1166 = vpack.c.b16 %v795, %v788
    %v1167 = vpack.c.b16 %v796, %v789
    %v1168 = vpack.c.b16 %v797, %v790
    %v1169 = vpack.c.b16 %v798, %v791
    %v1170 = vpack.c.b16 %v806, %v799
    %v1171 = vpack.c.b16 %v807, %v800
    %v1172 = vpack.c.b16 %v808, %v801
    %v1173 = vpack.c.b16 %v809, %v802
    %v1174 = vpack.c.b16 %v810, %v803
    %v1175 = vpack.c.b16 %v811, %v804
    %v1176 = vpack.c.b16 %v812, %v805
    %v1177 = vpack.c.b16 %v820, %v813
    %v1178 = vpack.c.b16 %v821, %v814
    %v1179 = vpack.c.b16 %v822, %v815
    %v1180 = vpack.c.b16 %v823, %v816
    %v1181 = vpack.c.b16 %v824, %v817
    %v1182 = vpack.c.b16 %v825, %v818
    %v1183 = vpack.c.b16 %v826, %v819
    %v1184 = vpack.c.b16 %v834, %v827
    %v1185 = vpack.c.b16 %v835, %v828
    %v1186 = vpack.c.b16 %v836, %v829
    %v1187 = vpack.c.b16 %v837, %v830
    %v1188 = vpack.c.b16 %v838, %v831
    %v1189 = vpack.c.b16 %v839, %v832
    %v1190 = vpack.c.b16 %v840, %v833
    %v1191 = vpack.c.b16 %v848, %v841
    %v1192 = vpack.c.b16 %v849, %v842
    %v1193 = vpack.c.b16 %v850, %v843
    %v1194 = vpack.c.b16 %v851, %v844
    %v1195 = vpack.c.b16 %v852, %v845
    %v1196 = vpack.c.b16 %v853, %v846
    %v1197 = vpack.c.b16 %v854, %v847
    %v1198 = vpack.c.b16 %v862, %v855
    %v1199 = vpack.c.b16 %v863, %v856
    %v1200 = vpack.c.b16 %v864, %v857
    %v1201 = vpack.c.b16 %v865, %v858
    %v1202 = vpack.c.b16 %v866, %v859
    %v1203 = vpack.c.b16 %v867, %v860
    %v1204 = vpack.c.b16 %v868, %v861
    %v1205 = vpack.c.b16 %v876, %v869
    %v1206 = vpack.c.b16 %v877, %v870
    %v1207 = vpack.c.b16 %v878, %v871
    %v1208 = vpack.c.b16 %v879, %v872
    %v1209 = vpack.c.b16 %v880, %v873
    %v1210 = vpack.c.b16 %v881, %v874
    %v1211 = vpack.c.b16 %v882, %v875
    %v1212 = vpack.c.b16 %v890, %v883
    %v1213 = vpack.c.b16 %v891, %v884
    %v1214 = vpack.c.b16 %v892, %v885
    %v1215 = vpack.c.b16 %v893, %v886
    %v1216 = vpack.c.b16 %v894, %v887
    %v1217 = vpack.c.b16 %v895, %v888
    %v1218 = vpack.c.b16 %v896, %v889
    %v1219 = vpack.c.b16 %v904, %v897
    %v1220 = vpack.c.b16 %v905, %v898
    %v1221 = vpack.c.b16 %v906, %v899
    %v1222 = vpack.c.b16 %v907, %v900
    %v1223 = vpack.c.b16 %v908, %v901
    %v1224 = vpack.c.b16 %v909, %v902
    %v1225 = vpack.c.b16 %v910, %v903
    %v1226 = vpack.c.b16 %v918, %v911
    %v1227 = vpack.c.b16 %v919, %v912
    %v1228 = vpack.c.b16 %v920, %v913
    %v1229 = vpack.c.b16 %v921, %v914
    %v1230 = vpack.c.b16 %v922, %v915
    %v1231 = vpack.c.b16 %v923, %v916
    %v1232 = vpack.c.b16 %v924, %v917
    %v1233 = vpack.c.b16 %v932, %v925
    %v1234 = vpack.c.b16 %v933, %v926
    %v1235 = vpack.c.b16 %v934, %v927
    %v1236 = vpack.c.b16 %v935, %v928
    %v1237 = vpack.c.b16 %v936, %v929
    %v1238 = vpack.c.b16 %v937, %v930
    %v1239 = vpack.c.b16 %v938, %v931
    %v1240 = vpack.c.b16 %v946, %v939
    %v1241 = vpack.c.b16 %v947, %v940
    %v1242 = vpack.c.b16 %v948, %v941
    %v1243 = vpack.c.b16 %v949, %v942
    %v1244 = vpack.c.b16 %v950, %v943
    %v1245 = vpack.c.b16 %v951, %v944
    %v1246 = vpack.c.b16 %v952, %v945
    %v1247 = vpack.c.b16 %v960, %v953
    %v1248 = vpack.c.b16 %v961, %v954
    %v1249 = vpack.c.b16 %v962, %v955
    %v1250 = vpack.c.b16 %v963, %v956
    %v1251 = vpack.c.b16 %v964, %v957
    %v1252 = vpack.c.b16 %v965, %v958
    %v1253 = vpack.c.b16 %v966, %v959
    %v1254 = vpack.c.b16 %v974, %v967
    %v1255 = vpack.c.b16 %v975, %v968
    %v1256 = vpack.c.b16 %v976, %v969
    %v1257 = vpack.c.b16 %v977, %v970
    %v1258 = vpack.c.b16 %v978, %v971
    %v1259 = vpack.c.b16 %v979, %v972
    %v1260 = vpack.c.b16 %v980, %v973
    %v1261 = vpack.c.b16 %v988, %v981
    %v1262 = vpack.c.b16 %v989, %v982
    %v1263 = vpack.c.b16 %v990, %v983
    %v1264 = vpack.c.b16 %v991, %v984
    %v1265 = vpack.c.b16 %v992, %v985
    %v1266 = vpack.c.b16 %v993, %v986
    %v1267 = vpack.c.b16 %v994, %v987
    %v1268 = vpack.c.b16 %v1002, %v995
    %v1269 = vpack.c.b16 %v1003, %v996
    %v1270 = vpack.c.b16 %v1004, %v997
    %v1271 = vpack.c.b16 %v1005, %v998
    %v1272 = vpack.c.b16 %v1006, %v999
    %v1273 = vpack.c.b16 %v1007, %v1000
    %v1274 = vpack.c.b16 %v1008, %v1001
    %v1275 = vpack.c.b16 %v1016, %v1009
    %v1276 = vpack.c.b16 %v1017, %v1010
    %v1277 = vpack.c.b16 %v1018, %v1011
    %v1278 = vpack.c.b16 %v1019, %v1012
    %v1279 = vpack.c.b16 %v1020, %v1013
    %v1280 = vpack.c.b16 %v1021, %v1014
    %v1281 = vpack.c.b16 %v1022, %v1015
    %v1282 = vpack.c.b16 %v1030, %v1023
    %v1283 = vpack.c.b16 %v1031, %v1024
    %v1284 = vpack.c.b16 %v1032, %v1025
    %v1285 = vpack.c.b16 %v1033, %v1026
    %v1286 = vpack.c.b16 %v1034, %v1027
    %v1287 = vpack.c.b16 %v1035, %v1028
    %v1288 = vpack.c.b16 %v1036, %v1029
    %v1289 = vpack.c.b16 %v1044, %v1037
    %v1290 = vpack.c.b16 %v1045, %v1038
    %v1291 = vpack.c.b16 %v1046, %v1039
    %v1292 = vpack.c.b16 %v1047, %v1040
    %v1293 = vpack.c.b16 %v1048, %v1041
    %v1294 = vpack.c.b16 %v1049, %v1042
    %v1295 = vpack.c.b16 %v1050, %v1043
    %v1296 = vpack.c.b16 %v1058, %v1051
    %v1297 = vpack.c.b16 %v1059, %v1052
    %v1298 = vpack.c.b16 %v1060, %v1053
    %v1299 = vpack.c.b16 %v1061, %v1054
    %v1300 = vpack.c.b16 %v1062, %v1055
    %v1301 = vpack.c.b16 %v1063, %v1056
    %v1302 = vpack.c.b16 %v1064, %v1057
    %v1303 = vpack.c.b16 %v1072, %v1065
    %v1304 = vpack.c.b16 %v1073, %v1066
    %v1305 = vpack.c.b16 %v1074, %v1067
    %v1306 = vpack.c.b16 %v1075, %v1068
    %v1307 = vpack.c.b16 %v1076, %v1069
    %v1308 = vpack.c.b16 %v1077, %v1070
    %v1309 = vpack.c.b16 %v1078, %v1071
    %v1310 = vpack.c.b16 %v1086, %v1079
    %v1311 = vpack.c.b16 %v1087, %v1080
    %v1312 = vpack.c.b16 %v1088, %v1081
    %v1313 = vpack.c.b16 %v1089, %v1082
    %v1314 = vpack.c.b16 %v1090, %v1083
    %v1315 = vpack.c.b16 %v1091, %v1084
    %v1316 = vpack.c.b16 %v1092, %v1085
    %v1607 = vunpack.c.l.b16 %v284
    %v1608 = vunpack.c.l.b16 %v285
    %v1609 = vunpack.c.l.b16 %v286
    %v1610 = vunpack.c.l.b16 %v287
    %v1611 = vunpack.c.l.b16 %v288
    %v1612 = vunpack.c.l.b16 %v289
    %v1613 = vunpack.c.l.b16 %v290
    %v1614 = vunpack.c.l.b16 %v291
    %v1615 = vunpack.c.l.b16 %v292
    %v1616 = vunpack.c.l.b16 %v293
    %v1617 = vunpack.c.l.b16 %v294
    %v1618 = vunpack.c.l.b16 %v295
    %v1619 = vunpack.c.l.b16 %v296
    %v1620 = vunpack.c.l.b16 %v297
    %v1621 = vunpack.c.l.b16 %v298
    %v1622 = vunpack.c.l.b16 %v299
    %v1623 = vunpack.c.l.b16 %v300
    %v1624 = vunpack.c.l.b16 %v301
    %v1625 = vunpack.c.l.b16 %v302
    %v1626 = vunpack.c.l.b16 %v303
    %v1627 = vunpack.c.l.b16 %v304
    %v1628 = vunpack.c.l.b16 %v305
    %v1629 = vunpack.c.l.b16 %v306
    %v1630 = vunpack.c.l.b16 %v307
    %v1631 = vunpack.c.l.b16 %v308
    %v1632 = vunpack.c.l.b16 %v309
    %v1633 = vunpack.c.l.b16 %v310
    %v1634 = vunpack.c.l.b16 %v311
    %v1635 = vunpack.c.l.b16 %v312
    %v1636 = vunpack.c.l.b16 %v313
    %v1637 = vunpack.c.l.b16 %v314
    %v1638 = vunpack.c.l.b16 %v315
    %v1639 = vunpack.c.l.b16 %v316
    %v1640 = vunpack.c.l.b16 %v317
    %v1641 = vunpack.c.l.b16 %v318
    %v1642 = vunpack.c.l.b16 %v319
    %v1643 = vunpack.c.l.b16 %v320
    %v1644 = vunpack.c.l.b16 %v321
    %v1645 = vunpack.c.l.b16 %v322
    %v1646 = vunpack.c.l.b16 %v323
    %v1647 = vunpack.c.l.b16 %v324
    %v1648 = vunpack.c.l.b16 %v325
    %v1649 = vunpack.c.l.b16 %v326
    %v1650 = vunpack.c.l.b16 %v327
    %v1651 = vunpack.c.l.b16 %v328
    %v1652 = vunpack.c.l.b16 %v329
    %v1653 = vunpack.c.l.b16 %v330
    %v1654 = vunpack.c.l.b16 %v331
    %v1655 = vunpack.c.l.b16 %v332
    %v1656 = vunpack.c.l.b16 %v333
    %v1657 = vunpack.c.l.b16 %v334
    %v1658 = vunpack.c.l.b16 %v335
    %v1659 = vunpack.c.l.b16 %v336
    %v1660 = vunpack.c.l.b16 %v337
    %v1661 = vunpack.c.l.b16 %v338
    %v1662 = vunpack.c.l.b16 %v339
    %v1663 = vunpack.c.l.b16 %v340
    %v1664 = vunpack.c.l.b16 %v341
    %v1665 = vunpack.c.l.b16 %v342
    %v1666 = vunpack.c.l.b16 %v343
    %v1667 = vunpack.c.l.b16 %v344
    %v1668 = vunpack.c.l.b16 %v345
    %v1669 = vunpack.c.l.b16 %v346
    %v1670 = vunpack.c.l.b16 %v347
    %v1671 = vunpack.c.l.b16 %v348
    %v1672 = vunpack.c.l.b16 %v349
    %v1673 = vunpack.c.l.b16 %v350
    %v1674 = vunpack.c.l.b16 %v351
    %v1675 = vunpack.c.l.b16 %v352
    %v1676 = vunpack.c.l.b16 %v353
    %v1677 = vunpack.c.l.b16 %v354
    %v1678 = vunpack.c.l.b16 %v355
    %v1679 = vunpack.c.l.b16 %v356
    %v1680 = vunpack.c.l.b16 %v357
    %v1681 = vunpack.c.l.b16 %v358
    %v1682 = vunpack.c.l.b16 %v359
    %v1683 = vunpack.c.l.b16 %v360
    %v1684 = vunpack.c.l.b16 %v361
    %v1685 = vunpack.c.l.b16 %v362
    %v1686 = vunpack.c.l.b16 %v363
    %v1687 = vunpack.c.l.b16 %v364
    %v1688 = vunpack.c.l.b16 %v365
    %v1689 = vunpack.c.l.b16 %v366
    %v1690 = vunpack.c.l.b16 %v367
    %v1691 = vunpack.c.l.b16 %v368
    %v1692 = vunpack.c.l.b16 %v369
    %v1693 = vunpack.c.l.b16 %v370
    %v1694 = vunpack.c.l.b16 %v371
    %v1695 = vunpack.c.l.b16 %v372
    %v1696 = vunpack.c.l.b16 %v373
    %v1697 = vunpack.c.l.b16 %v374
    %v1698 = vunpack.c.l.b16 %v375
    %v1699 = vunpack.c.l.b16 %v376
    %v1700 = vunpack.c.l.b16 %v377
    %v1701 = vunpack.c.l.b16 %v378
    %v1702 = vunpack.c.l.b16 %v379
    %v1703 = vunpack.c.l.b16 %v380
    %v1704 = vunpack.c.l.b16 %v381
    %v1705 = vpack.c.b16 %v1608, %v1607
    %v1706 = vpack.c.b16 %v1610, %v1609
    %v1707 = vpack.c.b16 %v1612, %v1611
    %v1708 = vpack.c.b16 %v1614, %v1613
    %v1709 = vpack.c.b16 %v1616, %v1615
    %v1710 = vpack.c.b16 %v1618, %v1617
    %v1711 = vpack.c.b16 %v1620, %v1619
    %v1712 = vpack.c.b16 %v1622, %v1621
    %v1713 = vpack.c.b16 %v1624, %v1623
    %v1714 = vpack.c.b16 %v1626, %v1625
    %v1715 = vpack.c.b16 %v1628, %v1627
    %v1716 = vpack.c.b16 %v1630, %v1629
    %v1717 = vpack.c.b16 %v1632, %v1631
    %v1718 = vpack.c.b16 %v1634, %v1633
    %v1719 = vpack.c.b16 %v1636, %v1635
    %v1720 = vpack.c.b16 %v1638, %v1637
    %v1721 = vpack.c.b16 %v1640, %v1639
    %v1722 = vpack.c.b16 %v1642, %v1641
    %v1723 = vpack.c.b16 %v1644, %v1643
    %v1724 = vpack.c.b16 %v1646, %v1645
    %v1725 = vpack.c.b16 %v1648, %v1647
    %v1726 = vpack.c.b16 %v1650, %v1649
    %v1727 = vpack.c.b16 %v1652, %v1651
    %v1728 = vpack.c.b16 %v1654, %v1653
    %v1729 = vpack.c.b16 %v1656, %v1655
    %v1730 = vpack.c.b16 %v1658, %v1657
    %v1731 = vpack.c.b16 %v1660, %v1659
    %v1732 = vpack.c.b16 %v1662, %v1661
    %v1733 = vpack.c.b16 %v1664, %v1663
    %v1734 = vpack.c.b16 %v1666, %v1665
    %v1735 = vpack.c.b16 %v1668, %v1667
    %v1736 = vpack.c.b16 %v1670, %v1669
    %v1737 = vpack.c.b16 %v1672, %v1671
    %v1738 = vpack.c.b16 %v1674, %v1673
    %v1739 = vpack.c.b16 %v1676, %v1675
    %v1740 = vpack.c.b16 %v1678, %v1677
    %v1741 = vpack.c.b16 %v1680, %v1679
    %v1742 = vpack.c.b16 %v1682, %v1681
    %v1743 = vpack.c.b16 %v1684, %v1683
    %v1744 = vpack.c.b16 %v1686, %v1685
    %v1745 = vpack.c.b16 %v1688, %v1687
    %v1746 = vpack.c.b16 %v1690, %v1689
    %v1747 = vpack.c.b16 %v1692, %v1691
    %v1748 = vpack.c.b16 %v1694, %v1693
    %v1749 = vpack.c.b16 %v1696, %v1695
    %v1750 = vpack.c.b16 %v1698, %v1697
    %v1751 = vpack.c.b16 %v1700, %v1699
    %v1752 = vpack.c.b16 %v1702, %v1701
    %v1753 = vpack.c.b16 %v1704, %v1703
    %vm1803 = vcmask 130048
    %v1805 = vsel %vm1803, %v1099, 0
    %v1808 = vsel %vm1803, %v1106, 0
    %v1811 = vsel %vm1803, %v1113, 0
    %v1814 = vsel %vm1803, %v1120, 0
    %v1817 = vsel %vm1803, %v1127, 0
    %v1820 = vsel %vm1803, %v1134, 0
    %v1823 = vsel %vm1803, %v1141, 0
    %v1826 = vsel %vm1803, %v1148, 0
    %v1829 = vsel %vm1803, %v1155, 0
    %v1832 = vsel %vm1803, %v1162, 0
    %v1835 = vsel %vm1803, %v1169, 0
    %v1838 = vsel %vm1803, %v1176, 0
    %v1841 = vsel %vm1803, %v1183, 0
    %v1844 = vsel %vm1803, %v1190, 0
    %v1847 = vsel %vm1803, %v1197, 0
    %v1850 = vsel %vm1803, %v1204, 0
    %v1853 = vsel %vm1803, %v1211, 0
    %v1856 = vsel %vm1803, %v1218, 0
    %v1859 = vsel %vm1803, %v1225, 0
    %v1862 = vsel %vm1803, %v1232, 0
    %v1865 = vsel %vm1803, %v1239, 0
    %v1868 = vsel %vm1803, %v1246, 0
    %v1871 = vsel %vm1803, %v1253, 0
    %v1874 = vsel %vm1803, %v1260, 0
    %v1877 = vsel %vm1803, %v1267, 0
    %v1880 = vsel %vm1803, %v1274, 0
    %v1883 = vsel %vm1803, %v1281, 0
    %v1886 = vsel %vm1803, %v1288, 0
    %v1889 = vsel %vm1803, %v1295, 0
    %v1892 = vsel %vm1803, %v1302, 0
    %v1895 = vsel %vm1803, %v1309, 0
    %v1898 = vsel %vm1803, %v1316, 0
    %1900 = vmatprep.subr.bf16.mxu0 0
    %1901 = vmatpush1.bf16.msra.mxu0 %v1705
    %1902 = vmatprep.subr.bf16.mxu0 0
    %1903 = vmatpush1.bf16.msra.mxu0 %v1706
    %1904 = vmatprep.subr.bf16.mxu0 0
    %1905 = vmatpush1.bf16.msra.mxu0 %v1707
    %1906 = vmatprep.subr.bf16.mxu0 0
    %1907 = vmatpush1.bf16.msra.mxu0 %v1708
    %1908 = vmatprep.subr.bf16.mxu0 0
    %1909 = vmatpush1.bf16.msra.mxu0 %v1709
    %1910 = vmatprep.subr.bf16.mxu0 0
    %1911 = vmatpush1.bf16.msra.mxu0 %v1710
    %1912 = vmatprep.subr.bf16.mxu0 0
    %1913 = vmatpush1.bf16.msra.mxu0 %v1711
    %1914 = vmatprep.subr.bf16.mxu0 0
    %1915 = vmatpush1.bf16.msra.mxu0 %v1712
    %1916 = vmatprep.subr.bf16.mxu0 0
    %1917 = vmatpush1.bf16.msra.mxu0 %v1713
    %1918 = vmatprep.subr.bf16.mxu0 0
    %1919 = vmatpush1.bf16.msra.mxu0 %v1714
    %1920 = vmatprep.subr.bf16.mxu0 0
    %1921 = vmatpush1.bf16.msra.mxu0 %v1715
    %1922 = vmatprep.subr.bf16.mxu0 0
    %1923 = vmatpush1.bf16.msra.mxu0 %v1716
    %1924 = vmatprep.subr.bf16.mxu0 0
    %1925 = vmatpush1.bf16.msra.mxu0 %v1717
    %1926 = vmatprep.subr.bf16.mxu0 0
    %1927 = vmatpush1.bf16.msra.mxu0 %v1718
    %1928 = vmatprep.subr.bf16.mxu0 0
    %1929 = vmatpush1.bf16.msra.mxu0 %v1719
    %1930 = vmatprep.subr.bf16.mxu0 0
    %1931 = vmatpush1.bf16.msra.mxu0 %v1720
    %1932 = vmatprep.mubr.bf16.mxu0 %v1094
    %1933 = vmatmul.mubr.bf16.gmra.mrb[0].mxu0 %v1093
    %v1934 = vpop.f32.mrb[0].mxu0
    %v1935 = vadd.f32 %v387, %v1934
    %v1936 = vpop.f32.mrb[0].mxu0
    %v1937 = vpop.f32.mrb[0].mxu0
    %v1938 = vadd.f32 %v387, %v1937
    %v1939 = vpop.f32.mrb[0].mxu0
    %1940 = vmatprep.mubr.bf16.mxu0 %v1101
    %1941 = vmatmul.mubr.bf16.gmra.mrb[0].mxu0 %v1100
    %v1942 = vpop.f32.mrb[0].mxu0
    %v1943 = vadd.f32 %v387, %v1942
    %v1944 = vpop.f32.mrb[0].mxu0
    %v1945 = vpop.f32.mrb[0].mxu0
    %v1946 = vadd.f32 %v387, %v1945
    %v1947 = vpop.f32.mrb[0].mxu0
    %1948 = vmatprep.mubr.bf16.mxu0 %v1108
    %1949 = vmatmul.mubr.bf16.gmra.mrb[0].mxu0 %v1107
    %v1950 = vpop.f32.mrb[0].mxu0
    %v1951 = vadd.f32 %v387, %v1950
    %v1952 = vpop.f32.mrb[0].mxu0
    %v1953 = vpop.f32.mrb[0].mxu0
    %v1954 = vadd.f32 %v387, %v1953
    %v1955 = vpop.f32.mrb[0].mxu0
    %1956 = vmatprep.mubr.bf16.mxu0 %v1115
    %1957 = vmatmul.mubr.bf16.gmra.mrb[0].mxu0 %v1114
    %v1958 = vpop.f32.mrb[0].mxu0
    %v1959 = vadd.f32 %v387, %v1958
    %v1960 = vpop.f32.mrb[0].mxu0
    %v1961 = vpop.f32.mrb[0].mxu0
    %v1962 = vadd.f32 %v387, %v1961
    %v1963 = vpop.f32.mrb[0].mxu0
    %1964 = vmatprep.mubr.bf16.mxu0 %v1122
    %1965 = vmatmul.mubr.bf16.gmra.mrb[0].mxu0 %v1121
    %v1966 = vpop.f32.mrb[0].mxu0
    %v1967 = vadd.f32 %v387, %v1966
    %v1968 = vpop.f32.mrb[0].mxu0
    %v1969 = vpop.f32.mrb[0].mxu0
    %v1970 = vadd.f32 %v387, %v1969
    %v1971 = vpop.f32.mrb[0].mxu0
    %1972 = vmatprep.mubr.bf16.mxu0 %v1129
    %1973 = vmatmul.mubr.bf16.gmra.mrb[0].mxu0 %v1128
    %v1974 = vpop.f32.mrb[0].mxu0
    %v1975 = vadd.f32 %v387, %v1974
    %v1976 = vpop.f32.mrb[0].mxu0
    %v1977 = vpop.f32.mrb[0].mxu0
    %v1978 = vadd.f32 %v387, %v1977
    %v1979 = vpop.f32.mrb[0].mxu0
    %1980 = vmatprep.mubr.bf16.mxu0 %v1136
    %1981 = vmatmul.mubr.bf16.gmra.mrb[0].mxu0 %v1135
    %v1982 = vpop.f32.mrb[0].mxu0
    %v1983 = vadd.f32 %v387, %v1982
    %v1984 = vpop.f32.mrb[0].mxu0
    %v1985 = vpop.f32.mrb[0].mxu0
    %v1986 = vadd.f32 %v387, %v1985
    %v1987 = vpop.f32.mrb[0].mxu0
    %1988 = vmatprep.mubr.bf16.mxu0 %v1143
    %1989 = vmatmul.mubr.bf16.gmra.mrb[0].mxu0 %v1142
    %v1990 = vpop.f32.mrb[0].mxu0
    %v1991 = vadd.f32 %v387, %v1990
    %v1992 = vpop.f32.mrb[0].mxu0
    %v1993 = vpop.f32.mrb[0].mxu0
    %v1994 = vadd.f32 %v387, %v1993
    %v1995 = vpop.f32.mrb[0].mxu0
    %1996 = vmatprep.mubr.bf16.mxu0 %v1150
    %1997 = vmatmul.mubr.bf16.gmra.mrb[0].mxu0 %v1149
    %v1998 = vpop.f32.mrb[0].mxu0
    %v1999 = vadd.f32 %v387, %v1998
    %v2000 = vpop.f32.mrb[0].mxu0
    %v2001 = vpop.f32.mrb[0].mxu0
    %v2002 = vadd.f32 %v387, %v2001
    %v2003 = vpop.f32.mrb[0].mxu0
    %2004 = vmatprep.mubr.bf16.mxu0 %v1157
    %2005 = vmatmul.mubr.bf16.gmra.mrb[0].mxu0 %v1156
    %v2006 = vpop.f32.mrb[0].mxu0
    %v2007 = vadd.f32 %v387, %v2006
    %v2008 = vpop.f32.mrb[0].mxu0
    %v2009 = vpop.f32.mrb[0].mxu0
    %v2010 = vadd.f32 %v387, %v2009
    %v2011 = vpop.f32.mrb[0].mxu0
    %2012 = vmatprep.mubr.bf16.mxu0 %v1164
    %2013 = vmatmul.mubr.bf16.gmra.mrb[0].mxu0 %v1163
    %v2014 = vpop.f32.mrb[0].mxu0
    %v2015 = vadd.f32 %v387, %v2014
    %v2016 = vpop.f32.mrb[0].mxu0
    %v2017 = vpop.f32.mrb[0].mxu0
    %v2018 = vadd.f32 %v387, %v2017
    %v2019 = vpop.f32.mrb[0].mxu0
    %2020 = vmatprep.mubr.bf16.mxu0 %v1171
    %2021 = vmatmul.mubr.bf16.gmra.mrb[0].mxu0 %v1170
    %v2022 = vpop.f32.mrb[0].mxu0
    %v2023 = vadd.f32 %v387, %v2022
    %v2024 = vpop.f32.mrb[0].mxu0
    %v2025 = vpop.f32.mrb[0].mxu0
    %v2026 = vadd.f32 %v387, %v2025
    %v2027 = vpop.f32.mrb[0].mxu0
    %2028 = vmatprep.mubr.bf16.mxu0 %v1178
    %2029 = vmatmul.mubr.bf16.gmra.mrb[0].mxu0 %v1177
    %v2030 = vpop.f32.mrb[0].mxu0
    %v2031 = vadd.f32 %v387, %v2030
    %v2032 = vpop.f32.mrb[0].mxu0
    %v2033 = vpop.f32.mrb[0].mxu0
    %v2034 = vadd.f32 %v387, %v2033
    %v2035 = vpop.f32.mrb[0].mxu0
    %2036 = vmatprep.mubr.bf16.mxu0 %v1185
    %2037 = vmatmul.mubr.bf16.gmra.mrb[0].mxu0 %v1184
    %v2038 = vpop.f32.mrb[0].mxu0
    %v2039 = vadd.f32 %v387, %v2038
    %v2040 = vpop.f32.mrb[0].mxu0
    %v2041 = vpop.f32.mrb[0].mxu0
    %v2042 = vadd.f32 %v387, %v2041
    %v2043 = vpop.f32.mrb[0].mxu0
    %2044 = vmatprep.mubr.bf16.mxu0 %v1192
    %2045 = vmatmul.mubr.bf16.gmra.mrb[0].mxu0 %v1191
    %v2046 = vpop.f32.mrb[0].mxu0
    %v2047 = vadd.f32 %v387, %v2046
    %v2048 = vpop.f32.mrb[0].mxu0
    %v2049 = vpop.f32.mrb[0].mxu0
    %v2050 = vadd.f32 %v387, %v2049
    %v2051 = vpop.f32.mrb[0].mxu0
    %2052 = vmatprep.mubr.bf16.mxu0 %v1199
    %2053 = vmatmul.mubr.bf16.gmra.mrb[0].mxu0 %v1198
    %v2054 = vpop.f32.mrb[0].mxu0
    %v2055 = vadd.f32 %v387, %v2054
    %v2056 = vpop.f32.mrb[0].mxu0
    %v2057 = vpop.f32.mrb[0].mxu0
    %v2058 = vadd.f32 %v387, %v2057
    %v2059 = vpop.f32.mrb[0].mxu0
    %2060 = vmatprep.mubr.bf16.mxu0 %v1206
    %2061 = vmatmul.mubr.bf16.gmra.mrb[0].mxu0 %v1205
    %v2062 = vpop.f32.mrb[0].mxu0
    %v2063 = vadd.f32 %v387, %v2062
    %v2064 = vpop.f32.mrb[0].mxu0
    %v2065 = vpop.f32.mrb[0].mxu0
    %v2066 = vadd.f32 %v387, %v2065
    %v2067 = vpop.f32.mrb[0].mxu0
    %2068 = vmatprep.mubr.bf16.mxu0 %v1213
    %2069 = vmatmul.mubr.bf16.gmra.mrb[0].mxu0 %v1212
    %v2070 = vpop.f32.mrb[0].mxu0
    %v2071 = vadd.f32 %v387, %v2070
    %v2072 = vpop.f32.mrb[0].mxu0
    %v2073 = vpop.f32.mrb[0].mxu0
    %v2074 = vadd.f32 %v387, %v2073
    %v2075 = vpop.f32.mrb[0].mxu0
    %2076 = vmatprep.mubr.bf16.mxu0 %v1220
    %2077 = vmatmul.mubr.bf16.gmra.mrb[0].mxu0 %v1219
    %v2078 = vpop.f32.mrb[0].mxu0
    %v2079 = vadd.f32 %v387, %v2078
    %v2080 = vpop.f32.mrb[0].mxu0
    %v2081 = vpop.f32.mrb[0].mxu0
    %v2082 = vadd.f32 %v387, %v2081
    %v2083 = vpop.f32.mrb[0].mxu0
    %2084 = vmatprep.mubr.bf16.mxu0 %v1227
    %2085 = vmatmul.mubr.bf16.gmra.mrb[0].mxu0 %v1226
    %v2086 = vpop.f32.mrb[0].mxu0
    %v2087 = vadd.f32 %v387, %v2086
    %v2088 = vpop.f32.mrb[0].mxu0
    %v2089 = vpop.f32.mrb[0].mxu0
    %v2090 = vadd.f32 %v387, %v2089
    %v2091 = vpop.f32.mrb[0].mxu0
    %2092 = vmatprep.mubr.bf16.mxu0 %v1234
    %2093 = vmatmul.mubr.bf16.gmra.mrb[0].mxu0 %v1233
    %v2094 = vpop.f32.mrb[0].mxu0
    %v2095 = vadd.f32 %v387, %v2094
    %v2096 = vpop.f32.mrb[0].mxu0
    %v2097 = vpop.f32.mrb[0].mxu0
    %v2098 = vadd.f32 %v387, %v2097
    %v2099 = vpop.f32.mrb[0].mxu0
    %2100 = vmatprep.mubr.bf16.mxu0 %v1241
    %2101 = vmatmul.mubr.bf16.gmra.mrb[0].mxu0 %v1240
    %v2102 = vpop.f32.mrb[0].mxu0
    %v2103 = vadd.f32 %v387, %v2102
    %v2104 = vpop.f32.mrb[0].mxu0
    %v2105 = vpop.f32.mrb[0].mxu0
    %v2106 = vadd.f32 %v387, %v2105
    %v2107 = vpop.f32.mrb[0].mxu0
    %2108 = vmatprep.mubr.bf16.mxu0 %v1248
    %2109 = vmatmul.mubr.bf16.gmra.mrb[0].mxu0 %v1247
    %v2110 = vpop.f32.mrb[0].mxu0
    %v2111 = vadd.f32 %v387, %v2110
    %v2112 = vpop.f32.mrb[0].mxu0
    %v2113 = vpop.f32.mrb[0].mxu0
    %v2114 = vadd.f32 %v387, %v2113
    %v2115 = vpop.f32.mrb[0].mxu0
    %2116 = vmatprep.mubr.bf16.mxu0 %v1255
    %2117 = vmatmul.mubr.bf16.gmra.mrb[0].mxu0 %v1254
    %v2118 = vpop.f32.mrb[0].mxu0
    %v2119 = vadd.f32 %v387, %v2118
    %v2120 = vpop.f32.mrb[0].mxu0
    %v2121 = vpop.f32.mrb[0].mxu0
    %v2122 = vadd.f32 %v387, %v2121
    %v2123 = vpop.f32.mrb[0].mxu0
    %2124 = vmatprep.mubr.bf16.mxu0 %v1262
    %2125 = vmatmul.mubr.bf16.gmra.mrb[0].mxu0 %v1261
    %v2126 = vpop.f32.mrb[0].mxu0
    %v2127 = vadd.f32 %v387, %v2126
    %v2128 = vpop.f32.mrb[0].mxu0
    %v2129 = vpop.f32.mrb[0].mxu0
    %v2130 = vadd.f32 %v387, %v2129
    %v2131 = vpop.f32.mrb[0].mxu0
    %2132 = vmatprep.mubr.bf16.mxu0 %v1269
    %2133 = vmatmul.mubr.bf16.gmra.mrb[0].mxu0 %v1268
    %v2134 = vpop.f32.mrb[0].mxu0
    %v2135 = vadd.f32 %v387, %v2134
    %v2136 = vpop.f32.mrb[0].mxu0
    %v2137 = vpop.f32.mrb[0].mxu0
    %v2138 = vadd.f32 %v387, %v2137
    %v2139 = vpop.f32.mrb[0].mxu0
    %2140 = vmatprep.mubr.bf16.mxu0 %v1276
    %2141 = vmatmul.mubr.bf16.gmra.mrb[0].mxu0 %v1275
    %v2142 = vpop.f32.mrb[0].mxu0
    %v2143 = vadd.f32 %v387, %v2142
    %v2144 = vpop.f32.mrb[0].mxu0
    %v2145 = vpop.f32.mrb[0].mxu0
    %v2146 = vadd.f32 %v387, %v2145
    %v2147 = vpop.f32.mrb[0].mxu0
    %2148 = vmatprep.mubr.bf16.mxu0 %v1283
    %2149 = vmatmul.mubr.bf16.gmra.mrb[0].mxu0 %v1282
    %v2150 = vpop.f32.mrb[0].mxu0
    %v2151 = vadd.f32 %v387, %v2150
    %v2152 = vpop.f32.mrb[0].mxu0
    %v2153 = vpop.f32.mrb[0].mxu0
    %v2154 = vadd.f32 %v387, %v2153
    %v2155 = vpop.f32.mrb[0].mxu0
    %2156 = vmatprep.mubr.bf16.mxu0 %v1290
    %2157 = vmatmul.mubr.bf16.gmra.mrb[0].mxu0 %v1289
    %v2158 = vpop.f32.mrb[0].mxu0
    %v2159 = vadd.f32 %v387, %v2158
    %v2160 = vpop.f32.mrb[0].mxu0
    %v2161 = vpop.f32.mrb[0].mxu0
    %v2162 = vadd.f32 %v387, %v2161
    %v2163 = vpop.f32.mrb[0].mxu0
    %2164 = vmatprep.mubr.bf16.mxu0 %v1297
    %2165 = vmatmul.mubr.bf16.gmra.mrb[0].mxu0 %v1296
    %v2166 = vpop.f32.mrb[0].mxu0
    %v2167 = vadd.f32 %v387, %v2166
    %v2168 = vpop.f32.mrb[0].mxu0
    %v2169 = vpop.f32.mrb[0].mxu0
    %v2170 = vadd.f32 %v387, %v2169
    %v2171 = vpop.f32.mrb[0].mxu0
    %2172 = vmatprep.mubr.bf16.mxu0 %v1304
    %2173 = vmatmul.mubr.bf16.gmra.mrb[0].mxu0 %v1303
    %v2174 = vpop.f32.mrb[0].mxu0
    %v2175 = vadd.f32 %v387, %v2174
    %v2176 = vpop.f32.mrb[0].mxu0
    %v2177 = vpop.f32.mrb[0].mxu0
    %v2178 = vadd.f32 %v387, %v2177
    %v2179 = vpop.f32.mrb[0].mxu0
    %2180 = vmatprep.mubr.bf16.mxu0 %v1311
    %2181 = vmatmul.mubr.bf16.gmra.mrb[0].mxu0 %v1310
    %v2182 = vpop.f32.mrb[0].mxu0
    %v2183 = vadd.f32 %v387, %v2182
    %v2184 = vpop.f32.mrb[0].mxu0
    %v2185 = vpop.f32.mrb[0].mxu0
    %v2186 = vadd.f32 %v387, %v2185
    %v2187 = vpop.f32.mrb[0].mxu0
    %2188 = vdwg.mxu0
    %2189 = vmatprep.subr.bf16.mxu0 0
    %2190 = vmatpush1.bf16.msra.mxu0 %v1721
    %2191 = vmatprep.subr.bf16.mxu0 0
    %2192 = vmatpush1.bf16.msra.mxu0 %v1722
    %2193 = vmatprep.subr.bf16.mxu0 0
    %2194 = vmatpush1.bf16.msra.mxu0 %v1723
    %2195 = vmatprep.subr.bf16.mxu0 0
    %2196 = vmatpush1.bf16.msra.mxu0 %v1724
    %2197 = vmatprep.subr.bf16.mxu0 0
    %2198 = vmatpush1.bf16.msra.mxu0 %v1725
    %2199 = vmatprep.subr.bf16.mxu0 0
    %2200 = vmatpush1.bf16.msra.mxu0 %v1726
    %2201 = vmatprep.subr.bf16.mxu0 0
    %2202 = vmatpush1.bf16.msra.mxu0 %v1727
    %2203 = vmatprep.subr.bf16.mxu0 0
    %2204 = vmatpush1.bf16.msra.mxu0 %v1728
    %2205 = vmatprep.subr.bf16.mxu0 0
    %2206 = vmatpush1.bf16.msra.mxu0 %v1729
    %2207 = vmatprep.subr.bf16.mxu0 0
    %2208 = vmatpush1.bf16.msra.mxu0 %v1730
    %2209 = vmatprep.subr.bf16.mxu0 0
    %2210 = vmatpush1.bf16.msra.mxu0 %v1731
    %2211 = vmatprep.subr.bf16.mxu0 0
    %2212 = vmatpush1.bf16.msra.mxu0 %v1732
    %2213 = vmatprep.subr.bf16.mxu0 0
    %2214 = vmatpush1.bf16.msra.mxu0 %v1733
    %2215 = vmatprep.subr.bf16.mxu0 0
    %2216 = vmatpush1.bf16.msra.mxu0 %v1734
    %2217 = vmatprep.subr.bf16.mxu0 0
    %2218 = vmatpush1.bf16.msra.mxu0 %v1735
    %2219 = vmatprep.subr.bf16.mxu0 0
    %2220 = vmatpush1.bf16.msra.mxu0 %v1736
    %2221 = vmatprep.mubr.bf16.mxu0 %v1096
    %2222 = vmatmul.mubr.bf16.gmra.mrb[0].mxu0 %v1095
    %v2223 = vpop.f32.mrb[0].mxu0
    %v2224 = vadd.f32 %v1935, %v2223
    %v2225 = vpop.f32.mrb[0].mxu0
    %v2226 = vpop.f32.mrb[0].mxu0
    %v2227 = vadd.f32 %v1938, %v2226
    %v2228 = vpop.f32.mrb[0].mxu0
    %2229 = vmatprep.mubr.bf16.mxu0 %v1103
    %2230 = vmatmul.mubr.bf16.gmra.mrb[0].mxu0 %v1102
    %v2231 = vpop.f32.mrb[0].mxu0
    %v2232 = vadd.f32 %v1943, %v2231
    %v2233 = vpop.f32.mrb[0].mxu0
    %v2234 = vpop.f32.mrb[0].mxu0
    %v2235 = vadd.f32 %v1946, %v2234
    %v2236 = vpop.f32.mrb[0].mxu0
    %2237 = vmatprep.mubr.bf16.mxu0 %v1110
    %2238 = vmatmul.mubr.bf16.gmra.mrb[0].mxu0 %v1109
    %v2239 = vpop.f32.mrb[0].mxu0
    %v2240 = vadd.f32 %v1951, %v2239
    %v2241 = vpop.f32.mrb[0].mxu0
    %v2242 = vpop.f32.mrb[0].mxu0
    %v2243 = vadd.f32 %v1954, %v2242
    %v2244 = vpop.f32.mrb[0].mxu0
    %2245 = vmatprep.mubr.bf16.mxu0 %v1117
    %2246 = vmatmul.mubr.bf16.gmra.mrb[0].mxu0 %v1116
    %v2247 = vpop.f32.mrb[0].mxu0
    %v2248 = vadd.f32 %v1959, %v2247
    %v2249 = vpop.f32.mrb[0].mxu0
    %v2250 = vpop.f32.mrb[0].mxu0
    %v2251 = vadd.f32 %v1962, %v2250
    %v2252 = vpop.f32.mrb[0].mxu0
    %2253 = vmatprep.mubr.bf16.mxu0 %v1124
    %2254 = vmatmul.mubr.bf16.gmra.mrb[0].mxu0 %v1123
    %v2255 = vpop.f32.mrb[0].mxu0
    %v2256 = vadd.f32 %v1967, %v2255
    %v2257 = vpop.f32.mrb[0].mxu0
    %v2258 = vpop.f32.mrb[0].mxu0
    %v2259 = vadd.f32 %v1970, %v2258
    %v2260 = vpop.f32.mrb[0].mxu0
    %2261 = vmatprep.mubr.bf16.mxu0 %v1131
    %2262 = vmatmul.mubr.bf16.gmra.mrb[0].mxu0 %v1130
    %v2263 = vpop.f32.mrb[0].mxu0
    %v2264 = vadd.f32 %v1975, %v2263
    %v2265 = vpop.f32.mrb[0].mxu0
    %v2266 = vpop.f32.mrb[0].mxu0
    %v2267 = vadd.f32 %v1978, %v2266
    %v2268 = vpop.f32.mrb[0].mxu0
    %2269 = vmatprep.mubr.bf16.mxu0 %v1138
    %2270 = vmatmul.mubr.bf16.gmra.mrb[0].mxu0 %v1137
    %v2271 = vpop.f32.mrb[0].mxu0
    %v2272 = vadd.f32 %v1983, %v2271
    %v2273 = vpop.f32.mrb[0].mxu0
    %v2274 = vpop.f32.mrb[0].mxu0
    %v2275 = vadd.f32 %v1986, %v2274
    %v2276 = vpop.f32.mrb[0].mxu0
    %2277 = vmatprep.mubr.bf16.mxu0 %v1145
    %2278 = vmatmul.mubr.bf16.gmra.mrb[0].mxu0 %v1144
    %v2279 = vpop.f32.mrb[0].mxu0
    %v2280 = vadd.f32 %v1991, %v2279
    %v2281 = vpop.f32.mrb[0].mxu0
    %v2282 = vpop.f32.mrb[0].mxu0
    %v2283 = vadd.f32 %v1994, %v2282
    %v2284 = vpop.f32.mrb[0].mxu0
    %2285 = vmatprep.mubr.bf16.mxu0 %v1152
    %2286 = vmatmul.mubr.bf16.gmra.mrb[0].mxu0 %v1151
    %v2287 = vpop.f32.mrb[0].mxu0
    %v2288 = vadd.f32 %v1999, %v2287
    %v2289 = vpop.f32.mrb[0].mxu0
    %v2290 = vpop.f32.mrb[0].mxu0
    %v2291 = vadd.f32 %v2002, %v2290
    %v2292 = vpop.f32.mrb[0].mxu0
    %2293 = vmatprep.mubr.bf16.mxu0 %v1159
    %2294 = vmatmul.mubr.bf16.gmra.mrb[0].mxu0 %v1158
    %v2295 = vpop.f32.mrb[0].mxu0
    %v2296 = vadd.f32 %v2007, %v2295
    %v2297 = vpop.f32.mrb[0].mxu0
    %v2298 = vpop.f32.mrb[0].mxu0
    %v2299 = vadd.f32 %v2010, %v2298
    %v2300 = vpop.f32.mrb[0].mxu0
    %2301 = vmatprep.mubr.bf16.mxu0 %v1166
    %2302 = vmatmul.mubr.bf16.gmra.mrb[0].mxu0 %v1165
    %v2303 = vpop.f32.mrb[0].mxu0
    %v2304 = vadd.f32 %v2015, %v2303
    %v2305 = vpop.f32.mrb[0].mxu0
    %v2306 = vpop.f32.mrb[0].mxu0
    %v2307 = vadd.f32 %v2018, %v2306
    %v2308 = vpop.f32.mrb[0].mxu0
    %2309 = vmatprep.mubr.bf16.mxu0 %v1173
    %2310 = vmatmul.mubr.bf16.gmra.mrb[0].mxu0 %v1172
    %v2311 = vpop.f32.mrb[0].mxu0
    %v2312 = vadd.f32 %v2023, %v2311
    %v2313 = vpop.f32.mrb[0].mxu0
    %v2314 = vpop.f32.mrb[0].mxu0
    %v2315 = vadd.f32 %v2026, %v2314
    %v2316 = vpop.f32.mrb[0].mxu0
    %2317 = vmatprep.mubr.bf16.mxu0 %v1180
    %2318 = vmatmul.mubr.bf16.gmra.mrb[0].mxu0 %v1179
    %v2319 = vpop.f32.mrb[0].mxu0
    %v2320 = vadd.f32 %v2031, %v2319
    %v2321 = vpop.f32.mrb[0].mxu0
    %v2322 = vpop.f32.mrb[0].mxu0
    %v2323 = vadd.f32 %v2034, %v2322
    %v2324 = vpop.f32.mrb[0].mxu0
    %2325 = vmatprep.mubr.bf16.mxu0 %v1187
    %2326 = vmatmul.mubr.bf16.gmra.mrb[0].mxu0 %v1186
    %v2327 = vpop.f32.mrb[0].mxu0
    %v2328 = vadd.f32 %v2039, %v2327
    %v2329 = vpop.f32.mrb[0].mxu0
    %v2330 = vpop.f32.mrb[0].mxu0
    %v2331 = vadd.f32 %v2042, %v2330
    %v2332 = vpop.f32.mrb[0].mxu0
    %2333 = vmatprep.mubr.bf16.mxu0 %v1194
    %2334 = vmatmul.mubr.bf16.gmra.mrb[0].mxu0 %v1193
    %v2335 = vpop.f32.mrb[0].mxu0
    %v2336 = vadd.f32 %v2047, %v2335
    %v2337 = vpop.f32.mrb[0].mxu0
    %v2338 = vpop.f32.mrb[0].mxu0
    %v2339 = vadd.f32 %v2050, %v2338
    %v2340 = vpop.f32.mrb[0].mxu0
    %2341 = vmatprep.mubr.bf16.mxu0 %v1201
    %2342 = vmatmul.mubr.bf16.gmra.mrb[0].mxu0 %v1200
    %v2343 = vpop.f32.mrb[0].mxu0
    %v2344 = vadd.f32 %v2055, %v2343
    %v2345 = vpop.f32.mrb[0].mxu0
    %v2346 = vpop.f32.mrb[0].mxu0
    %v2347 = vadd.f32 %v2058, %v2346
    %v2348 = vpop.f32.mrb[0].mxu0
    %2349 = vmatprep.mubr.bf16.mxu0 %v1208
    %2350 = vmatmul.mubr.bf16.gmra.mrb[0].mxu0 %v1207
    %v2351 = vpop.f32.mrb[0].mxu0
    %v2352 = vadd.f32 %v2063, %v2351
    %v2353 = vpop.f32.mrb[0].mxu0
    %v2354 = vpop.f32.mrb[0].mxu0
    %v2355 = vadd.f32 %v2066, %v2354
    %v2356 = vpop.f32.mrb[0].mxu0
    %2357 = vmatprep.mubr.bf16.mxu0 %v1215
    %2358 = vmatmul.mubr.bf16.gmra.mrb[0].mxu0 %v1214
    %v2359 = vpop.f32.mrb[0].mxu0
    %v2360 = vadd.f32 %v2071, %v2359
    %v2361 = vpop.f32.mrb[0].mxu0
    %v2362 = vpop.f32.mrb[0].mxu0
    %v2363 = vadd.f32 %v2074, %v2362
    %v2364 = vpop.f32.mrb[0].mxu0
    %2365 = vmatprep.mubr.bf16.mxu0 %v1222
    %2366 = vmatmul.mubr.bf16.gmra.mrb[0].mxu0 %v1221
    %v2367 = vpop.f32.mrb[0].mxu0
    %v2368 = vadd.f32 %v2079, %v2367
    %v2369 = vpop.f32.mrb[0].mxu0
    %v2370 = vpop.f32.mrb[0].mxu0
    %v2371 = vadd.f32 %v2082, %v2370
    %v2372 = vpop.f32.mrb[0].mxu0
    %2373 = vmatprep.mubr.bf16.mxu0 %v1229
    %2374 = vmatmul.mubr.bf16.gmra.mrb[0].mxu0 %v1228
    %v2375 = vpop.f32.mrb[0].mxu0
    %v2376 = vadd.f32 %v2087, %v2375
    %v2377 = vpop.f32.mrb[0].mxu0
    %v2378 = vpop.f32.mrb[0].mxu0
    %v2379 = vadd.f32 %v2090, %v2378
    %v2380 = vpop.f32.mrb[0].mxu0
    %2381 = vmatprep.mubr.bf16.mxu0 %v1236
    %2382 = vmatmul.mubr.bf16.gmra.mrb[0].mxu0 %v1235
    %v2383 = vpop.f32.mrb[0].mxu0
    %v2384 = vadd.f32 %v2095, %v2383
    %v2385 = vpop.f32.mrb[0].mxu0
    %v2386 = vpop.f32.mrb[0].mxu0
    %v2387 = vadd.f32 %v2098, %v2386
    %v2388 = vpop.f32.mrb[0].mxu0
    %2389 = vmatprep.mubr.bf16.mxu0 %v1243
    %2390 = vmatmul.mubr.bf16.gmra.mrb[0].mxu0 %v1242
    %v2391 = vpop.f32.mrb[0].mxu0
    %v2392 = vadd.f32 %v2103, %v2391
    %v2393 = vpop.f32.mrb[0].mxu0
    %v2394 = vpop.f32.mrb[0].mxu0
    %v2395 = vadd.f32 %v2106, %v2394
    %v2396 = vpop.f32.mrb[0].mxu0
    %2397 = vmatprep.mubr.bf16.mxu0 %v1250
    %2398 = vmatmul.mubr.bf16.gmra.mrb[0].mxu0 %v1249
    %v2399 = vpop.f32.mrb[0].mxu0
    %v2400 = vadd.f32 %v2111, %v2399
    %v2401 = vpop.f32.mrb[0].mxu0
    %v2402 = vpop.f32.mrb[0].mxu0
    %v2403 = vadd.f32 %v2114, %v2402
    %v2404 = vpop.f32.mrb[0].mxu0
    %2405 = vmatprep.mubr.bf16.mxu0 %v1257
    %2406 = vmatmul.mubr.bf16.gmra.mrb[0].mxu0 %v1256
    %v2407 = vpop.f32.mrb[0].mxu0
    %v2408 = vadd.f32 %v2119, %v2407
    %v2409 = vpop.f32.mrb[0].mxu0
    %v2410 = vpop.f32.mrb[0].mxu0
    %v2411 = vadd.f32 %v2122, %v2410
    %v2412 = vpop.f32.mrb[0].mxu0
    %2413 = vmatprep.mubr.bf16.mxu0 %v1264
    %2414 = vmatmul.mubr.bf16.gmra.mrb[0].mxu0 %v1263
    %v2415 = vpop.f32.mrb[0].mxu0
    %v2416 = vadd.f32 %v2127, %v2415
    %v2417 = vpop.f32.mrb[0].mxu0
    %v2418 = vpop.f32.mrb[0].mxu0
    %v2419 = vadd.f32 %v2130, %v2418
    %v2420 = vpop.f32.mrb[0].mxu0
    %2421 = vmatprep.mubr.bf16.mxu0 %v1271
    %2422 = vmatmul.mubr.bf16.gmra.mrb[0].mxu0 %v1270
    %v2423 = vpop.f32.mrb[0].mxu0
    %v2424 = vadd.f32 %v2135, %v2423
    %v2425 = vpop.f32.mrb[0].mxu0
    %v2426 = vpop.f32.mrb[0].mxu0
    %v2427 = vadd.f32 %v2138, %v2426
    %v2428 = vpop.f32.mrb[0].mxu0
    %2429 = vmatprep.mubr.bf16.mxu0 %v1278
    %2430 = vmatmul.mubr.bf16.gmra.mrb[0].mxu0 %v1277
    %v2431 = vpop.f32.mrb[0].mxu0
    %v2432 = vadd.f32 %v2143, %v2431
    %v2433 = vpop.f32.mrb[0].mxu0
    %v2434 = vpop.f32.mrb[0].mxu0
    %v2435 = vadd.f32 %v2146, %v2434
    %v2436 = vpop.f32.mrb[0].mxu0
    %2437 = vmatprep.mubr.bf16.mxu0 %v1285
    %2438 = vmatmul.mubr.bf16.gmra.mrb[0].mxu0 %v1284
    %v2439 = vpop.f32.mrb[0].mxu0
    %v2440 = vadd.f32 %v2151, %v2439
    %v2441 = vpop.f32.mrb[0].mxu0
    %v2442 = vpop.f32.mrb[0].mxu0
    %v2443 = vadd.f32 %v2154, %v2442
    %v2444 = vpop.f32.mrb[0].mxu0
    %2445 = vmatprep.mubr.bf16.mxu0 %v1292
    %2446 = vmatmul.mubr.bf16.gmra.mrb[0].mxu0 %v1291
    %v2447 = vpop.f32.mrb[0].mxu0
    %v2448 = vadd.f32 %v2159, %v2447
    %v2449 = vpop.f32.mrb[0].mxu0
    %v2450 = vpop.f32.mrb[0].mxu0
    %v2451 = vadd.f32 %v2162, %v2450
    %v2452 = vpop.f32.mrb[0].mxu0
    %2453 = vmatprep.mubr.bf16.mxu0 %v1299
    %2454 = vmatmul.mubr.bf16.gmra.mrb[0].mxu0 %v1298
    %v2455 = vpop.f32.mrb[0].mxu0
    %v2456 = vadd.f32 %v2167, %v2455
    %v2457 = vpop.f32.mrb[0].mxu0
    %v2458 = vpop.f32.mrb[0].mxu0
    %v2459 = vadd.f32 %v2170, %v2458
    %v2460 = vpop.f32.mrb[0].mxu0
    %2461 = vmatprep.mubr.bf16.mxu0 %v1306
    %2462 = vmatmul.mubr.bf16.gmra.mrb[0].mxu0 %v1305
    %v2463 = vpop.f32.mrb[0].mxu0
    %v2464 = vadd.f32 %v2175, %v2463
    %v2465 = vpop.f32.mrb[0].mxu0
    %v2466 = vpop.f32.mrb[0].mxu0
    %v2467 = vadd.f32 %v2178, %v2466
    %v2468 = vpop.f32.mrb[0].mxu0
    %2469 = vmatprep.mubr.bf16.mxu0 %v1313
    %2470 = vmatmul.mubr.bf16.gmra.mrb[0].mxu0 %v1312
    %v2471 = vpop.f32.mrb[0].mxu0
    %v2472 = vadd.f32 %v2183, %v2471
    %v2473 = vpop.f32.mrb[0].mxu0
    %v2474 = vpop.f32.mrb[0].mxu0
    %v2475 = vadd.f32 %v2186, %v2474
    %v2476 = vpop.f32.mrb[0].mxu0
    %2477 = vdwg.mxu0
    %2478 = vmatprep.subr.bf16.mxu0 0
    %2479 = vmatpush1.bf16.msra.mxu0 %v1737
    %2480 = vmatprep.subr.bf16.mxu0 0
    %2481 = vmatpush1.bf16.msra.mxu0 %v1738
    %2482 = vmatprep.subr.bf16.mxu0 0
    %2483 = vmatpush1.bf16.msra.mxu0 %v1739
    %2484 = vmatprep.subr.bf16.mxu0 0
    %2485 = vmatpush1.bf16.msra.mxu0 %v1740
    %2486 = vmatprep.subr.bf16.mxu0 0
    %2487 = vmatpush1.bf16.msra.mxu0 %v1741
    %2488 = vmatprep.subr.bf16.mxu0 0
    %2489 = vmatpush1.bf16.msra.mxu0 %v1742
    %2490 = vmatprep.subr.bf16.mxu0 0
    %2491 = vmatpush1.bf16.msra.mxu0 %v1743
    %2492 = vmatprep.subr.bf16.mxu0 0
    %2493 = vmatpush1.bf16.msra.mxu0 %v1744
    %2494 = vmatprep.subr.bf16.mxu0 0
    %2495 = vmatpush1.bf16.msra.mxu0 %v1745
    %2496 = vmatprep.subr.bf16.mxu0 0
    %2497 = vmatpush1.bf16.msra.mxu0 %v1746
    %2498 = vmatprep.subr.bf16.mxu0 0
    %2499 = vmatpush1.bf16.msra.mxu0 %v1747
    %2500 = vmatprep.subr.bf16.mxu0 0
    %2501 = vmatpush1.bf16.msra.mxu0 %v1748
    %2502 = vmatprep.subr.bf16.mxu0 0
    %2503 = vmatpush1.bf16.msra.mxu0 %v1749
    %2504 = vmatprep.subr.bf16.mxu0 0
    %2505 = vmatpush1.bf16.msra.mxu0 %v1750
    %2506 = vmatprep.subr.bf16.mxu0 0
    %2507 = vmatpush1.bf16.msra.mxu0 %v1751
    %2508 = vmatprep.subr.bf16.mxu0 0
    %2509 = vmatpush1.bf16.msra.mxu0 %v1752
    %2510 = vmatprep.mubr.bf16.mxu0 %v1098
    %2511 = vmatmul.mubr.bf16.gmra.mrb[0].mxu0 %v1097
    %v2512 = vpop.f32.mrb[0].mxu0
    %v2513 = vadd.f32 %v2224, %v2512
    %v2514 = vpop.f32.mrb[0].mxu0
    %v2515 = vpop.f32.mrb[0].mxu0
    %v2516 = vadd.f32 %v2227, %v2515
    %v2517 = vpop.f32.mrb[0].mxu0
    %2518 = vmatprep.mubr.bf16.mxu0 %v1105
    %2519 = vmatmul.mubr.bf16.gmra.mrb[0].mxu0 %v1104
    %v2520 = vpop.f32.mrb[0].mxu0
    %v2521 = vadd.f32 %v2232, %v2520
    %v2522 = vpop.f32.mrb[0].mxu0
    %v2523 = vpop.f32.mrb[0].mxu0
    %v2524 = vadd.f32 %v2235, %v2523
    %v2525 = vpop.f32.mrb[0].mxu0
    %2526 = vmatprep.mubr.bf16.mxu0 %v1112
    %2527 = vmatmul.mubr.bf16.gmra.mrb[0].mxu0 %v1111
    %v2528 = vpop.f32.mrb[0].mxu0
    %v2529 = vadd.f32 %v2240, %v2528
    %v2530 = vpop.f32.mrb[0].mxu0
    %v2531 = vpop.f32.mrb[0].mxu0
    %v2532 = vadd.f32 %v2243, %v2531
    %v2533 = vpop.f32.mrb[0].mxu0
    %2534 = vmatprep.mubr.bf16.mxu0 %v1119
    %2535 = vmatmul.mubr.bf16.gmra.mrb[0].mxu0 %v1118
    %v2536 = vpop.f32.mrb[0].mxu0
    %v2537 = vadd.f32 %v2248, %v2536
    %v2538 = vpop.f32.mrb[0].mxu0
    %v2539 = vpop.f32.mrb[0].mxu0
    %v2540 = vadd.f32 %v2251, %v2539
    %v2541 = vpop.f32.mrb[0].mxu0
    %2542 = vmatprep.mubr.bf16.mxu0 %v1126
    %2543 = vmatmul.mubr.bf16.gmra.mrb[0].mxu0 %v1125
    %v2544 = vpop.f32.mrb[0].mxu0
    %v2545 = vadd.f32 %v2256, %v2544
    %v2546 = vpop.f32.mrb[0].mxu0
    %v2547 = vpop.f32.mrb[0].mxu0
    %v2548 = vadd.f32 %v2259, %v2547
    %v2549 = vpop.f32.mrb[0].mxu0
    %2550 = vmatprep.mubr.bf16.mxu0 %v1133
    %2551 = vmatmul.mubr.bf16.gmra.mrb[0].mxu0 %v1132
    %v2552 = vpop.f32.mrb[0].mxu0
    %v2553 = vadd.f32 %v2264, %v2552
    %v2554 = vpop.f32.mrb[0].mxu0
    %v2555 = vpop.f32.mrb[0].mxu0
    %v2556 = vadd.f32 %v2267, %v2555
    %v2557 = vpop.f32.mrb[0].mxu0
    %2558 = vmatprep.mubr.bf16.mxu0 %v1140
    %2559 = vmatmul.mubr.bf16.gmra.mrb[0].mxu0 %v1139
    %v2560 = vpop.f32.mrb[0].mxu0
    %v2561 = vadd.f32 %v2272, %v2560
    %v2562 = vpop.f32.mrb[0].mxu0
    %v2563 = vpop.f32.mrb[0].mxu0
    %v2564 = vadd.f32 %v2275, %v2563
    %v2565 = vpop.f32.mrb[0].mxu0
    %2566 = vmatprep.mubr.bf16.mxu0 %v1147
    %2567 = vmatmul.mubr.bf16.gmra.mrb[0].mxu0 %v1146
    %v2568 = vpop.f32.mrb[0].mxu0
    %v2569 = vadd.f32 %v2280, %v2568
    %v2570 = vpop.f32.mrb[0].mxu0
    %v2571 = vpop.f32.mrb[0].mxu0
    %v2572 = vadd.f32 %v2283, %v2571
    %v2573 = vpop.f32.mrb[0].mxu0
    %2574 = vmatprep.mubr.bf16.mxu0 %v1154
    %2575 = vmatmul.mubr.bf16.gmra.mrb[0].mxu0 %v1153
    %v2576 = vpop.f32.mrb[0].mxu0
    %v2577 = vadd.f32 %v2288, %v2576
    %v2578 = vpop.f32.mrb[0].mxu0
    %v2579 = vpop.f32.mrb[0].mxu0
    %v2580 = vadd.f32 %v2291, %v2579
    %v2581 = vpop.f32.mrb[0].mxu0
    %2582 = vmatprep.mubr.bf16.mxu0 %v1161
    %2583 = vmatmul.mubr.bf16.gmra.mrb[0].mxu0 %v1160
    %v2584 = vpop.f32.mrb[0].mxu0
    %v2585 = vadd.f32 %v2296, %v2584
    %v2586 = vpop.f32.mrb[0].mxu0
    %v2587 = vpop.f32.mrb[0].mxu0
    %v2588 = vadd.f32 %v2299, %v2587
    %v2589 = vpop.f32.mrb[0].mxu0
    %2590 = vmatprep.mubr.bf16.mxu0 %v1168
    %2591 = vmatmul.mubr.bf16.gmra.mrb[0].mxu0 %v1167
    %v2592 = vpop.f32.mrb[0].mxu0
    %v2593 = vadd.f32 %v2304, %v2592
    %v2594 = vpop.f32.mrb[0].mxu0
    %v2595 = vpop.f32.mrb[0].mxu0
    %v2596 = vadd.f32 %v2307, %v2595
    %v2597 = vpop.f32.mrb[0].mxu0
    %2598 = vmatprep.mubr.bf16.mxu0 %v1175
    %2599 = vmatmul.mubr.bf16.gmra.mrb[0].mxu0 %v1174
    %v2600 = vpop.f32.mrb[0].mxu0
    %v2601 = vadd.f32 %v2312, %v2600
    %v2602 = vpop.f32.mrb[0].mxu0
    %v2603 = vpop.f32.mrb[0].mxu0
    %v2604 = vadd.f32 %v2315, %v2603
    %v2605 = vpop.f32.mrb[0].mxu0
    %2606 = vmatprep.mubr.bf16.mxu0 %v1182
    %2607 = vmatmul.mubr.bf16.gmra.mrb[0].mxu0 %v1181
    %v2608 = vpop.f32.mrb[0].mxu0
    %v2609 = vadd.f32 %v2320, %v2608
    %v2610 = vpop.f32.mrb[0].mxu0
    %v2611 = vpop.f32.mrb[0].mxu0
    %v2612 = vadd.f32 %v2323, %v2611
    %v2613 = vpop.f32.mrb[0].mxu0
    %2614 = vmatprep.mubr.bf16.mxu0 %v1189
    %2615 = vmatmul.mubr.bf16.gmra.mrb[0].mxu0 %v1188
    %v2616 = vpop.f32.mrb[0].mxu0
    %v2617 = vadd.f32 %v2328, %v2616
    %v2618 = vpop.f32.mrb[0].mxu0
    %v2619 = vpop.f32.mrb[0].mxu0
    %v2620 = vadd.f32 %v2331, %v2619
    %v2621 = vpop.f32.mrb[0].mxu0
    %2622 = vmatprep.mubr.bf16.mxu0 %v1196
    %2623 = vmatmul.mubr.bf16.gmra.mrb[0].mxu0 %v1195
    %v2624 = vpop.f32.mrb[0].mxu0
    %v2625 = vadd.f32 %v2336, %v2624
    %v2626 = vpop.f32.mrb[0].mxu0
    %v2627 = vpop.f32.mrb[0].mxu0
    %v2628 = vadd.f32 %v2339, %v2627
    %v2629 = vpop.f32.mrb[0].mxu0
    %2630 = vmatprep.mubr.bf16.mxu0 %v1203
    %2631 = vmatmul.mubr.bf16.gmra.mrb[0].mxu0 %v1202
    %v2632 = vpop.f32.mrb[0].mxu0
    %v2633 = vadd.f32 %v2344, %v2632
    %v2634 = vpop.f32.mrb[0].mxu0
    %v2635 = vpop.f32.mrb[0].mxu0
    %v2636 = vadd.f32 %v2347, %v2635
    %v2637 = vpop.f32.mrb[0].mxu0
    %2638 = vmatprep.mubr.bf16.mxu0 %v1210
    %2639 = vmatmul.mubr.bf16.gmra.mrb[0].mxu0 %v1209
    %v2640 = vpop.f32.mrb[0].mxu0
    %v2641 = vadd.f32 %v2352, %v2640
    %v2642 = vpop.f32.mrb[0].mxu0
    %v2643 = vpop.f32.mrb[0].mxu0
    %v2644 = vadd.f32 %v2355, %v2643
    %v2645 = vpop.f32.mrb[0].mxu0
    %2646 = vmatprep.mubr.bf16.mxu0 %v1217
    %2647 = vmatmul.mubr.bf16.gmra.mrb[0].mxu0 %v1216
    %v2648 = vpop.f32.mrb[0].mxu0
    %v2649 = vadd.f32 %v2360, %v2648
    %v2650 = vpop.f32.mrb[0].mxu0
    %v2651 = vpop.f32.mrb[0].mxu0
    %v2652 = vadd.f32 %v2363, %v2651
    %v2653 = vpop.f32.mrb[0].mxu0
    %2654 = vmatprep.mubr.bf16.mxu0 %v1224
    %2655 = vmatmul.mubr.bf16.gmra.mrb[0].mxu0 %v1223
    %v2656 = vpop.f32.mrb[0].mxu0
    %v2657 = vadd.f32 %v2368, %v2656
    %v2658 = vpop.f32.mrb[0].mxu0
    %v2659 = vpop.f32.mrb[0].mxu0
    %v2660 = vadd.f32 %v2371, %v2659
    %v2661 = vpop.f32.mrb[0].mxu0
    %2662 = vmatprep.mubr.bf16.mxu0 %v1231
    %2663 = vmatmul.mubr.bf16.gmra.mrb[0].mxu0 %v1230
    %v2664 = vpop.f32.mrb[0].mxu0
    %v2665 = vadd.f32 %v2376, %v2664
    %v2666 = vpop.f32.mrb[0].mxu0
    %v2667 = vpop.f32.mrb[0].mxu0
    %v2668 = vadd.f32 %v2379, %v2667
    %v2669 = vpop.f32.mrb[0].mxu0
    %2670 = vmatprep.mubr.bf16.mxu0 %v1238
    %2671 = vmatmul.mubr.bf16.gmra.mrb[0].mxu0 %v1237
    %v2672 = vpop.f32.mrb[0].mxu0
    %v2673 = vadd.f32 %v2384, %v2672
    %v2674 = vpop.f32.mrb[0].mxu0
    %v2675 = vpop.f32.mrb[0].mxu0
    %v2676 = vadd.f32 %v2387, %v2675
    %v2677 = vpop.f32.mrb[0].mxu0
    %2678 = vmatprep.mubr.bf16.mxu0 %v1245
    %2679 = vmatmul.mubr.bf16.gmra.mrb[0].mxu0 %v1244
    %v2680 = vpop.f32.mrb[0].mxu0
    %v2681 = vadd.f32 %v2392, %v2680
    %v2682 = vpop.f32.mrb[0].mxu0
    %v2683 = vpop.f32.mrb[0].mxu0
    %v2684 = vadd.f32 %v2395, %v2683
    %v2685 = vpop.f32.mrb[0].mxu0
    %2686 = vmatprep.mubr.bf16.mxu0 %v1252
    %2687 = vmatmul.mubr.bf16.gmra.mrb[0].mxu0 %v1251
    %v2688 = vpop.f32.mrb[0].mxu0
    %v2689 = vadd.f32 %v2400, %v2688
    %v2690 = vpop.f32.mrb[0].mxu0
    %v2691 = vpop.f32.mrb[0].mxu0
    %v2692 = vadd.f32 %v2403, %v2691
    %v2693 = vpop.f32.mrb[0].mxu0
    %2694 = vmatprep.mubr.bf16.mxu0 %v1259
    %2695 = vmatmul.mubr.bf16.gmra.mrb[0].mxu0 %v1258
    %v2696 = vpop.f32.mrb[0].mxu0
    %v2697 = vadd.f32 %v2408, %v2696
    %v2698 = vpop.f32.mrb[0].mxu0
    %v2699 = vpop.f32.mrb[0].mxu0
    %v2700 = vadd.f32 %v2411, %v2699
    %v2701 = vpop.f32.mrb[0].mxu0
    %2702 = vmatprep.mubr.bf16.mxu0 %v1266
    %2703 = vmatmul.mubr.bf16.gmra.mrb[0].mxu0 %v1265
    %v2704 = vpop.f32.mrb[0].mxu0
    %v2705 = vadd.f32 %v2416, %v2704
    %v2706 = vpop.f32.mrb[0].mxu0
    %v2707 = vpop.f32.mrb[0].mxu0
    %v2708 = vadd.f32 %v2419, %v2707
    %v2709 = vpop.f32.mrb[0].mxu0
    %2710 = vmatprep.mubr.bf16.mxu0 %v1273
    %2711 = vmatmul.mubr.bf16.gmra.mrb[0].mxu0 %v1272
    %v2712 = vpop.f32.mrb[0].mxu0
    %v2713 = vadd.f32 %v2424, %v2712
    %v2714 = vpop.f32.mrb[0].mxu0
    %v2715 = vpop.f32.mrb[0].mxu0
    %v2716 = vadd.f32 %v2427, %v2715
    %v2717 = vpop.f32.mrb[0].mxu0
    %2718 = vmatprep.mubr.bf16.mxu0 %v1280
    %2719 = vmatmul.mubr.bf16.gmra.mrb[0].mxu0 %v1279
    %v2720 = vpop.f32.mrb[0].mxu0
    %v2721 = vadd.f32 %v2432, %v2720
    %v2722 = vpop.f32.mrb[0].mxu0
    %v2723 = vpop.f32.mrb[0].mxu0
    %v2724 = vadd.f32 %v2435, %v2723
    %v2725 = vpop.f32.mrb[0].mxu0
    %2726 = vmatprep.mubr.bf16.mxu0 %v1287
    %2727 = vmatmul.mubr.bf16.gmra.mrb[0].mxu0 %v1286
    %v2728 = vpop.f32.mrb[0].mxu0
    %v2729 = vadd.f32 %v2440, %v2728
    %v2730 = vpop.f32.mrb[0].mxu0
    %v2731 = vpop.f32.mrb[0].mxu0
    %v2732 = vadd.f32 %v2443, %v2731
    %v2733 = vpop.f32.mrb[0].mxu0
    %2734 = vmatprep.mubr.bf16.mxu0 %v1294
    %2735 = vmatmul.mubr.bf16.gmra.mrb[0].mxu0 %v1293
    %v2736 = vpop.f32.mrb[0].mxu0
    %v2737 = vadd.f32 %v2448, %v2736
    %v2738 = vpop.f32.mrb[0].mxu0
    %v2739 = vpop.f32.mrb[0].mxu0
    %v2740 = vadd.f32 %v2451, %v2739
    %v2741 = vpop.f32.mrb[0].mxu0
    %2742 = vmatprep.mubr.bf16.mxu0 %v1301
    %2743 = vmatmul.mubr.bf16.gmra.mrb[0].mxu0 %v1300
    %v2744 = vpop.f32.mrb[0].mxu0
    %v2745 = vadd.f32 %v2456, %v2744
    %v2746 = vpop.f32.mrb[0].mxu0
    %v2747 = vpop.f32.mrb[0].mxu0
    %v2748 = vadd.f32 %v2459, %v2747
    %v2749 = vpop.f32.mrb[0].mxu0
    %2750 = vmatprep.mubr.bf16.mxu0 %v1308
    %2751 = vmatmul.mubr.bf16.gmra.mrb[0].mxu0 %v1307
    %v2752 = vpop.f32.mrb[0].mxu0
    %v2753 = vadd.f32 %v2464, %v2752
    %v2754 = vpop.f32.mrb[0].mxu0
    %v2755 = vpop.f32.mrb[0].mxu0
    %v2756 = vadd.f32 %v2467, %v2755
    %v2757 = vpop.f32.mrb[0].mxu0
    %2758 = vmatprep.mubr.bf16.mxu0 %v1315
    %2759 = vmatmul.mubr.bf16.gmra.mrb[0].mxu0 %v1314
    %v2760 = vpop.f32.mrb[0].mxu0
    %v2761 = vadd.f32 %v2472, %v2760
    %v2762 = vpop.f32.mrb[0].mxu0
    %v2763 = vpop.f32.mrb[0].mxu0
    %v2764 = vadd.f32 %v2475, %v2763
    %v2765 = vpop.f32.mrb[0].mxu0
    %2766 = vdwg.mxu0
    %2767 = vmatprep.subr.bf16.mxu0 0
    %2768 = vmatpush1.bf16.msra.mxu0 %v1753
    %2769 = vmatprep.subr.bf16.mxu0 0
    %2770 = vmatpush1.bf16.msra.mxu0 0
    %2771 = vmatprep.subr.bf16.mxu0 0
    %2772 = vmatpush1.bf16.msra.mxu0 0
    %2773 = vmatprep.subr.bf16.mxu0 0
    %2774 = vmatpush1.bf16.msra.mxu0 0
    %2775 = vmatprep.subr.bf16.mxu0 0
    %2776 = vmatpush1.bf16.msra.mxu0 0
    %2777 = vmatprep.subr.bf16.mxu0 0
    %2778 = vmatpush1.bf16.msra.mxu0 0
    %2779 = vmatprep.subr.bf16.mxu0 0
    %2780 = vmatpush1.bf16.msra.mxu0 0
    %2781 = vmatprep.subr.bf16.mxu0 0
    %2782 = vmatpush1.bf16.msra.mxu0 0
    %2783 = vmatprep.subr.bf16.mxu0 0
    %2784 = vmatpush1.bf16.msra.mxu0 0
    %2785 = vmatprep.subr.bf16.mxu0 0
    %2786 = vmatpush1.bf16.msra.mxu0 0
    %2787 = vmatprep.subr.bf16.mxu0 0
    %2788 = vmatpush1.bf16.msra.mxu0 0
    %2789 = vmatprep.subr.bf16.mxu0 0
    %2790 = vmatpush1.bf16.msra.mxu0 0
    %2791 = vmatprep.subr.bf16.mxu0 0
    %2792 = vmatpush1.bf16.msra.mxu0 0
    %2793 = vmatprep.subr.bf16.mxu0 0
    %2794 = vmatpush1.bf16.msra.mxu0 0
    %2795 = vmatprep.subr.bf16.mxu0 0
    %2796 = vmatpush1.bf16.msra.mxu0 0
    %2797 = vmatprep.subr.bf16.mxu0 0
    %2798 = vmatpush1.bf16.msra.mxu0 0
    %2799 = vmatprep.mubr.bf16.mxu0 0
    %2800 = vmatmul.mubr.bf16.gmra.mrb[0].mxu0 %v1805
    %v2801 = vpop.f32.mrb[0].mxu0
    %v2802 = vadd.f32 %v2513, %v2801
    %v2803 = vpop.f32.mrb[0].mxu0
    %v2804 = vpop.f32.mrb[0].mxu0
    %v2805 = vadd.f32 %v2516, %v2804
    %v2806 = vpop.f32.mrb[0].mxu0
    %2807 = vmatprep.mubr.bf16.mxu0 0
    %2808 = vmatmul.mubr.bf16.gmra.mrb[0].mxu0 %v1808
    %v2809 = vpop.f32.mrb[0].mxu0
    %v2810 = vadd.f32 %v2521, %v2809
    %v2811 = vpop.f32.mrb[0].mxu0
    %v2812 = vpop.f32.mrb[0].mxu0
    %v2813 = vadd.f32 %v2524, %v2812
    %v2814 = vpop.f32.mrb[0].mxu0
    %2815 = vmatprep.mubr.bf16.mxu0 0
    %2816 = vmatmul.mubr.bf16.gmra.mrb[0].mxu0 %v1811
    %v2817 = vpop.f32.mrb[0].mxu0
    %v2818 = vadd.f32 %v2529, %v2817
    %v2819 = vpop.f32.mrb[0].mxu0
    %v2820 = vpop.f32.mrb[0].mxu0
    %v2821 = vadd.f32 %v2532, %v2820
    %v2822 = vpop.f32.mrb[0].mxu0
    %2823 = vmatprep.mubr.bf16.mxu0 0
    %2824 = vmatmul.mubr.bf16.gmra.mrb[0].mxu0 %v1814
    %v2825 = vpop.f32.mrb[0].mxu0
    %v2826 = vadd.f32 %v2537, %v2825
    %v2827 = vpop.f32.mrb[0].mxu0
    %v2828 = vpop.f32.mrb[0].mxu0
    %v2829 = vadd.f32 %v2540, %v2828
    %v2830 = vpop.f32.mrb[0].mxu0
    %2831 = vmatprep.mubr.bf16.mxu0 0
    %2832 = vmatmul.mubr.bf16.gmra.mrb[0].mxu0 %v1817
    %v2833 = vpop.f32.mrb[0].mxu0
    %v2834 = vadd.f32 %v2545, %v2833
    %v2835 = vpop.f32.mrb[0].mxu0
    %v2836 = vpop.f32.mrb[0].mxu0
    %v2837 = vadd.f32 %v2548, %v2836
    %v2838 = vpop.f32.mrb[0].mxu0
    %2839 = vmatprep.mubr.bf16.mxu0 0
    %2840 = vmatmul.mubr.bf16.gmra.mrb[0].mxu0 %v1820
    %v2841 = vpop.f32.mrb[0].mxu0
    %v2842 = vadd.f32 %v2553, %v2841
    %v2843 = vpop.f32.mrb[0].mxu0
    %v2844 = vpop.f32.mrb[0].mxu0
    %v2845 = vadd.f32 %v2556, %v2844
    %v2846 = vpop.f32.mrb[0].mxu0
    %2847 = vmatprep.mubr.bf16.mxu0 0
    %2848 = vmatmul.mubr.bf16.gmra.mrb[0].mxu0 %v1823
    %v2849 = vpop.f32.mrb[0].mxu0
    %v2850 = vadd.f32 %v2561, %v2849
    %v2851 = vpop.f32.mrb[0].mxu0
    %v2852 = vpop.f32.mrb[0].mxu0
    %v2853 = vadd.f32 %v2564, %v2852
    %v2854 = vpop.f32.mrb[0].mxu0
    %2855 = vmatprep.mubr.bf16.mxu0 0
    %2856 = vmatmul.mubr.bf16.gmra.mrb[0].mxu0 %v1826
    %v2857 = vpop.f32.mrb[0].mxu0
    %v2858 = vadd.f32 %v2569, %v2857
    %v2859 = vpop.f32.mrb[0].mxu0
    %v2860 = vpop.f32.mrb[0].mxu0
    %v2861 = vadd.f32 %v2572, %v2860
    %v2862 = vpop.f32.mrb[0].mxu0
    %2863 = vmatprep.mubr.bf16.mxu0 0
    %2864 = vmatmul.mubr.bf16.gmra.mrb[0].mxu0 %v1829
    %v2865 = vpop.f32.mrb[0].mxu0
    %v2866 = vadd.f32 %v2577, %v2865
    %v2867 = vpop.f32.mrb[0].mxu0
    %v2868 = vpop.f32.mrb[0].mxu0
    %v2869 = vadd.f32 %v2580, %v2868
    %v2870 = vpop.f32.mrb[0].mxu0
    %2871 = vmatprep.mubr.bf16.mxu0 0
    %2872 = vmatmul.mubr.bf16.gmra.mrb[0].mxu0 %v1832
    %v2873 = vpop.f32.mrb[0].mxu0
    %v2874 = vadd.f32 %v2585, %v2873
    %v2875 = vpop.f32.mrb[0].mxu0
    %v2876 = vpop.f32.mrb[0].mxu0
    %v2877 = vadd.f32 %v2588, %v2876
    %v2878 = vpop.f32.mrb[0].mxu0
    %2879 = vmatprep.mubr.bf16.mxu0 0
    %2880 = vmatmul.mubr.bf16.gmra.mrb[0].mxu0 %v1835
    %v2881 = vpop.f32.mrb[0].mxu0
    %v2882 = vadd.f32 %v2593, %v2881
    %v2883 = vpop.f32.mrb[0].mxu0
    %v2884 = vpop.f32.mrb[0].mxu0
    %v2885 = vadd.f32 %v2596, %v2884
    %v2886 = vpop.f32.mrb[0].mxu0
    %2887 = vmatprep.mubr.bf16.mxu0 0
    %2888 = vmatmul.mubr.bf16.gmra.mrb[0].mxu0 %v1838
    %v2889 = vpop.f32.mrb[0].mxu0
    %v2890 = vadd.f32 %v2601, %v2889
    %v2891 = vpop.f32.mrb[0].mxu0
    %v2892 = vpop.f32.mrb[0].mxu0
    %v2893 = vadd.f32 %v2604, %v2892
    %v2894 = vpop.f32.mrb[0].mxu0
    %2895 = vmatprep.mubr.bf16.mxu0 0
    %2896 = vmatmul.mubr.bf16.gmra.mrb[0].mxu0 %v1841
    %v2897 = vpop.f32.mrb[0].mxu0
    %v2898 = vadd.f32 %v2609, %v2897
    %v2899 = vpop.f32.mrb[0].mxu0
    %v2900 = vpop.f32.mrb[0].mxu0
    %v2901 = vadd.f32 %v2612, %v2900
    %v2902 = vpop.f32.mrb[0].mxu0
    %2903 = vmatprep.mubr.bf16.mxu0 0
    %2904 = vmatmul.mubr.bf16.gmra.mrb[0].mxu0 %v1844
    %v2905 = vpop.f32.mrb[0].mxu0
    %v2906 = vadd.f32 %v2617, %v2905
    %v2907 = vpop.f32.mrb[0].mxu0
    %v2908 = vpop.f32.mrb[0].mxu0
    %v2909 = vadd.f32 %v2620, %v2908
    %v2910 = vpop.f32.mrb[0].mxu0
    %2911 = vmatprep.mubr.bf16.mxu0 0
    %2912 = vmatmul.mubr.bf16.gmra.mrb[0].mxu0 %v1847
    %v2913 = vpop.f32.mrb[0].mxu0
    %v2914 = vadd.f32 %v2625, %v2913
    %v2915 = vpop.f32.mrb[0].mxu0
    %v2916 = vpop.f32.mrb[0].mxu0
    %v2917 = vadd.f32 %v2628, %v2916
    %v2918 = vpop.f32.mrb[0].mxu0
    %2919 = vmatprep.mubr.bf16.mxu0 0
    %2920 = vmatmul.mubr.bf16.gmra.mrb[0].mxu0 %v1850
    %v2921 = vpop.f32.mrb[0].mxu0
    %v2922 = vadd.f32 %v2633, %v2921
    %v2923 = vpop.f32.mrb[0].mxu0
    %v2924 = vpop.f32.mrb[0].mxu0
    %v2925 = vadd.f32 %v2636, %v2924
    %v2926 = vpop.f32.mrb[0].mxu0
    %2927 = vmatprep.mubr.bf16.mxu0 0
    %2928 = vmatmul.mubr.bf16.gmra.mrb[0].mxu0 %v1853
    %v2929 = vpop.f32.mrb[0].mxu0
    %v2930 = vadd.f32 %v2641, %v2929
    %v2931 = vpop.f32.mrb[0].mxu0
    %v2932 = vpop.f32.mrb[0].mxu0
    %v2933 = vadd.f32 %v2644, %v2932
    %v2934 = vpop.f32.mrb[0].mxu0
    %2935 = vmatprep.mubr.bf16.mxu0 0
    %2936 = vmatmul.mubr.bf16.gmra.mrb[0].mxu0 %v1856
    %v2937 = vpop.f32.mrb[0].mxu0
    %v2938 = vadd.f32 %v2649, %v2937
    %v2939 = vpop.f32.mrb[0].mxu0
    %v2940 = vpop.f32.mrb[0].mxu0
    %v2941 = vadd.f32 %v2652, %v2940
    %v2942 = vpop.f32.mrb[0].mxu0
    %2943 = vmatprep.mubr.bf16.mxu0 0
    %2944 = vmatmul.mubr.bf16.gmra.mrb[0].mxu0 %v1859
    %v2945 = vpop.f32.mrb[0].mxu0
    %v2946 = vadd.f32 %v2657, %v2945
    %v2947 = vpop.f32.mrb[0].mxu0
    %v2948 = vpop.f32.mrb[0].mxu0
    %v2949 = vadd.f32 %v2660, %v2948
    %v2950 = vpop.f32.mrb[0].mxu0
    %2951 = vmatprep.mubr.bf16.mxu0 0
    %2952 = vmatmul.mubr.bf16.gmra.mrb[0].mxu0 %v1862
    %v2953 = vpop.f32.mrb[0].mxu0
    %v2954 = vadd.f32 %v2665, %v2953
    %v2955 = vpop.f32.mrb[0].mxu0
    %v2956 = vpop.f32.mrb[0].mxu0
    %v2957 = vadd.f32 %v2668, %v2956
    %v2958 = vpop.f32.mrb[0].mxu0
    %2959 = vmatprep.mubr.bf16.mxu0 0
    %2960 = vmatmul.mubr.bf16.gmra.mrb[0].mxu0 %v1865
    %v2961 = vpop.f32.mrb[0].mxu0
    %v2962 = vadd.f32 %v2673, %v2961
    %v2963 = vpop.f32.mrb[0].mxu0
    %v2964 = vpop.f32.mrb[0].mxu0
    %v2965 = vadd.f32 %v2676, %v2964
    %v2966 = vpop.f32.mrb[0].mxu0
    %2967 = vmatprep.mubr.bf16.mxu0 0
    %2968 = vmatmul.mubr.bf16.gmra.mrb[0].mxu0 %v1868
    %v2969 = vpop.f32.mrb[0].mxu0
    %v2970 = vadd.f32 %v2681, %v2969
    %v2971 = vpop.f32.mrb[0].mxu0
    %v2972 = vpop.f32.mrb[0].mxu0
    %v2973 = vadd.f32 %v2684, %v2972
    %v2974 = vpop.f32.mrb[0].mxu0
    %2975 = vmatprep.mubr.bf16.mxu0 0
    %2976 = vmatmul.mubr.bf16.gmra.mrb[0].mxu0 %v1871
    %v2977 = vpop.f32.mrb[0].mxu0
    %v2978 = vadd.f32 %v2689, %v2977
    %v2979 = vpop.f32.mrb[0].mxu0
    %v2980 = vpop.f32.mrb[0].mxu0
    %v2981 = vadd.f32 %v2692, %v2980
    %v2982 = vpop.f32.mrb[0].mxu0
    %2983 = vmatprep.mubr.bf16.mxu0 0
    %2984 = vmatmul.mubr.bf16.gmra.mrb[0].mxu0 %v1874
    %v2985 = vpop.f32.mrb[0].mxu0
    %v2986 = vadd.f32 %v2697, %v2985
    %v2987 = vpop.f32.mrb[0].mxu0
    %v2988 = vpop.f32.mrb[0].mxu0
    %v2989 = vadd.f32 %v2700, %v2988
    %v2990 = vpop.f32.mrb[0].mxu0
    %2991 = vmatprep.mubr.bf16.mxu0 0
    %2992 = vmatmul.mubr.bf16.gmra.mrb[0].mxu0 %v1877
    %v2993 = vpop.f32.mrb[0].mxu0
    %v2994 = vadd.f32 %v2705, %v2993
    %v2995 = vpop.f32.mrb[0].mxu0
    %v2996 = vpop.f32.mrb[0].mxu0
    %v2997 = vadd.f32 %v2708, %v2996
    %v2998 = vpop.f32.mrb[0].mxu0
    %2999 = vmatprep.mubr.bf16.mxu0 0
    %3000 = vmatmul.mubr.bf16.gmra.mrb[0].mxu0 %v1880
    %v3001 = vpop.f32.mrb[0].mxu0
    %v3002 = vadd.f32 %v2713, %v3001
    %v3003 = vpop.f32.mrb[0].mxu0
    %v3004 = vpop.f32.mrb[0].mxu0
    %v3005 = vadd.f32 %v2716, %v3004
    %v3006 = vpop.f32.mrb[0].mxu0
    %3007 = vmatprep.mubr.bf16.mxu0 0
    %3008 = vmatmul.mubr.bf16.gmra.mrb[0].mxu0 %v1883
    %v3009 = vpop.f32.mrb[0].mxu0
    %v3010 = vadd.f32 %v2721, %v3009
    %v3011 = vpop.f32.mrb[0].mxu0
    %v3012 = vpop.f32.mrb[0].mxu0
    %v3013 = vadd.f32 %v2724, %v3012
    %v3014 = vpop.f32.mrb[0].mxu0
    %3015 = vmatprep.mubr.bf16.mxu0 0
    %3016 = vmatmul.mubr.bf16.gmra.mrb[0].mxu0 %v1886
    %v3017 = vpop.f32.mrb[0].mxu0
    %v3018 = vadd.f32 %v2729, %v3017
    %v3019 = vpop.f32.mrb[0].mxu0
    %v3020 = vpop.f32.mrb[0].mxu0
    %v3021 = vadd.f32 %v2732, %v3020
    %v3022 = vpop.f32.mrb[0].mxu0
    %3023 = vmatprep.mubr.bf16.mxu0 0
    %3024 = vmatmul.mubr.bf16.gmra.mrb[0].mxu0 %v1889
    %v3025 = vpop.f32.mrb[0].mxu0
    %v3026 = vadd.f32 %v2737, %v3025
    %v3027 = vpop.f32.mrb[0].mxu0
    %v3028 = vpop.f32.mrb[0].mxu0
    %v3029 = vadd.f32 %v2740, %v3028
    %v3030 = vpop.f32.mrb[0].mxu0
    %3031 = vmatprep.mubr.bf16.mxu0 0
    %3032 = vmatmul.mubr.bf16.gmra.mrb[0].mxu0 %v1892
    %v3033 = vpop.f32.mrb[0].mxu0
    %v3034 = vadd.f32 %v2745, %v3033
    %v3035 = vpop.f32.mrb[0].mxu0
    %v3036 = vpop.f32.mrb[0].mxu0
    %v3037 = vadd.f32 %v2748, %v3036
    %v3038 = vpop.f32.mrb[0].mxu0
    %3039 = vmatprep.mubr.bf16.mxu0 0
    %3040 = vmatmul.mubr.bf16.gmra.mrb[0].mxu0 %v1895
    %v3041 = vpop.f32.mrb[0].mxu0
    %v3042 = vadd.f32 %v2753, %v3041
    %v3043 = vpop.f32.mrb[0].mxu0
    %v3044 = vpop.f32.mrb[0].mxu0
    %v3045 = vadd.f32 %v2756, %v3044
    %v3046 = vpop.f32.mrb[0].mxu0
    %3047 = vmatprep.mubr.bf16.mxu0 0
    %3048 = vmatmul.mubr.bf16.gmra.mrb[0].mxu0 %v1898
    %v3049 = vpop.f32.mrb[0].mxu0
    %v3050 = vadd.f32 %v2761, %v3049
    %v3051 = vpop.f32.mrb[0].mxu0
    %v3052 = vpop.f32.mrb[0].mxu0
    %v3053 = vadd.f32 %v2764, %v3052
    %v3054 = vpop.f32.mrb[0].mxu0
    %3055 = vdwg.mxu0
    %v3056 = vmax.f32 %v2802, 0.0
    %v3057 = vmax.f32 %v2805, 0.0
    %v3058 = vmax.f32 %v2810, 0.0
    %v3059 = vmax.f32 %v2813, 0.0
    %v3060 = vmax.f32 %v2818, 0.0
    %v3061 = vmax.f32 %v2821, 0.0
    %v3062 = vmax.f32 %v2826, 0.0
    %v3063 = vmax.f32 %v2829, 0.0
    %v3064 = vmax.f32 %v2834, 0.0
    %v3065 = vmax.f32 %v2837, 0.0
    %v3066 = vmax.f32 %v2842, 0.0
    %v3067 = vmax.f32 %v2845, 0.0
    %v3068 = vmax.f32 %v2850, 0.0
    %v3069 = vmax.f32 %v2853, 0.0
    %v3070 = vmax.f32 %v2858, 0.0
    %v3071 = vmax.f32 %v2861, 0.0
    %v3072 = vmax.f32 %v2866, 0.0
    %v3073 = vmax.f32 %v2869, 0.0
    %v3074 = vmax.f32 %v2874, 0.0
    %v3075 = vmax.f32 %v2877, 0.0
    %v3076 = vmax.f32 %v2882, 0.0
    %v3077 = vmax.f32 %v2885, 0.0
    %v3078 = vmax.f32 %v2890, 0.0
    %v3079 = vmax.f32 %v2893, 0.0
    %v3080 = vmax.f32 %v2898, 0.0
    %v3081 = vmax.f32 %v2901, 0.0
    %v3082 = vmax.f32 %v2906, 0.0
    %v3083 = vmax.f32 %v2909, 0.0
    %v3084 = vmax.f32 %v2914, 0.0
    %v3085 = vmax.f32 %v2917, 0.0
    %v3086 = vmax.f32 %v2922, 0.0
    %v3087 = vmax.f32 %v2925, 0.0
    %v3088 = vmax.f32 %v2930, 0.0
    %v3089 = vmax.f32 %v2933, 0.0
    %v3090 = vmax.f32 %v2938, 0.0
    %v3091 = vmax.f32 %v2941, 0.0
    %v3092 = vmax.f32 %v2946, 0.0
    %v3093 = vmax.f32 %v2949, 0.0
    %v3094 = vmax.f32 %v2954, 0.0
    %v3095 = vmax.f32 %v2957, 0.0
    %v3096 = vmax.f32 %v2962, 0.0
    %v3097 = vmax.f32 %v2965, 0.0
    %v3098 = vmax.f32 %v2970, 0.0
    %v3099 = vmax.f32 %v2973, 0.0
    %v3100 = vmax.f32 %v2978, 0.0
    %v3101 = vmax.f32 %v2981, 0.0
    %v3102 = vmax.f32 %v2986, 0.0
    %v3103 = vmax.f32 %v2989, 0.0
    %v3104 = vmax.f32 %v2994, 0.0
    %v3105 = vmax.f32 %v2997, 0.0
    %v3106 = vmax.f32 %v3002, 0.0
    %v3107 = vmax.f32 %v3005, 0.0
    %v3108 = vmax.f32 %v3010, 0.0
    %v3109 = vmax.f32 %v3013, 0.0
    %v3110 = vmax.f32 %v3018, 0.0
    %v3111 = vmax.f32 %v3021, 0.0
    %v3112 = vmax.f32 %v3026, 0.0
    %v3113 = vmax.f32 %v3029, 0.0
    %v3114 = vmax.f32 %v3034, 0.0
    %v3115 = vmax.f32 %v3037, 0.0
    %v3116 = vmax.f32 %v3042, 0.0
    %v3117 = vmax.f32 %v3045, 0.0
    %v3118 = vmax.f32 %v3050, 0.0
    %v3119 = vmax.f32 %v3053, 0.0
    %v3120 = vpack.c.bf16 %v3057, %v3056
    %v3121 = vpack.c.bf16 %v3059, %v3058
    %v3122 = vpack.c.bf16 %v3061, %v3060
    %v3123 = vpack.c.bf16 %v3063, %v3062
    %v3124 = vpack.c.bf16 %v3065, %v3064
    %v3125 = vpack.c.bf16 %v3067, %v3066
    %v3126 = vpack.c.bf16 %v3069, %v3068
    %v3127 = vpack.c.bf16 %v3071, %v3070
    %v3128 = vpack.c.bf16 %v3073, %v3072
    %v3129 = vpack.c.bf16 %v3075, %v3074
    %v3130 = vpack.c.bf16 %v3077, %v3076
    %v3131 = vpack.c.bf16 %v3079, %v3078
    %v3132 = vpack.c.bf16 %v3081, %v3080
    %v3133 = vpack.c.bf16 %v3083, %v3082
    %v3134 = vpack.c.bf16 %v3085, %v3084
    %v3135 = vpack.c.bf16 %v3087, %v3086
    %v3136 = vpack.c.bf16 %v3089, %v3088
    %v3137 = vpack.c.bf16 %v3091, %v3090
    %v3138 = vpack.c.bf16 %v3093, %v3092
    %v3139 = vpack.c.bf16 %v3095, %v3094
    %v3140 = vpack.c.bf16 %v3097, %v3096
    %v3141 = vpack.c.bf16 %v3099, %v3098
    %v3142 = vpack.c.bf16 %v3101, %v3100
    %v3143 = vpack.c.bf16 %v3103, %v3102
    %v3144 = vpack.c.bf16 %v3105, %v3104
    %v3145 = vpack.c.bf16 %v3107, %v3106
    %v3146 = vpack.c.bf16 %v3109, %v3108
    %v3147 = vpack.c.bf16 %v3111, %v3110
    %v3148 = vpack.c.bf16 %v3113, %v3112
    %v3149 = vpack.c.bf16 %v3115, %v3114
    %v3150 = vpack.c.bf16 %v3117, %v3116
    %v3151 = vpack.c.bf16 %v3119, %v3118
    %v3152 = vld [vmem:[%s3] sm:$0xf]
    %v3153 = vld [vmem:[%s3 + $0x4] sm:$0xf]
    %v3154 = vld [vmem:[%s3 + $0x8] sm:$0xf]
    %v3155 = vld [vmem:[%s3 + $0xc] sm:$0xf]
    %v3156 = vld [vmem:[%s3 + $0x10] sm:$0xf]
    %v3157 = vld [vmem:[%s3 + $0x14] sm:$0xf]
    %v3158 = vld [vmem:[%s3 + $0x18] sm:$0xf]
    %v3159 = vld [vmem:[%s3 + $0x1c] sm:$0xf]
    %v3160 = vld [vmem:[%s3 + $0x20] sm:$0xf]
    %v3161 = vld [vmem:[%s3 + $0x24] sm:$0xf]
    %v3162 = vld [vmem:[%s3 + $0x28] sm:$0xf]
    %v3163 = vld [vmem:[%s3 + $0x2c] sm:$0xf]
    %v3164 = vld [vmem:[%s3 + $0x30] sm:$0xf]
    %v3165 = vld [vmem:[%s3 + $0x34] sm:$0xf]
    %v3166 = vld [vmem:[%s3 + $0x38] sm:$0xf]
    %v3167 = vld [vmem:[%s3 + $0x3c] sm:$0xf]
    %v3168 = vld [vmem:[%s4] sm:$0x1]
    %v3170 = vlaneseq
    %v3171 = vshrl.u32 %v3170, 7
    %v3172 = vsub.s32 0, %v3171
    %v3173 = vrot.slane %v3168, %v3172
    %v3191 = vunpack.c.l.b16 %v3152
    %v3192 = vunpack.c.l.b16 %v3153
    %v3193 = vunpack.c.l.b16 %v3154
    %v3194 = vunpack.c.l.b16 %v3155
    %v3195 = vunpack.c.l.b16 %v3156
    %v3196 = vunpack.c.l.b16 %v3157
    %v3197 = vunpack.c.l.b16 %v3158
    %v3198 = vunpack.c.l.b16 %v3159
    %v3199 = vunpack.c.l.b16 %v3160
    %v3200 = vunpack.c.l.b16 %v3161
    %v3201 = vunpack.c.l.b16 %v3162
    %v3202 = vunpack.c.l.b16 %v3163
    %v3203 = vunpack.c.l.b16 %v3164
    %v3204 = vunpack.c.l.b16 %v3165
    %v3205 = vunpack.c.l.b16 %v3166
    %v3206 = vunpack.c.l.b16 %v3167
    %v3207 = vpack.c.b16 %v3192, %v3191
    %v3208 = vpack.c.b16 %v3194, %v3193
    %v3209 = vpack.c.b16 %v3196, %v3195
    %v3210 = vpack.c.b16 %v3198, %v3197
    %v3211 = vpack.c.b16 %v3200, %v3199
    %v3212 = vpack.c.b16 %v3202, %v3201
    %v3213 = vpack.c.b16 %v3204, %v3203
    %v3214 = vpack.c.b16 %v3206, %v3205
    %3223 = vmatprep.subr.bf16.mxu0 0
    %3224 = vmatpush1.bf16.msra.mxu0 %v3207
    %3225 = vmatprep.subr.bf16.mxu0 0
    %3226 = vmatpush1.bf16.msra.mxu0 %v3208
    %3227 = vmatprep.subr.bf16.mxu0 0
    %3228 = vmatpush1.bf16.msra.mxu0 %v3209
    %3229 = vmatprep.subr.bf16.mxu0 0
    %3230 = vmatpush1.bf16.msra.mxu0 %v3210
    %3231 = vmatprep.subr.bf16.mxu0 0
    %3232 = vmatpush1.bf16.msra.mxu0 %v3211
    %3233 = vmatprep.subr.bf16.mxu0 0
    %3234 = vmatpush1.bf16.msra.mxu0 %v3212
    %3235 = vmatprep.subr.bf16.mxu0 0
    %3236 = vmatpush1.bf16.msra.mxu0 %v3213
    %3237 = vmatprep.subr.bf16.mxu0 0
    %3238 = vmatpush1.bf16.msra.mxu0 %v3214
    %3239 = vmatprep.subr.bf16.mxu0 0
    %3240 = vmatpush1.bf16.msra.mxu0 0
    %3241 = vmatprep.subr.bf16.mxu0 0
    %3242 = vmatpush1.bf16.msra.mxu0 0
    %3243 = vmatprep.subr.bf16.mxu0 0
    %3244 = vmatpush1.bf16.msra.mxu0 0
    %3245 = vmatprep.subr.bf16.mxu0 0
    %3246 = vmatpush1.bf16.msra.mxu0 0
    %3247 = vmatprep.subr.bf16.mxu0 0
    %3248 = vmatpush1.bf16.msra.mxu0 0
    %3249 = vmatprep.subr.bf16.mxu0 0
    %3250 = vmatpush1.bf16.msra.mxu0 0
    %3251 = vmatprep.subr.bf16.mxu0 0
    %3252 = vmatpush1.bf16.msra.mxu0 0
    %3253 = vmatprep.subr.bf16.mxu0 0
    %3254 = vmatpush1.bf16.msra.mxu0 0
    %3255 = vmatprep.mubr.bf16.mxu0 0
    %3256 = vmatmul.mubr.bf16.gmra.mrb[0].mxu0 %v3120
    %v3257 = vpop.f32.mrb[0].mxu0
    %v3258 = vadd.f32 %v3173, %v3257
    %v3259 = vpop.f32.mrb[0].mxu0
    %v3260 = vpop.f32.mrb[0].mxu0
    %v3261 = vadd.f32 %v3173, %v3260
    %v3262 = vpop.f32.mrb[0].mxu0
    %3263 = vmatprep.mubr.bf16.mxu0 0
    %3264 = vmatmul.mubr.bf16.gmra.mrb[0].mxu0 %v3121
    %v3265 = vpop.f32.mrb[0].mxu0
    %v3266 = vadd.f32 %v3173, %v3265
    %v3267 = vpop.f32.mrb[0].mxu0
    %v3268 = vpop.f32.mrb[0].mxu0
    %v3269 = vadd.f32 %v3173, %v3268
    %v3270 = vpop.f32.mrb[0].mxu0
    %3271 = vmatprep.mubr.bf16.mxu0 0
    %3272 = vmatmul.mubr.bf16.gmra.mrb[0].mxu0 %v3122
    %v3273 = vpop.f32.mrb[0].mxu0
    %v3274 = vadd.f32 %v3173, %v3273
    %v3275 = vpop.f32.mrb[0].mxu0
    %v3276 = vpop.f32.mrb[0].mxu0
    %v3277 = vadd.f32 %v3173, %v3276
    %v3278 = vpop.f32.mrb[0].mxu0
    %3279 = vmatprep.mubr.bf16.mxu0 0
    %3280 = vmatmul.mubr.bf16.gmra.mrb[0].mxu0 %v3123
    %v3281 = vpop.f32.mrb[0].mxu0
    %v3282 = vadd.f32 %v3173, %v3281
    %v3283 = vpop.f32.mrb[0].mxu0
    %v3284 = vpop.f32.mrb[0].mxu0
    %v3285 = vadd.f32 %v3173, %v3284
    %v3286 = vpop.f32.mrb[0].mxu0
    %3287 = vmatprep.mubr.bf16.mxu0 0
    %3288 = vmatmul.mubr.bf16.gmra.mrb[0].mxu0 %v3124
    %v3289 = vpop.f32.mrb[0].mxu0
    %v3290 = vadd.f32 %v3173, %v3289
    %v3291 = vpop.f32.mrb[0].mxu0
    %v3292 = vpop.f32.mrb[0].mxu0
    %v3293 = vadd.f32 %v3173, %v3292
    %v3294 = vpop.f32.mrb[0].mxu0
    %3295 = vmatprep.mubr.bf16.mxu0 0
    %3296 = vmatmul.mubr.bf16.gmra.mrb[0].mxu0 %v3125
    %v3297 = vpop.f32.mrb[0].mxu0
    %v3298 = vadd.f32 %v3173, %v3297
    %v3299 = vpop.f32.mrb[0].mxu0
    %v3300 = vpop.f32.mrb[0].mxu0
    %v3301 = vadd.f32 %v3173, %v3300
    %v3302 = vpop.f32.mrb[0].mxu0
    %3303 = vmatprep.mubr.bf16.mxu0 0
    %3304 = vmatmul.mubr.bf16.gmra.mrb[0].mxu0 %v3126
    %v3305 = vpop.f32.mrb[0].mxu0
    %v3306 = vadd.f32 %v3173, %v3305
    %v3307 = vpop.f32.mrb[0].mxu0
    %v3308 = vpop.f32.mrb[0].mxu0
    %v3309 = vadd.f32 %v3173, %v3308
    %v3310 = vpop.f32.mrb[0].mxu0
    %3311 = vmatprep.mubr.bf16.mxu0 0
    %3312 = vmatmul.mubr.bf16.gmra.mrb[0].mxu0 %v3127
    %v3313 = vpop.f32.mrb[0].mxu0
    %v3314 = vadd.f32 %v3173, %v3313
    %v3315 = vpop.f32.mrb[0].mxu0
    %v3316 = vpop.f32.mrb[0].mxu0
    %v3317 = vadd.f32 %v3173, %v3316
    %v3318 = vpop.f32.mrb[0].mxu0
    %3319 = vmatprep.mubr.bf16.mxu0 0
    %3320 = vmatmul.mubr.bf16.gmra.mrb[0].mxu0 %v3128
    %v3321 = vpop.f32.mrb[0].mxu0
    %v3322 = vadd.f32 %v3173, %v3321
    %v3323 = vpop.f32.mrb[0].mxu0
    %v3324 = vpop.f32.mrb[0].mxu0
    %v3325 = vadd.f32 %v3173, %v3324
    %v3326 = vpop.f32.mrb[0].mxu0
    %3327 = vmatprep.mubr.bf16.mxu0 0
    %3328 = vmatmul.mubr.bf16.gmra.mrb[0].mxu0 %v3129
    %v3329 = vpop.f32.mrb[0].mxu0
    %v3330 = vadd.f32 %v3173, %v3329
    %v3331 = vpop.f32.mrb[0].mxu0
    %v3332 = vpop.f32.mrb[0].mxu0
    %v3333 = vadd.f32 %v3173, %v3332
    %v3334 = vpop.f32.mrb[0].mxu0
    %3335 = vmatprep.mubr.bf16.mxu0 0
    %3336 = vmatmul.mubr.bf16.gmra.mrb[0].mxu0 %v3130
    %v3337 = vpop.f32.mrb[0].mxu0
    %v3338 = vadd.f32 %v3173, %v3337
    %v3339 = vpop.f32.mrb[0].mxu0
    %v3340 = vpop.f32.mrb[0].mxu0
    %v3341 = vadd.f32 %v3173, %v3340
    %v3342 = vpop.f32.mrb[0].mxu0
    %3343 = vmatprep.mubr.bf16.mxu0 0
    %3344 = vmatmul.mubr.bf16.gmra.mrb[0].mxu0 %v3131
    %v3345 = vpop.f32.mrb[0].mxu0
    %v3346 = vadd.f32 %v3173, %v3345
    %v3347 = vpop.f32.mrb[0].mxu0
    %v3348 = vpop.f32.mrb[0].mxu0
    %v3349 = vadd.f32 %v3173, %v3348
    %v3350 = vpop.f32.mrb[0].mxu0
    %3351 = vmatprep.mubr.bf16.mxu0 0
    %3352 = vmatmul.mubr.bf16.gmra.mrb[0].mxu0 %v3132
    %v3353 = vpop.f32.mrb[0].mxu0
    %v3354 = vadd.f32 %v3173, %v3353
    %v3355 = vpop.f32.mrb[0].mxu0
    %v3356 = vpop.f32.mrb[0].mxu0
    %v3357 = vadd.f32 %v3173, %v3356
    %v3358 = vpop.f32.mrb[0].mxu0
    %3359 = vmatprep.mubr.bf16.mxu0 0
    %3360 = vmatmul.mubr.bf16.gmra.mrb[0].mxu0 %v3133
    %v3361 = vpop.f32.mrb[0].mxu0
    %v3362 = vadd.f32 %v3173, %v3361
    %v3363 = vpop.f32.mrb[0].mxu0
    %v3364 = vpop.f32.mrb[0].mxu0
    %v3365 = vadd.f32 %v3173, %v3364
    %v3366 = vpop.f32.mrb[0].mxu0
    %3367 = vmatprep.mubr.bf16.mxu0 0
    %3368 = vmatmul.mubr.bf16.gmra.mrb[0].mxu0 %v3134
    %v3369 = vpop.f32.mrb[0].mxu0
    %v3370 = vadd.f32 %v3173, %v3369
    %v3371 = vpop.f32.mrb[0].mxu0
    %v3372 = vpop.f32.mrb[0].mxu0
    %v3373 = vadd.f32 %v3173, %v3372
    %v3374 = vpop.f32.mrb[0].mxu0
    %3375 = vmatprep.mubr.bf16.mxu0 0
    %3376 = vmatmul.mubr.bf16.gmra.mrb[0].mxu0 %v3135
    %v3377 = vpop.f32.mrb[0].mxu0
    %v3378 = vadd.f32 %v3173, %v3377
    %v3379 = vpop.f32.mrb[0].mxu0
    %v3380 = vpop.f32.mrb[0].mxu0
    %v3381 = vadd.f32 %v3173, %v3380
    %v3382 = vpop.f32.mrb[0].mxu0
    %3383 = vmatprep.mubr.bf16.mxu0 0
    %3384 = vmatmul.mubr.bf16.gmra.mrb[0].mxu0 %v3136
    %v3385 = vpop.f32.mrb[0].mxu0
    %v3386 = vadd.f32 %v3173, %v3385
    %v3387 = vpop.f32.mrb[0].mxu0
    %v3388 = vpop.f32.mrb[0].mxu0
    %v3389 = vadd.f32 %v3173, %v3388
    %v3390 = vpop.f32.mrb[0].mxu0
    %3391 = vmatprep.mubr.bf16.mxu0 0
    %3392 = vmatmul.mubr.bf16.gmra.mrb[0].mxu0 %v3137
    %v3393 = vpop.f32.mrb[0].mxu0
    %v3394 = vadd.f32 %v3173, %v3393
    %v3395 = vpop.f32.mrb[0].mxu0
    %v3396 = vpop.f32.mrb[0].mxu0
    %v3397 = vadd.f32 %v3173, %v3396
    %v3398 = vpop.f32.mrb[0].mxu0
    %3399 = vmatprep.mubr.bf16.mxu0 0
    %3400 = vmatmul.mubr.bf16.gmra.mrb[0].mxu0 %v3138
    %v3401 = vpop.f32.mrb[0].mxu0
    %v3402 = vadd.f32 %v3173, %v3401
    %v3403 = vpop.f32.mrb[0].mxu0
    %v3404 = vpop.f32.mrb[0].mxu0
    %v3405 = vadd.f32 %v3173, %v3404
    %v3406 = vpop.f32.mrb[0].mxu0
    %3407 = vmatprep.mubr.bf16.mxu0 0
    %3408 = vmatmul.mubr.bf16.gmra.mrb[0].mxu0 %v3139
    %v3409 = vpop.f32.mrb[0].mxu0
    %v3410 = vadd.f32 %v3173, %v3409
    %v3411 = vpop.f32.mrb[0].mxu0
    %v3412 = vpop.f32.mrb[0].mxu0
    %v3413 = vadd.f32 %v3173, %v3412
    %v3414 = vpop.f32.mrb[0].mxu0
    %3415 = vmatprep.mubr.bf16.mxu0 0
    %3416 = vmatmul.mubr.bf16.gmra.mrb[0].mxu0 %v3140
    %v3417 = vpop.f32.mrb[0].mxu0
    %v3418 = vadd.f32 %v3173, %v3417
    %v3419 = vpop.f32.mrb[0].mxu0
    %v3420 = vpop.f32.mrb[0].mxu0
    %v3421 = vadd.f32 %v3173, %v3420
    %v3422 = vpop.f32.mrb[0].mxu0
    %3423 = vmatprep.mubr.bf16.mxu0 0
    %3424 = vmatmul.mubr.bf16.gmra.mrb[0].mxu0 %v3141
    %v3425 = vpop.f32.mrb[0].mxu0
    %v3426 = vadd.f32 %v3173, %v3425
    %v3427 = vpop.f32.mrb[0].mxu0
    %v3428 = vpop.f32.mrb[0].mxu0
    %v3429 = vadd.f32 %v3173, %v3428
    %v3430 = vpop.f32.mrb[0].mxu0
    %3431 = vmatprep.mubr.bf16.mxu0 0
    %3432 = vmatmul.mubr.bf16.gmra.mrb[0].mxu0 %v3142
    %v3433 = vpop.f32.mrb[0].mxu0
    %v3434 = vadd.f32 %v3173, %v3433
    %v3435 = vpop.f32.mrb[0].mxu0
    %v3436 = vpop.f32.mrb[0].mxu0
    %v3437 = vadd.f32 %v3173, %v3436
    %v3438 = vpop.f32.mrb[0].mxu0
    %3439 = vmatprep.mubr.bf16.mxu0 0
    %3440 = vmatmul.mubr.bf16.gmra.mrb[0].mxu0 %v3143
    %v3441 = vpop.f32.mrb[0].mxu0
    %v3442 = vadd.f32 %v3173, %v3441
    %v3443 = vpop.f32.mrb[0].mxu0
    %v3444 = vpop.f32.mrb[0].mxu0
    %v3445 = vadd.f32 %v3173, %v3444
    %v3446 = vpop.f32.mrb[0].mxu0
    %3447 = vmatprep.mubr.bf16.mxu0 0
    %3448 = vmatmul.mubr.bf16.gmra.mrb[0].mxu0 %v3144
    %v3449 = vpop.f32.mrb[0].mxu0
    %v3450 = vadd.f32 %v3173, %v3449
    %v3451 = vpop.f32.mrb[0].mxu0
    %v3452 = vpop.f32.mrb[0].mxu0
    %v3453 = vadd.f32 %v3173, %v3452
    %v3454 = vpop.f32.mrb[0].mxu0
    %3455 = vmatprep.mubr.bf16.mxu0 0
    %3456 = vmatmul.mubr.bf16.gmra.mrb[0].mxu0 %v3145
    %v3457 = vpop.f32.mrb[0].mxu0
    %v3458 = vadd.f32 %v3173, %v3457
    %v3459 = vpop.f32.mrb[0].mxu0
    %v3460 = vpop.f32.mrb[0].mxu0
    %v3461 = vadd.f32 %v3173, %v3460
    %v3462 = vpop.f32.mrb[0].mxu0
    %3463 = vmatprep.mubr.bf16.mxu0 0
    %3464 = vmatmul.mubr.bf16.gmra.mrb[0].mxu0 %v3146
    %v3465 = vpop.f32.mrb[0].mxu0
    %v3466 = vadd.f32 %v3173, %v3465
    %v3467 = vpop.f32.mrb[0].mxu0
    %v3468 = vpop.f32.mrb[0].mxu0
    %v3469 = vadd.f32 %v3173, %v3468
    %v3470 = vpop.f32.mrb[0].mxu0
    %3471 = vmatprep.mubr.bf16.mxu0 0
    %3472 = vmatmul.mubr.bf16.gmra.mrb[0].mxu0 %v3147
    %v3473 = vpop.f32.mrb[0].mxu0
    %v3474 = vadd.f32 %v3173, %v3473
    %v3475 = vpop.f32.mrb[0].mxu0
    %v3476 = vpop.f32.mrb[0].mxu0
    %v3477 = vadd.f32 %v3173, %v3476
    %v3478 = vpop.f32.mrb[0].mxu0
    %3479 = vmatprep.mubr.bf16.mxu0 0
    %3480 = vmatmul.mubr.bf16.gmra.mrb[0].mxu0 %v3148
    %v3481 = vpop.f32.mrb[0].mxu0
    %v3482 = vadd.f32 %v3173, %v3481
    %v3483 = vpop.f32.mrb[0].mxu0
    %v3484 = vpop.f32.mrb[0].mxu0
    %v3485 = vadd.f32 %v3173, %v3484
    %v3486 = vpop.f32.mrb[0].mxu0
    %3487 = vmatprep.mubr.bf16.mxu0 0
    %3488 = vmatmul.mubr.bf16.gmra.mrb[0].mxu0 %v3149
    %v3489 = vpop.f32.mrb[0].mxu0
    %v3490 = vadd.f32 %v3173, %v3489
    %v3491 = vpop.f32.mrb[0].mxu0
    %v3492 = vpop.f32.mrb[0].mxu0
    %v3493 = vadd.f32 %v3173, %v3492
    %v3494 = vpop.f32.mrb[0].mxu0
    %3495 = vmatprep.mubr.bf16.mxu0 0
    %3496 = vmatmul.mubr.bf16.gmra.mrb[0].mxu0 %v3150
    %v3497 = vpop.f32.mrb[0].mxu0
    %v3498 = vadd.f32 %v3173, %v3497
    %v3499 = vpop.f32.mrb[0].mxu0
    %v3500 = vpop.f32.mrb[0].mxu0
    %v3501 = vadd.f32 %v3173, %v3500
    %v3502 = vpop.f32.mrb[0].mxu0
    %3503 = vmatprep.mubr.bf16.mxu0 0
    %3504 = vmatmul.mubr.bf16.gmra.mrb[0].mxu0 %v3151
    %v3505 = vpop.f32.mrb[0].mxu0
    %v3506 = vadd.f32 %v3173, %v3505
    %v3507 = vpop.f32.mrb[0].mxu0
    %v3508 = vpop.f32.mrb[0].mxu0
    %v3509 = vadd.f32 %v3173, %v3508
    %v3510 = vpop.f32.mrb[0].mxu0
    %3511 = vdwg.mxu0
    %v3512 = vmax.f32 %v3258, 0.0
    %v3513 = vmax.f32 %v3261, 0.0
    %v3514 = vmax.f32 %v3266, 0.0
    %v3515 = vmax.f32 %v3269, 0.0
    %v3516 = vmax.f32 %v3274, 0.0
    %v3517 = vmax.f32 %v3277, 0.0
    %v3518 = vmax.f32 %v3282, 0.0
    %v3519 = vmax.f32 %v3285, 0.0
    %v3520 = vmax.f32 %v3290, 0.0
    %v3521 = vmax.f32 %v3293, 0.0
    %v3522 = vmax.f32 %v3298, 0.0
    %v3523 = vmax.f32 %v3301, 0.0
    %v3524 = vmax.f32 %v3306, 0.0
    %v3525 = vmax.f32 %v3309, 0.0
    %v3526 = vmax.f32 %v3314, 0.0
    %v3527 = vmax.f32 %v3317, 0.0
    %v3528 = vmax.f32 %v3322, 0.0
    %v3529 = vmax.f32 %v3325, 0.0
    %v3530 = vmax.f32 %v3330, 0.0
    %v3531 = vmax.f32 %v3333, 0.0
    %v3532 = vmax.f32 %v3338, 0.0
    %v3533 = vmax.f32 %v3341, 0.0
    %v3534 = vmax.f32 %v3346, 0.0
    %v3535 = vmax.f32 %v3349, 0.0
    %v3536 = vmax.f32 %v3354, 0.0
    %v3537 = vmax.f32 %v3357, 0.0
    %v3538 = vmax.f32 %v3362, 0.0
    %v3539 = vmax.f32 %v3365, 0.0
    %v3540 = vmax.f32 %v3370, 0.0
    %v3541 = vmax.f32 %v3373, 0.0
    %v3542 = vmax.f32 %v3378, 0.0
    %v3543 = vmax.f32 %v3381, 0.0
    %v3544 = vmax.f32 %v3386, 0.0
    %v3545 = vmax.f32 %v3389, 0.0
    %v3546 = vmax.f32 %v3394, 0.0
    %v3547 = vmax.f32 %v3397, 0.0
    %v3548 = vmax.f32 %v3402, 0.0
    %v3549 = vmax.f32 %v3405, 0.0
    %v3550 = vmax.f32 %v3410, 0.0
    %v3551 = vmax.f32 %v3413, 0.0
    %v3552 = vmax.f32 %v3418, 0.0
    %v3553 = vmax.f32 %v3421, 0.0
    %v3554 = vmax.f32 %v3426, 0.0
    %v3555 = vmax.f32 %v3429, 0.0
    %v3556 = vmax.f32 %v3434, 0.0
    %v3557 = vmax.f32 %v3437, 0.0
    %v3558 = vmax.f32 %v3442, 0.0
    %v3559 = vmax.f32 %v3445, 0.0
    %v3560 = vmax.f32 %v3450, 0.0
    %v3561 = vmax.f32 %v3453, 0.0
    %v3562 = vmax.f32 %v3458, 0.0
    %v3563 = vmax.f32 %v3461, 0.0
    %v3564 = vmax.f32 %v3466, 0.0
    %v3565 = vmax.f32 %v3469, 0.0
    %v3566 = vmax.f32 %v3474, 0.0
    %v3567 = vmax.f32 %v3477, 0.0
    %v3568 = vmax.f32 %v3482, 0.0
    %v3569 = vmax.f32 %v3485, 0.0
    %v3570 = vmax.f32 %v3490, 0.0
    %v3571 = vmax.f32 %v3493, 0.0
    %v3572 = vmax.f32 %v3498, 0.0
    %v3573 = vmax.f32 %v3501, 0.0
    %v3574 = vmax.f32 %v3506, 0.0
    %v3575 = vmax.f32 %v3509, 0.0
    %v3576 = vpack.c.bf16 %v3513, %v3512
    %v3577 = vpack.c.bf16 %v3515, %v3514
    %v3578 = vpack.c.bf16 %v3517, %v3516
    %v3579 = vpack.c.bf16 %v3519, %v3518
    %v3580 = vpack.c.bf16 %v3521, %v3520
    %v3581 = vpack.c.bf16 %v3523, %v3522
    %v3582 = vpack.c.bf16 %v3525, %v3524
    %v3583 = vpack.c.bf16 %v3527, %v3526
    %v3584 = vpack.c.bf16 %v3529, %v3528
    %v3585 = vpack.c.bf16 %v3531, %v3530
    %v3586 = vpack.c.bf16 %v3533, %v3532
    %v3587 = vpack.c.bf16 %v3535, %v3534
    %v3588 = vpack.c.bf16 %v3537, %v3536
    %v3589 = vpack.c.bf16 %v3539, %v3538
    %v3590 = vpack.c.bf16 %v3541, %v3540
    %v3591 = vpack.c.bf16 %v3543, %v3542
    %v3592 = vpack.c.bf16 %v3545, %v3544
    %v3593 = vpack.c.bf16 %v3547, %v3546
    %v3594 = vpack.c.bf16 %v3549, %v3548
    %v3595 = vpack.c.bf16 %v3551, %v3550
    %v3596 = vpack.c.bf16 %v3553, %v3552
    %v3597 = vpack.c.bf16 %v3555, %v3554
    %v3598 = vpack.c.bf16 %v3557, %v3556
    %v3599 = vpack.c.bf16 %v3559, %v3558
    %v3600 = vpack.c.bf16 %v3561, %v3560
    %v3601 = vpack.c.bf16 %v3563, %v3562
    %v3602 = vpack.c.bf16 %v3565, %v3564
    %v3603 = vpack.c.bf16 %v3567, %v3566
    %v3604 = vpack.c.bf16 %v3569, %v3568
    %v3605 = vpack.c.bf16 %v3571, %v3570
    %v3606 = vpack.c.bf16 %v3573, %v3572
    %v3607 = vpack.c.bf16 %v3575, %v3574
    %v3608 = vld [vmem:[%s5] sm:$0xf]
    %v3609 = vld [vmem:[%s5 + $0x4] sm:$0xf]
    %v3610 = vld [vmem:[%s5 + $0x8] sm:$0xf]
    %v3611 = vld [vmem:[%s5 + $0xc] sm:$0xf]
    %v3612 = vld [vmem:[%s5 + $0x10] sm:$0xf]
    %v3613 = vld [vmem:[%s5 + $0x14] sm:$0xf]
    %v3614 = vld [vmem:[%s5 + $0x18] sm:$0xf]
    %v3615 = vld [vmem:[%s5 + $0x1c] sm:$0xf]
    %v3616 = vld [vmem:[%s5 + $0x20] sm:$0xf]
    %v3617 = vld [vmem:[%s5 + $0x24] sm:$0xf]
    %v3618 = vld [vmem:[%s5 + $0x28] sm:$0xf]
    %v3619 = vld [vmem:[%s5 + $0x2c] sm:$0xf]
    %v3620 = vld [vmem:[%s5 + $0x30] sm:$0xf]
    %v3621 = vld [vmem:[%s5 + $0x34] sm:$0xf]
    %v3622 = vld [vmem:[%s5 + $0x38] sm:$0xf]
    %v3623 = vld [vmem:[%s5 + $0x3c] sm:$0xf]
    %v3624 = vld [vmem:[%s6] sm:$0x1]
    %v3626 = vlaneseq
    %v3627 = vshrl.u32 %v3626, 7
    %v3628 = vsub.s32 0, %v3627
    %v3629 = vrot.slane %v3624, %v3628
    %v3647 = vunpack.c.l.b16 %v3608
    %v3648 = vunpack.c.l.b16 %v3609
    %v3649 = vunpack.c.l.b16 %v3610
    %v3650 = vunpack.c.l.b16 %v3611
    %v3651 = vunpack.c.l.b16 %v3612
    %v3652 = vunpack.c.l.b16 %v3613
    %v3653 = vunpack.c.l.b16 %v3614
    %v3654 = vunpack.c.l.b16 %v3615
    %v3655 = vunpack.c.l.b16 %v3616
    %v3656 = vunpack.c.l.b16 %v3617
    %v3657 = vunpack.c.l.b16 %v3618
    %v3658 = vunpack.c.l.b16 %v3619
    %v3659 = vunpack.c.l.b16 %v3620
    %v3660 = vunpack.c.l.b16 %v3621
    %v3661 = vunpack.c.l.b16 %v3622
    %v3662 = vunpack.c.l.b16 %v3623
    %v3663 = vpack.c.b16 %v3648, %v3647
    %v3664 = vpack.c.b16 %v3650, %v3649
    %v3665 = vpack.c.b16 %v3652, %v3651
    %v3666 = vpack.c.b16 %v3654, %v3653
    %v3667 = vpack.c.b16 %v3656, %v3655
    %v3668 = vpack.c.b16 %v3658, %v3657
    %v3669 = vpack.c.b16 %v3660, %v3659
    %v3670 = vpack.c.b16 %v3662, %v3661
    %3679 = vmatprep.subr.bf16.mxu0 0
    %3680 = vmatpush1.bf16.msra.mxu0 %v3663
    %3681 = vmatprep.subr.bf16.mxu0 0
    %3682 = vmatpush1.bf16.msra.mxu0 %v3664
    %3683 = vmatprep.subr.bf16.mxu0 0
    %3684 = vmatpush1.bf16.msra.mxu0 %v3665
    %3685 = vmatprep.subr.bf16.mxu0 0
    %3686 = vmatpush1.bf16.msra.mxu0 %v3666
    %3687 = vmatprep.subr.bf16.mxu0 0
    %3688 = vmatpush1.bf16.msra.mxu0 %v3667
    %3689 = vmatprep.subr.bf16.mxu0 0
    %3690 = vmatpush1.bf16.msra.mxu0 %v3668
    %3691 = vmatprep.subr.bf16.mxu0 0
    %3692 = vmatpush1.bf16.msra.mxu0 %v3669
    %3693 = vmatprep.subr.bf16.mxu0 0
    %3694 = vmatpush1.bf16.msra.mxu0 %v3670
    %3695 = vmatprep.subr.bf16.mxu0 0
    %3696 = vmatpush1.bf16.msra.mxu0 0
    %3697 = vmatprep.subr.bf16.mxu0 0
    %3698 = vmatpush1.bf16.msra.mxu0 0
    %3699 = vmatprep.subr.bf16.mxu0 0
    %3700 = vmatpush1.bf16.msra.mxu0 0
    %3701 = vmatprep.subr.bf16.mxu0 0
    %3702 = vmatpush1.bf16.msra.mxu0 0
    %3703 = vmatprep.subr.bf16.mxu0 0
    %3704 = vmatpush1.bf16.msra.mxu0 0
    %3705 = vmatprep.subr.bf16.mxu0 0
    %3706 = vmatpush1.bf16.msra.mxu0 0
    %3707 = vmatprep.subr.bf16.mxu0 0
    %3708 = vmatpush1.bf16.msra.mxu0 0
    %3709 = vmatprep.subr.bf16.mxu0 0
    %3710 = vmatpush1.bf16.msra.mxu0 0
    %3711 = vmatprep.mubr.bf16.mxu0 0
    %3712 = vmatmul.mubr.bf16.gmra.mrb[0].mxu0 %v3576
    %v3713 = vpop.f32.mrb[0].mxu0
    %v3714 = vadd.f32 %v3629, %v3713
    %v3715 = vpop.f32.mrb[0].mxu0
    %v3716 = vpop.f32.mrb[0].mxu0
    %v3717 = vadd.f32 %v3629, %v3716
    %v3718 = vpop.f32.mrb[0].mxu0
    %3719 = vmatprep.mubr.bf16.mxu0 0
    %3720 = vmatmul.mubr.bf16.gmra.mrb[0].mxu0 %v3577
    %v3721 = vpop.f32.mrb[0].mxu0
    %v3722 = vadd.f32 %v3629, %v3721
    %v3723 = vpop.f32.mrb[0].mxu0
    %v3724 = vpop.f32.mrb[0].mxu0
    %v3725 = vadd.f32 %v3629, %v3724
    %v3726 = vpop.f32.mrb[0].mxu0
    %3727 = vmatprep.mubr.bf16.mxu0 0
    %3728 = vmatmul.mubr.bf16.gmra.mrb[0].mxu0 %v3578
    %v3729 = vpop.f32.mrb[0].mxu0
    %v3730 = vadd.f32 %v3629, %v3729
    %v3731 = vpop.f32.mrb[0].mxu0
    %v3732 = vpop.f32.mrb[0].mxu0
    %v3733 = vadd.f32 %v3629, %v3732
    %v3734 = vpop.f32.mrb[0].mxu0
    %3735 = vmatprep.mubr.bf16.mxu0 0
    %3736 = vmatmul.mubr.bf16.gmra.mrb[0].mxu0 %v3579
    %v3737 = vpop.f32.mrb[0].mxu0
    %v3738 = vadd.f32 %v3629, %v3737
    %v3739 = vpop.f32.mrb[0].mxu0
    %v3740 = vpop.f32.mrb[0].mxu0
    %v3741 = vadd.f32 %v3629, %v3740
    %v3742 = vpop.f32.mrb[0].mxu0
    %3743 = vmatprep.mubr.bf16.mxu0 0
    %3744 = vmatmul.mubr.bf16.gmra.mrb[0].mxu0 %v3580
    %v3745 = vpop.f32.mrb[0].mxu0
    %v3746 = vadd.f32 %v3629, %v3745
    %v3747 = vpop.f32.mrb[0].mxu0
    %v3748 = vpop.f32.mrb[0].mxu0
    %v3749 = vadd.f32 %v3629, %v3748
    %v3750 = vpop.f32.mrb[0].mxu0
    %3751 = vmatprep.mubr.bf16.mxu0 0
    %3752 = vmatmul.mubr.bf16.gmra.mrb[0].mxu0 %v3581
    %v3753 = vpop.f32.mrb[0].mxu0
    %v3754 = vadd.f32 %v3629, %v3753
    %v3755 = vpop.f32.mrb[0].mxu0
    %v3756 = vpop.f32.mrb[0].mxu0
    %v3757 = vadd.f32 %v3629, %v3756
    %v3758 = vpop.f32.mrb[0].mxu0
    %3759 = vmatprep.mubr.bf16.mxu0 0
    %3760 = vmatmul.mubr.bf16.gmra.mrb[0].mxu0 %v3582
    %v3761 = vpop.f32.mrb[0].mxu0
    %v3762 = vadd.f32 %v3629, %v3761
    %v3763 = vpop.f32.mrb[0].mxu0
    %v3764 = vpop.f32.mrb[0].mxu0
    %v3765 = vadd.f32 %v3629, %v3764
    %v3766 = vpop.f32.mrb[0].mxu0
    %3767 = vmatprep.mubr.bf16.mxu0 0
    %3768 = vmatmul.mubr.bf16.gmra.mrb[0].mxu0 %v3583
    %v3769 = vpop.f32.mrb[0].mxu0
    %v3770 = vadd.f32 %v3629, %v3769
    %v3771 = vpop.f32.mrb[0].mxu0
    %v3772 = vpop.f32.mrb[0].mxu0
    %v3773 = vadd.f32 %v3629, %v3772
    %v3774 = vpop.f32.mrb[0].mxu0
    %3775 = vmatprep.mubr.bf16.mxu0 0
    %3776 = vmatmul.mubr.bf16.gmra.mrb[0].mxu0 %v3584
    %v3777 = vpop.f32.mrb[0].mxu0
    %v3778 = vadd.f32 %v3629, %v3777
    %v3779 = vpop.f32.mrb[0].mxu0
    %v3780 = vpop.f32.mrb[0].mxu0
    %v3781 = vadd.f32 %v3629, %v3780
    %v3782 = vpop.f32.mrb[0].mxu0
    %3783 = vmatprep.mubr.bf16.mxu0 0
    %3784 = vmatmul.mubr.bf16.gmra.mrb[0].mxu0 %v3585
    %v3785 = vpop.f32.mrb[0].mxu0
    %v3786 = vadd.f32 %v3629, %v3785
    %v3787 = vpop.f32.mrb[0].mxu0
    %v3788 = vpop.f32.mrb[0].mxu0
    %v3789 = vadd.f32 %v3629, %v3788
    %v3790 = vpop.f32.mrb[0].mxu0
    %3791 = vmatprep.mubr.bf16.mxu0 0
    %3792 = vmatmul.mubr.bf16.gmra.mrb[0].mxu0 %v3586
    %v3793 = vpop.f32.mrb[0].mxu0
    %v3794 = vadd.f32 %v3629, %v3793
    %v3795 = vpop.f32.mrb[0].mxu0
    %v3796 = vpop.f32.mrb[0].mxu0
    %v3797 = vadd.f32 %v3629, %v3796
    %v3798 = vpop.f32.mrb[0].mxu0
    %3799 = vmatprep.mubr.bf16.mxu0 0
    %3800 = vmatmul.mubr.bf16.gmra.mrb[0].mxu0 %v3587
    %v3801 = vpop.f32.mrb[0].mxu0
    %v3802 = vadd.f32 %v3629, %v3801
    %v3803 = vpop.f32.mrb[0].mxu0
    %v3804 = vpop.f32.mrb[0].mxu0
    %v3805 = vadd.f32 %v3629, %v3804
    %v3806 = vpop.f32.mrb[0].mxu0
    %3807 = vmatprep.mubr.bf16.mxu0 0
    %3808 = vmatmul.mubr.bf16.gmra.mrb[0].mxu0 %v3588
    %v3809 = vpop.f32.mrb[0].mxu0
    %v3810 = vadd.f32 %v3629, %v3809
    %v3811 = vpop.f32.mrb[0].mxu0
    %v3812 = vpop.f32.mrb[0].mxu0
    %v3813 = vadd.f32 %v3629, %v3812
    %v3814 = vpop.f32.mrb[0].mxu0
    %3815 = vmatprep.mubr.bf16.mxu0 0
    %3816 = vmatmul.mubr.bf16.gmra.mrb[0].mxu0 %v3589
    %v3817 = vpop.f32.mrb[0].mxu0
    %v3818 = vadd.f32 %v3629, %v3817
    %v3819 = vpop.f32.mrb[0].mxu0
    %v3820 = vpop.f32.mrb[0].mxu0
    %v3821 = vadd.f32 %v3629, %v3820
    %v3822 = vpop.f32.mrb[0].mxu0
    %3823 = vmatprep.mubr.bf16.mxu0 0
    %3824 = vmatmul.mubr.bf16.gmra.mrb[0].mxu0 %v3590
    %v3825 = vpop.f32.mrb[0].mxu0
    %v3826 = vadd.f32 %v3629, %v3825
    %v3827 = vpop.f32.mrb[0].mxu0
    %v3828 = vpop.f32.mrb[0].mxu0
    %v3829 = vadd.f32 %v3629, %v3828
    %v3830 = vpop.f32.mrb[0].mxu0
    %3831 = vmatprep.mubr.bf16.mxu0 0
    %3832 = vmatmul.mubr.bf16.gmra.mrb[0].mxu0 %v3591
    %v3833 = vpop.f32.mrb[0].mxu0
    %v3834 = vadd.f32 %v3629, %v3833
    %v3835 = vpop.f32.mrb[0].mxu0
    %v3836 = vpop.f32.mrb[0].mxu0
    %v3837 = vadd.f32 %v3629, %v3836
    %v3838 = vpop.f32.mrb[0].mxu0
    %3839 = vmatprep.mubr.bf16.mxu0 0
    %3840 = vmatmul.mubr.bf16.gmra.mrb[0].mxu0 %v3592
    %v3841 = vpop.f32.mrb[0].mxu0
    %v3842 = vadd.f32 %v3629, %v3841
    %v3843 = vpop.f32.mrb[0].mxu0
    %v3844 = vpop.f32.mrb[0].mxu0
    %v3845 = vadd.f32 %v3629, %v3844
    %v3846 = vpop.f32.mrb[0].mxu0
    %3847 = vmatprep.mubr.bf16.mxu0 0
    %3848 = vmatmul.mubr.bf16.gmra.mrb[0].mxu0 %v3593
    %v3849 = vpop.f32.mrb[0].mxu0
    %v3850 = vadd.f32 %v3629, %v3849
    %v3851 = vpop.f32.mrb[0].mxu0
    %v3852 = vpop.f32.mrb[0].mxu0
    %v3853 = vadd.f32 %v3629, %v3852
    %v3854 = vpop.f32.mrb[0].mxu0
    %3855 = vmatprep.mubr.bf16.mxu0 0
    %3856 = vmatmul.mubr.bf16.gmra.mrb[0].mxu0 %v3594
    %v3857 = vpop.f32.mrb[0].mxu0
    %v3858 = vadd.f32 %v3629, %v3857
    %v3859 = vpop.f32.mrb[0].mxu0
    %v3860 = vpop.f32.mrb[0].mxu0
    %v3861 = vadd.f32 %v3629, %v3860
    %v3862 = vpop.f32.mrb[0].mxu0
    %3863 = vmatprep.mubr.bf16.mxu0 0
    %3864 = vmatmul.mubr.bf16.gmra.mrb[0].mxu0 %v3595
    %v3865 = vpop.f32.mrb[0].mxu0
    %v3866 = vadd.f32 %v3629, %v3865
    %v3867 = vpop.f32.mrb[0].mxu0
    %v3868 = vpop.f32.mrb[0].mxu0
    %v3869 = vadd.f32 %v3629, %v3868
    %v3870 = vpop.f32.mrb[0].mxu0
    %3871 = vmatprep.mubr.bf16.mxu0 0
    %3872 = vmatmul.mubr.bf16.gmra.mrb[0].mxu0 %v3596
    %v3873 = vpop.f32.mrb[0].mxu0
    %v3874 = vadd.f32 %v3629, %v3873
    %v3875 = vpop.f32.mrb[0].mxu0
    %v3876 = vpop.f32.mrb[0].mxu0
    %v3877 = vadd.f32 %v3629, %v3876
    %v3878 = vpop.f32.mrb[0].mxu0
    %3879 = vmatprep.mubr.bf16.mxu0 0
    %3880 = vmatmul.mubr.bf16.gmra.mrb[0].mxu0 %v3597
    %v3881 = vpop.f32.mrb[0].mxu0
    %v3882 = vadd.f32 %v3629, %v3881
    %v3883 = vpop.f32.mrb[0].mxu0
    %v3884 = vpop.f32.mrb[0].mxu0
    %v3885 = vadd.f32 %v3629, %v3884
    %v3886 = vpop.f32.mrb[0].mxu0
    %3887 = vmatprep.mubr.bf16.mxu0 0
    %3888 = vmatmul.mubr.bf16.gmra.mrb[0].mxu0 %v3598
    %v3889 = vpop.f32.mrb[0].mxu0
    %v3890 = vadd.f32 %v3629, %v3889
    %v3891 = vpop.f32.mrb[0].mxu0
    %v3892 = vpop.f32.mrb[0].mxu0
    %v3893 = vadd.f32 %v3629, %v3892
    %v3894 = vpop.f32.mrb[0].mxu0
    %3895 = vmatprep.mubr.bf16.mxu0 0
    %3896 = vmatmul.mubr.bf16.gmra.mrb[0].mxu0 %v3599
    %v3897 = vpop.f32.mrb[0].mxu0
    %v3898 = vadd.f32 %v3629, %v3897
    %v3899 = vpop.f32.mrb[0].mxu0
    %v3900 = vpop.f32.mrb[0].mxu0
    %v3901 = vadd.f32 %v3629, %v3900
    %v3902 = vpop.f32.mrb[0].mxu0
    %3903 = vmatprep.mubr.bf16.mxu0 0
    %3904 = vmatmul.mubr.bf16.gmra.mrb[0].mxu0 %v3600
    %v3905 = vpop.f32.mrb[0].mxu0
    %v3906 = vadd.f32 %v3629, %v3905
    %v3907 = vpop.f32.mrb[0].mxu0
    %v3908 = vpop.f32.mrb[0].mxu0
    %v3909 = vadd.f32 %v3629, %v3908
    %v3910 = vpop.f32.mrb[0].mxu0
    %3911 = vmatprep.mubr.bf16.mxu0 0
    %3912 = vmatmul.mubr.bf16.gmra.mrb[0].mxu0 %v3601
    %v3913 = vpop.f32.mrb[0].mxu0
    %v3914 = vadd.f32 %v3629, %v3913
    %v3915 = vpop.f32.mrb[0].mxu0
    %v3916 = vpop.f32.mrb[0].mxu0
    %v3917 = vadd.f32 %v3629, %v3916
    %v3918 = vpop.f32.mrb[0].mxu0
    %3919 = vmatprep.mubr.bf16.mxu0 0
    %3920 = vmatmul.mubr.bf16.gmra.mrb[0].mxu0 %v3602
    %v3921 = vpop.f32.mrb[0].mxu0
    %v3922 = vadd.f32 %v3629, %v3921
    %v3923 = vpop.f32.mrb[0].mxu0
    %v3924 = vpop.f32.mrb[0].mxu0
    %v3925 = vadd.f32 %v3629, %v3924
    %v3926 = vpop.f32.mrb[0].mxu0
    %3927 = vmatprep.mubr.bf16.mxu0 0
    %3928 = vmatmul.mubr.bf16.gmra.mrb[0].mxu0 %v3603
    %v3929 = vpop.f32.mrb[0].mxu0
    %v3930 = vadd.f32 %v3629, %v3929
    %v3931 = vpop.f32.mrb[0].mxu0
    %v3932 = vpop.f32.mrb[0].mxu0
    %v3933 = vadd.f32 %v3629, %v3932
    %v3934 = vpop.f32.mrb[0].mxu0
    %3935 = vmatprep.mubr.bf16.mxu0 0
    %3936 = vmatmul.mubr.bf16.gmra.mrb[0].mxu0 %v3604
    %v3937 = vpop.f32.mrb[0].mxu0
    %v3938 = vadd.f32 %v3629, %v3937
    %v3939 = vpop.f32.mrb[0].mxu0
    %v3940 = vpop.f32.mrb[0].mxu0
    %v3941 = vadd.f32 %v3629, %v3940
    %v3942 = vpop.f32.mrb[0].mxu0
    %3943 = vmatprep.mubr.bf16.mxu0 0
    %3944 = vmatmul.mubr.bf16.gmra.mrb[0].mxu0 %v3605
    %v3945 = vpop.f32.mrb[0].mxu0
    %v3946 = vadd.f32 %v3629, %v3945
    %v3947 = vpop.f32.mrb[0].mxu0
    %v3948 = vpop.f32.mrb[0].mxu0
    %v3949 = vadd.f32 %v3629, %v3948
    %v3950 = vpop.f32.mrb[0].mxu0
    %3951 = vmatprep.mubr.bf16.mxu0 0
    %3952 = vmatmul.mubr.bf16.gmra.mrb[0].mxu0 %v3606
    %v3953 = vpop.f32.mrb[0].mxu0
    %v3954 = vadd.f32 %v3629, %v3953
    %v3955 = vpop.f32.mrb[0].mxu0
    %v3956 = vpop.f32.mrb[0].mxu0
    %v3957 = vadd.f32 %v3629, %v3956
    %v3958 = vpop.f32.mrb[0].mxu0
    %3959 = vmatprep.mubr.bf16.mxu0 0
    %3960 = vmatmul.mubr.bf16.gmra.mrb[0].mxu0 %v3607
    %v3961 = vpop.f32.mrb[0].mxu0
    %v3962 = vadd.f32 %v3629, %v3961
    %v3963 = vpop.f32.mrb[0].mxu0
    %v3964 = vpop.f32.mrb[0].mxu0
    %v3965 = vadd.f32 %v3629, %v3964
    %v3966 = vpop.f32.mrb[0].mxu0
    %3967 = vdwg.mxu0
    %3968 = vmax.xlane.f32.xlu0 %v3714
    %v3969 = vpop.xlane.xlu0 %3968
    %3970 = vmax.xlane.f32.xlu0 %v3717
    %v3971 = vpop.xlane.xlu0 %3970
    %3972 = vmax.xlane.f32.xlu0 %v3722
    %v3973 = vpop.xlane.xlu0 %3972
    %3974 = vmax.xlane.f32.xlu0 %v3725
    %v3975 = vpop.xlane.xlu0 %3974
    %3976 = vmax.xlane.f32.xlu0 %v3730
    %v3977 = vpop.xlane.xlu0 %3976
    %3978 = vmax.xlane.f32.xlu0 %v3733
    %v3979 = vpop.xlane.xlu0 %3978
    %3980 = vmax.xlane.f32.xlu0 %v3738
    %v3981 = vpop.xlane.xlu0 %3980
    %3982 = vmax.xlane.f32.xlu0 %v3741
    %v3983 = vpop.xlane.xlu0 %3982
    %3984 = vmax.xlane.f32.xlu0 %v3746
    %v3985 = vpop.xlane.xlu0 %3984
    %3986 = vmax.xlane.f32.xlu0 %v3749
    %v3987 = vpop.xlane.xlu0 %3986
    %3988 = vmax.xlane.f32.xlu0 %v3754
    %v3989 = vpop.xlane.xlu0 %3988
    %3990 = vmax.xlane.f32.xlu0 %v3757
    %v3991 = vpop.xlane.xlu0 %3990
    %3992 = vmax.xlane.f32.xlu0 %v3762
    %v3993 = vpop.xlane.xlu0 %3992
    %3994 = vmax.xlane.f32.xlu0 %v3765
    %v3995 = vpop.xlane.xlu0 %3994
    %3996 = vmax.xlane.f32.xlu0 %v3770
    %v3997 = vpop.xlane.xlu0 %3996
    %3998 = vmax.xlane.f32.xlu0 %v3773
    %v3999 = vpop.xlane.xlu0 %3998
    %4000 = vmax.xlane.f32.xlu0 %v3778
    %v4001 = vpop.xlane.xlu0 %4000
    %4002 = vmax.xlane.f32.xlu0 %v3781
    %v4003 = vpop.xlane.xlu0 %4002
    %4004 = vmax.xlane.f32.xlu0 %v3786
    %v4005 = vpop.xlane.xlu0 %4004
    %4006 = vmax.xlane.f32.xlu0 %v3789
    %v4007 = vpop.xlane.xlu0 %4006
    %4008 = vmax.xlane.f32.xlu0 %v3794
    %v4009 = vpop.xlane.xlu0 %4008
    %4010 = vmax.xlane.f32.xlu0 %v3797
    %v4011 = vpop.xlane.xlu0 %4010
    %4012 = vmax.xlane.f32.xlu0 %v3802
    %v4013 = vpop.xlane.xlu0 %4012
    %4014 = vmax.xlane.f32.xlu0 %v3805
    %v4015 = vpop.xlane.xlu0 %4014
    %4016 = vmax.xlane.f32.xlu0 %v3810
    %v4017 = vpop.xlane.xlu0 %4016
    %4018 = vmax.xlane.f32.xlu0 %v3813
    %v4019 = vpop.xlane.xlu0 %4018
    %4020 = vmax.xlane.f32.xlu0 %v3818
    %v4021 = vpop.xlane.xlu0 %4020
    %4022 = vmax.xlane.f32.xlu0 %v3821
    %v4023 = vpop.xlane.xlu0 %4022
    %4024 = vmax.xlane.f32.xlu0 %v3826
    %v4025 = vpop.xlane.xlu0 %4024
    %4026 = vmax.xlane.f32.xlu0 %v3829
    %v4027 = vpop.xlane.xlu0 %4026
    %4028 = vmax.xlane.f32.xlu0 %v3834
    %v4029 = vpop.xlane.xlu0 %4028
    %4030 = vmax.xlane.f32.xlu0 %v3837
    %v4031 = vpop.xlane.xlu0 %4030
    %4032 = vmax.xlane.f32.xlu0 %v3842
    %v4033 = vpop.xlane.xlu0 %4032
    %4034 = vmax.xlane.f32.xlu0 %v3845
    %v4035 = vpop.xlane.xlu0 %4034
    %4036 = vmax.xlane.f32.xlu0 %v3850
    %v4037 = vpop.xlane.xlu0 %4036
    %4038 = vmax.xlane.f32.xlu0 %v3853
    %v4039 = vpop.xlane.xlu0 %4038
    %4040 = vmax.xlane.f32.xlu0 %v3858
    %v4041 = vpop.xlane.xlu0 %4040
    %4042 = vmax.xlane.f32.xlu0 %v3861
    %v4043 = vpop.xlane.xlu0 %4042
    %4044 = vmax.xlane.f32.xlu0 %v3866
    %v4045 = vpop.xlane.xlu0 %4044
    %4046 = vmax.xlane.f32.xlu0 %v3869
    %v4047 = vpop.xlane.xlu0 %4046
    %4048 = vmax.xlane.f32.xlu0 %v3874
    %v4049 = vpop.xlane.xlu0 %4048
    %4050 = vmax.xlane.f32.xlu0 %v3877
    %v4051 = vpop.xlane.xlu0 %4050
    %4052 = vmax.xlane.f32.xlu0 %v3882
    %v4053 = vpop.xlane.xlu0 %4052
    %4054 = vmax.xlane.f32.xlu0 %v3885
    %v4055 = vpop.xlane.xlu0 %4054
    %4056 = vmax.xlane.f32.xlu0 %v3890
    %v4057 = vpop.xlane.xlu0 %4056
    %4058 = vmax.xlane.f32.xlu0 %v3893
    %v4059 = vpop.xlane.xlu0 %4058
    %4060 = vmax.xlane.f32.xlu0 %v3898
    %v4061 = vpop.xlane.xlu0 %4060
    %4062 = vmax.xlane.f32.xlu0 %v3901
    %v4063 = vpop.xlane.xlu0 %4062
    %4064 = vmax.xlane.f32.xlu0 %v3906
    %v4065 = vpop.xlane.xlu0 %4064
    %4066 = vmax.xlane.f32.xlu0 %v3909
    %v4067 = vpop.xlane.xlu0 %4066
    %4068 = vmax.xlane.f32.xlu0 %v3914
    %v4069 = vpop.xlane.xlu0 %4068
    %4070 = vmax.xlane.f32.xlu0 %v3917
    %v4071 = vpop.xlane.xlu0 %4070
    %4072 = vmax.xlane.f32.xlu0 %v3922
    %v4073 = vpop.xlane.xlu0 %4072
    %4074 = vmax.xlane.f32.xlu0 %v3925
    %v4075 = vpop.xlane.xlu0 %4074
    %4076 = vmax.xlane.f32.xlu0 %v3930
    %v4077 = vpop.xlane.xlu0 %4076
    %4078 = vmax.xlane.f32.xlu0 %v3933
    %v4079 = vpop.xlane.xlu0 %4078
    %4080 = vmax.xlane.f32.xlu0 %v3938
    %v4081 = vpop.xlane.xlu0 %4080
    %4082 = vmax.xlane.f32.xlu0 %v3941
    %v4083 = vpop.xlane.xlu0 %4082
    %4084 = vmax.xlane.f32.xlu0 %v3946
    %v4085 = vpop.xlane.xlu0 %4084
    %4086 = vmax.xlane.f32.xlu0 %v3949
    %v4087 = vpop.xlane.xlu0 %4086
    %4088 = vmax.xlane.f32.xlu0 %v3954
    %v4089 = vpop.xlane.xlu0 %4088
    %4090 = vmax.xlane.f32.xlu0 %v3957
    %v4091 = vpop.xlane.xlu0 %4090
    %4092 = vmax.xlane.f32.xlu0 %v3962
    %v4093 = vpop.xlane.xlu0 %4092
    %4094 = vmax.xlane.f32.xlu0 %v3965
    %v4095 = vpop.xlane.xlu0 %4094
    %v4096 = vsub.f32 %v3714, %v3969
    %v4097 = vsub.f32 %v3717, %v3971
    %v4098 = vsub.f32 %v3722, %v3973
    %v4099 = vsub.f32 %v3725, %v3975
    %v4100 = vsub.f32 %v3730, %v3977
    %v4101 = vsub.f32 %v3733, %v3979
    %v4102 = vsub.f32 %v3738, %v3981
    %v4103 = vsub.f32 %v3741, %v3983
    %v4104 = vsub.f32 %v3746, %v3985
    %v4105 = vsub.f32 %v3749, %v3987
    %v4106 = vsub.f32 %v3754, %v3989
    %v4107 = vsub.f32 %v3757, %v3991
    %v4108 = vsub.f32 %v3762, %v3993
    %v4109 = vsub.f32 %v3765, %v3995
    %v4110 = vsub.f32 %v3770, %v3997
    %v4111 = vsub.f32 %v3773, %v3999
    %v4112 = vsub.f32 %v3778, %v4001
    %v4113 = vsub.f32 %v3781, %v4003
    %v4114 = vsub.f32 %v3786, %v4005
    %v4115 = vsub.f32 %v3789, %v4007
    %v4116 = vsub.f32 %v3794, %v4009
    %v4117 = vsub.f32 %v3797, %v4011
    %v4118 = vsub.f32 %v3802, %v4013
    %v4119 = vsub.f32 %v3805, %v4015
    %v4120 = vsub.f32 %v3810, %v4017
    %v4121 = vsub.f32 %v3813, %v4019
    %v4122 = vsub.f32 %v3818, %v4021
    %v4123 = vsub.f32 %v3821, %v4023
    %v4124 = vsub.f32 %v3826, %v4025
    %v4125 = vsub.f32 %v3829, %v4027
    %v4126 = vsub.f32 %v3834, %v4029
    %v4127 = vsub.f32 %v3837, %v4031
    %v4128 = vsub.f32 %v3842, %v4033
    %v4129 = vsub.f32 %v3845, %v4035
    %v4130 = vsub.f32 %v3850, %v4037
    %v4131 = vsub.f32 %v3853, %v4039
    %v4132 = vsub.f32 %v3858, %v4041
    %v4133 = vsub.f32 %v3861, %v4043
    %v4134 = vsub.f32 %v3866, %v4045
    %v4135 = vsub.f32 %v3869, %v4047
    %v4136 = vsub.f32 %v3874, %v4049
    %v4137 = vsub.f32 %v3877, %v4051
    %v4138 = vsub.f32 %v3882, %v4053
    %v4139 = vsub.f32 %v3885, %v4055
    %v4140 = vsub.f32 %v3890, %v4057
    %v4141 = vsub.f32 %v3893, %v4059
    %v4142 = vsub.f32 %v3898, %v4061
    %v4143 = vsub.f32 %v3901, %v4063
    %v4144 = vsub.f32 %v3906, %v4065
    %v4145 = vsub.f32 %v3909, %v4067
    %v4146 = vsub.f32 %v3914, %v4069
    %v4147 = vsub.f32 %v3917, %v4071
    %v4148 = vsub.f32 %v3922, %v4073
    %v4149 = vsub.f32 %v3925, %v4075
    %v4150 = vsub.f32 %v3930, %v4077
    %v4151 = vsub.f32 %v3933, %v4079
    %v4152 = vsub.f32 %v3938, %v4081
    %v4153 = vsub.f32 %v3941, %v4083
    %v4154 = vsub.f32 %v3946, %v4085
    %v4155 = vsub.f32 %v3949, %v4087
    %v4156 = vsub.f32 %v3954, %v4089
    %v4157 = vsub.f32 %v3957, %v4091
    %v4158 = vsub.f32 %v3962, %v4093
    %v4159 = vsub.f32 %v3965, %v4095
    %v4160 = vmul.f32 %v4096, 1.442695
    %v4161 = vpow.pop %v4160
    %v4162 = vmul.f32 %v4097, 1.442695
    %v4163 = vpow.pop %v4162
    %v4164 = vmul.f32 %v4098, 1.442695
    %v4165 = vpow.pop %v4164
    %v4166 = vmul.f32 %v4099, 1.442695
    %v4167 = vpow.pop %v4166
    %v4168 = vmul.f32 %v4100, 1.442695
    %v4169 = vpow.pop %v4168
    %v4170 = vmul.f32 %v4101, 1.442695
    %v4171 = vpow.pop %v4170
    %v4172 = vmul.f32 %v4102, 1.442695
    %v4173 = vpow.pop %v4172
    %v4174 = vmul.f32 %v4103, 1.442695
    %v4175 = vpow.pop %v4174
    %v4176 = vmul.f32 %v4104, 1.442695
    %v4177 = vpow.pop %v4176
    %v4178 = vmul.f32 %v4105, 1.442695
    %v4179 = vpow.pop %v4178
    %v4180 = vmul.f32 %v4106, 1.442695
    %v4181 = vpow.pop %v4180
    %v4182 = vmul.f32 %v4107, 1.442695
    %v4183 = vpow.pop %v4182
    %v4184 = vmul.f32 %v4108, 1.442695
    %v4185 = vpow.pop %v4184
    %v4186 = vmul.f32 %v4109, 1.442695
    %v4187 = vpow.pop %v4186
    %v4188 = vmul.f32 %v4110, 1.442695
    %v4189 = vpow.pop %v4188
    %v4190 = vmul.f32 %v4111, 1.442695
    %v4191 = vpow.pop %v4190
    %v4192 = vmul.f32 %v4112, 1.442695
    %v4193 = vpow.pop %v4192
    %v4194 = vmul.f32 %v4113, 1.442695
    %v4195 = vpow.pop %v4194
    %v4196 = vmul.f32 %v4114, 1.442695
    %v4197 = vpow.pop %v4196
    %v4198 = vmul.f32 %v4115, 1.442695
    %v4199 = vpow.pop %v4198
    %v4200 = vmul.f32 %v4116, 1.442695
    %v4201 = vpow.pop %v4200
    %v4202 = vmul.f32 %v4117, 1.442695
    %v4203 = vpow.pop %v4202
    %v4204 = vmul.f32 %v4118, 1.442695
    %v4205 = vpow.pop %v4204
    %v4206 = vmul.f32 %v4119, 1.442695
    %v4207 = vpow.pop %v4206
    %v4208 = vmul.f32 %v4120, 1.442695
    %v4209 = vpow.pop %v4208
    %v4210 = vmul.f32 %v4121, 1.442695
    %v4211 = vpow.pop %v4210
    %v4212 = vmul.f32 %v4122, 1.442695
    %v4213 = vpow.pop %v4212
    %v4214 = vmul.f32 %v4123, 1.442695
    %v4215 = vpow.pop %v4214
    %v4216 = vmul.f32 %v4124, 1.442695
    %v4217 = vpow.pop %v4216
    %v4218 = vmul.f32 %v4125, 1.442695
    %v4219 = vpow.pop %v4218
    %v4220 = vmul.f32 %v4126, 1.442695
    %v4221 = vpow.pop %v4220
    %v4222 = vmul.f32 %v4127, 1.442695
    %v4223 = vpow.pop %v4222
    %v4224 = vmul.f32 %v4128, 1.442695
    %v4225 = vpow.pop %v4224
    %v4226 = vmul.f32 %v4129, 1.442695
    %v4227 = vpow.pop %v4226
    %v4228 = vmul.f32 %v4130, 1.442695
    %v4229 = vpow.pop %v4228
    %v4230 = vmul.f32 %v4131, 1.442695
    %v4231 = vpow.pop %v4230
    %v4232 = vmul.f32 %v4132, 1.442695
    %v4233 = vpow.pop %v4232
    %v4234 = vmul.f32 %v4133, 1.442695
    %v4235 = vpow.pop %v4234
    %v4236 = vmul.f32 %v4134, 1.442695
    %v4237 = vpow.pop %v4236
    %v4238 = vmul.f32 %v4135, 1.442695
    %v4239 = vpow.pop %v4238
    %v4240 = vmul.f32 %v4136, 1.442695
    %v4241 = vpow.pop %v4240
    %v4242 = vmul.f32 %v4137, 1.442695
    %v4243 = vpow.pop %v4242
    %v4244 = vmul.f32 %v4138, 1.442695
    %v4245 = vpow.pop %v4244
    %v4246 = vmul.f32 %v4139, 1.442695
    %v4247 = vpow.pop %v4246
    %v4248 = vmul.f32 %v4140, 1.442695
    %v4249 = vpow.pop %v4248
    %v4250 = vmul.f32 %v4141, 1.442695
    %v4251 = vpow.pop %v4250
    %v4252 = vmul.f32 %v4142, 1.442695
    %v4253 = vpow.pop %v4252
    %v4254 = vmul.f32 %v4143, 1.442695
    %v4255 = vpow.pop %v4254
    %v4256 = vmul.f32 %v4144, 1.442695
    %v4257 = vpow.pop %v4256
    %v4258 = vmul.f32 %v4145, 1.442695
    %v4259 = vpow.pop %v4258
    %v4260 = vmul.f32 %v4146, 1.442695
    %v4261 = vpow.pop %v4260
    %v4262 = vmul.f32 %v4147, 1.442695
    %v4263 = vpow.pop %v4262
    %v4264 = vmul.f32 %v4148, 1.442695
    %v4265 = vpow.pop %v4264
    %v4266 = vmul.f32 %v4149, 1.442695
    %v4267 = vpow.pop %v4266
    %v4268 = vmul.f32 %v4150, 1.442695
    %v4269 = vpow.pop %v4268
    %v4270 = vmul.f32 %v4151, 1.442695
    %v4271 = vpow.pop %v4270
    %v4272 = vmul.f32 %v4152, 1.442695
    %v4273 = vpow.pop %v4272
    %v4274 = vmul.f32 %v4153, 1.442695
    %v4275 = vpow.pop %v4274
    %v4276 = vmul.f32 %v4154, 1.442695
    %v4277 = vpow.pop %v4276
    %v4278 = vmul.f32 %v4155, 1.442695
    %v4279 = vpow.pop %v4278
    %v4280 = vmul.f32 %v4156, 1.442695
    %v4281 = vpow.pop %v4280
    %v4282 = vmul.f32 %v4157, 1.442695
    %v4283 = vpow.pop %v4282
    %v4284 = vmul.f32 %v4158, 1.442695
    %v4285 = vpow.pop %v4284
    %v4286 = vmul.f32 %v4159, 1.442695
    %v4287 = vpow.pop %v4286
    %4288 = vadd.xlane.f32.xlu0 %v4161
    %v4289 = vpop.xlane.xlu0 %4288
    %4290 = vadd.xlane.f32.xlu0 %v4163
    %v4291 = vpop.xlane.xlu0 %4290
    %4292 = vadd.xlane.f32.xlu0 %v4165
    %v4293 = vpop.xlane.xlu0 %4292
    %4294 = vadd.xlane.f32.xlu0 %v4167
    %v4295 = vpop.xlane.xlu0 %4294
    %4296 = vadd.xlane.f32.xlu0 %v4169
    %v4297 = vpop.xlane.xlu0 %4296
    %4298 = vadd.xlane.f32.xlu0 %v4171
    %v4299 = vpop.xlane.xlu0 %4298
    %4300 = vadd.xlane.f32.xlu0 %v4173
    %v4301 = vpop.xlane.xlu0 %4300
    %4302 = vadd.xlane.f32.xlu0 %v4175
    %v4303 = vpop.xlane.xlu0 %4302
    %4304 = vadd.xlane.f32.xlu0 %v4177
    %v4305 = vpop.xlane.xlu0 %4304
    %4306 = vadd.xlane.f32.xlu0 %v4179
    %v4307 = vpop.xlane.xlu0 %4306
    %4308 = vadd.xlane.f32.xlu0 %v4181
    %v4309 = vpop.xlane.xlu0 %4308
    %4310 = vadd.xlane.f32.xlu0 %v4183
    %v4311 = vpop.xlane.xlu0 %4310
    %4312 = vadd.xlane.f32.xlu0 %v4185
    %v4313 = vpop.xlane.xlu0 %4312
    %4314 = vadd.xlane.f32.xlu0 %v4187
    %v4315 = vpop.xlane.xlu0 %4314
    %4316 = vadd.xlane.f32.xlu0 %v4189
    %v4317 = vpop.xlane.xlu0 %4316
    %4318 = vadd.xlane.f32.xlu0 %v4191
    %v4319 = vpop.xlane.xlu0 %4318
    %4320 = vadd.xlane.f32.xlu0 %v4193
    %v4321 = vpop.xlane.xlu0 %4320
    %4322 = vadd.xlane.f32.xlu0 %v4195
    %v4323 = vpop.xlane.xlu0 %4322
    %4324 = vadd.xlane.f32.xlu0 %v4197
    %v4325 = vpop.xlane.xlu0 %4324
    %4326 = vadd.xlane.f32.xlu0 %v4199
    %v4327 = vpop.xlane.xlu0 %4326
    %4328 = vadd.xlane.f32.xlu0 %v4201
    %v4329 = vpop.xlane.xlu0 %4328
    %4330 = vadd.xlane.f32.xlu0 %v4203
    %v4331 = vpop.xlane.xlu0 %4330
    %4332 = vadd.xlane.f32.xlu0 %v4205
    %v4333 = vpop.xlane.xlu0 %4332
    %4334 = vadd.xlane.f32.xlu0 %v4207
    %v4335 = vpop.xlane.xlu0 %4334
    %4336 = vadd.xlane.f32.xlu0 %v4209
    %v4337 = vpop.xlane.xlu0 %4336
    %4338 = vadd.xlane.f32.xlu0 %v4211
    %v4339 = vpop.xlane.xlu0 %4338
    %4340 = vadd.xlane.f32.xlu0 %v4213
    %v4341 = vpop.xlane.xlu0 %4340
    %4342 = vadd.xlane.f32.xlu0 %v4215
    %v4343 = vpop.xlane.xlu0 %4342
    %4344 = vadd.xlane.f32.xlu0 %v4217
    %v4345 = vpop.xlane.xlu0 %4344
    %4346 = vadd.xlane.f32.xlu0 %v4219
    %v4347 = vpop.xlane.xlu0 %4346
    %4348 = vadd.xlane.f32.xlu0 %v4221
    %v4349 = vpop.xlane.xlu0 %4348
    %4350 = vadd.xlane.f32.xlu0 %v4223
    %v4351 = vpop.xlane.xlu0 %4350
    %4352 = vadd.xlane.f32.xlu0 %v4225
    %v4353 = vpop.xlane.xlu0 %4352
    %4354 = vadd.xlane.f32.xlu0 %v4227
    %v4355 = vpop.xlane.xlu0 %4354
    %4356 = vadd.xlane.f32.xlu0 %v4229
    %v4357 = vpop.xlane.xlu0 %4356
    %4358 = vadd.xlane.f32.xlu0 %v4231
    %v4359 = vpop.xlane.xlu0 %4358
    %4360 = vadd.xlane.f32.xlu0 %v4233
    %v4361 = vpop.xlane.xlu0 %4360
    %4362 = vadd.xlane.f32.xlu0 %v4235
    %v4363 = vpop.xlane.xlu0 %4362
    %4364 = vadd.xlane.f32.xlu0 %v4237
    %v4365 = vpop.xlane.xlu0 %4364
    %4366 = vadd.xlane.f32.xlu0 %v4239
    %v4367 = vpop.xlane.xlu0 %4366
    %4368 = vadd.xlane.f32.xlu0 %v4241
    %v4369 = vpop.xlane.xlu0 %4368
    %4370 = vadd.xlane.f32.xlu0 %v4243
    %v4371 = vpop.xlane.xlu0 %4370
    %4372 = vadd.xlane.f32.xlu0 %v4245
    %v4373 = vpop.xlane.xlu0 %4372
    %4374 = vadd.xlane.f32.xlu0 %v4247
    %v4375 = vpop.xlane.xlu0 %4374
    %4376 = vadd.xlane.f32.xlu0 %v4249
    %v4377 = vpop.xlane.xlu0 %4376
    %4378 = vadd.xlane.f32.xlu0 %v4251
    %v4379 = vpop.xlane.xlu0 %4378
    %4380 = vadd.xlane.f32.xlu0 %v4253
    %v4381 = vpop.xlane.xlu0 %4380
    %4382 = vadd.xlane.f32.xlu0 %v4255
    %v4383 = vpop.xlane.xlu0 %4382
    %4384 = vadd.xlane.f32.xlu0 %v4257
    %v4385 = vpop.xlane.xlu0 %4384
    %4386 = vadd.xlane.f32.xlu0 %v4259
    %v4387 = vpop.xlane.xlu0 %4386
    %4388 = vadd.xlane.f32.xlu0 %v4261
    %v4389 = vpop.xlane.xlu0 %4388
    %4390 = vadd.xlane.f32.xlu0 %v4263
    %v4391 = vpop.xlane.xlu0 %4390
    %4392 = vadd.xlane.f32.xlu0 %v4265
    %v4393 = vpop.xlane.xlu0 %4392
    %4394 = vadd.xlane.f32.xlu0 %v4267
    %v4395 = vpop.xlane.xlu0 %4394
    %4396 = vadd.xlane.f32.xlu0 %v4269
    %v4397 = vpop.xlane.xlu0 %4396
    %4398 = vadd.xlane.f32.xlu0 %v4271
    %v4399 = vpop.xlane.xlu0 %4398
    %4400 = vadd.xlane.f32.xlu0 %v4273
    %v4401 = vpop.xlane.xlu0 %4400
    %4402 = vadd.xlane.f32.xlu0 %v4275
    %v4403 = vpop.xlane.xlu0 %4402
    %4404 = vadd.xlane.f32.xlu0 %v4277
    %v4405 = vpop.xlane.xlu0 %4404
    %4406 = vadd.xlane.f32.xlu0 %v4279
    %v4407 = vpop.xlane.xlu0 %4406
    %4408 = vadd.xlane.f32.xlu0 %v4281
    %v4409 = vpop.xlane.xlu0 %4408
    %4410 = vadd.xlane.f32.xlu0 %v4283
    %v4411 = vpop.xlane.xlu0 %4410
    %4412 = vadd.xlane.f32.xlu0 %v4285
    %v4413 = vpop.xlane.xlu0 %4412
    %4414 = vadd.xlane.f32.xlu0 %v4287
    %v4415 = vpop.xlane.xlu0 %4414
    %v4416 = vlog2.pop %v4289
    %v4417 = vmul.f32 %v4416, 0.6931472
    %v4418 = vlog2.pop %v4291
    %v4419 = vmul.f32 %v4418, 0.6931472
    %v4420 = vlog2.pop %v4293
    %v4421 = vmul.f32 %v4420, 0.6931472
    %v4422 = vlog2.pop %v4295
    %v4423 = vmul.f32 %v4422, 0.6931472
    %v4424 = vlog2.pop %v4297
    %v4425 = vmul.f32 %v4424, 0.6931472
    %v4426 = vlog2.pop %v4299
    %v4427 = vmul.f32 %v4426, 0.6931472
    %v4428 = vlog2.pop %v4301
    %v4429 = vmul.f32 %v4428, 0.6931472
    %v4430 = vlog2.pop %v4303
    %v4431 = vmul.f32 %v4430, 0.6931472
    %v4432 = vlog2.pop %v4305
    %v4433 = vmul.f32 %v4432, 0.6931472
    %v4434 = vlog2.pop %v4307
    %v4435 = vmul.f32 %v4434, 0.6931472
    %v4436 = vlog2.pop %v4309
    %v4437 = vmul.f32 %v4436, 0.6931472
    %v4438 = vlog2.pop %v4311
    %v4439 = vmul.f32 %v4438, 0.6931472
    %v4440 = vlog2.pop %v4313
    %v4441 = vmul.f32 %v4440, 0.6931472
    %v4442 = vlog2.pop %v4315
    %v4443 = vmul.f32 %v4442, 0.6931472
    %v4444 = vlog2.pop %v4317
    %v4445 = vmul.f32 %v4444, 0.6931472
    %v4446 = vlog2.pop %v4319
    %v4447 = vmul.f32 %v4446, 0.6931472
    %v4448 = vlog2.pop %v4321
    %v4449 = vmul.f32 %v4448, 0.6931472
    %v4450 = vlog2.pop %v4323
    %v4451 = vmul.f32 %v4450, 0.6931472
    %v4452 = vlog2.pop %v4325
    %v4453 = vmul.f32 %v4452, 0.6931472
    %v4454 = vlog2.pop %v4327
    %v4455 = vmul.f32 %v4454, 0.6931472
    %v4456 = vlog2.pop %v4329
    %v4457 = vmul.f32 %v4456, 0.6931472
    %v4458 = vlog2.pop %v4331
    %v4459 = vmul.f32 %v4458, 0.6931472
    %v4460 = vlog2.pop %v4333
    %v4461 = vmul.f32 %v4460, 0.6931472
    %v4462 = vlog2.pop %v4335
    %v4463 = vmul.f32 %v4462, 0.6931472
    %v4464 = vlog2.pop %v4337
    %v4465 = vmul.f32 %v4464, 0.6931472
    %v4466 = vlog2.pop %v4339
    %v4467 = vmul.f32 %v4466, 0.6931472
    %v4468 = vlog2.pop %v4341
    %v4469 = vmul.f32 %v4468, 0.6931472
    %v4470 = vlog2.pop %v4343
    %v4471 = vmul.f32 %v4470, 0.6931472
    %v4472 = vlog2.pop %v4345
    %v4473 = vmul.f32 %v4472, 0.6931472
    %v4474 = vlog2.pop %v4347
    %v4475 = vmul.f32 %v4474, 0.6931472
    %v4476 = vlog2.pop %v4349
    %v4477 = vmul.f32 %v4476, 0.6931472
    %v4478 = vlog2.pop %v4351
    %v4479 = vmul.f32 %v4478, 0.6931472
    %v4480 = vlog2.pop %v4353
    %v4481 = vmul.f32 %v4480, 0.6931472
    %v4482 = vlog2.pop %v4355
    %v4483 = vmul.f32 %v4482, 0.6931472
    %v4484 = vlog2.pop %v4357
    %v4485 = vmul.f32 %v4484, 0.6931472
    %v4486 = vlog2.pop %v4359
    %v4487 = vmul.f32 %v4486, 0.6931472
    %v4488 = vlog2.pop %v4361
    %v4489 = vmul.f32 %v4488, 0.6931472
    %v4490 = vlog2.pop %v4363
    %v4491 = vmul.f32 %v4490, 0.6931472
    %v4492 = vlog2.pop %v4365
    %v4493 = vmul.f32 %v4492, 0.6931472
    %v4494 = vlog2.pop %v4367
    %v4495 = vmul.f32 %v4494, 0.6931472
    %v4496 = vlog2.pop %v4369
    %v4497 = vmul.f32 %v4496, 0.6931472
    %v4498 = vlog2.pop %v4371
    %v4499 = vmul.f32 %v4498, 0.6931472
    %v4500 = vlog2.pop %v4373
    %v4501 = vmul.f32 %v4500, 0.6931472
    %v4502 = vlog2.pop %v4375
    %v4503 = vmul.f32 %v4502, 0.6931472
    %v4504 = vlog2.pop %v4377
    %v4505 = vmul.f32 %v4504, 0.6931472
    %v4506 = vlog2.pop %v4379
    %v4507 = vmul.f32 %v4506, 0.6931472
    %v4508 = vlog2.pop %v4381
    %v4509 = vmul.f32 %v4508, 0.6931472
    %v4510 = vlog2.pop %v4383
    %v4511 = vmul.f32 %v4510, 0.6931472
    %v4512 = vlog2.pop %v4385
    %v4513 = vmul.f32 %v4512, 0.6931472
    %v4514 = vlog2.pop %v4387
    %v4515 = vmul.f32 %v4514, 0.6931472
    %v4516 = vlog2.pop %v4389
    %v4517 = vmul.f32 %v4516, 0.6931472
    %v4518 = vlog2.pop %v4391
    %v4519 = vmul.f32 %v4518, 0.6931472
    %v4520 = vlog2.pop %v4393
    %v4521 = vmul.f32 %v4520, 0.6931472
    %v4522 = vlog2.pop %v4395
    %v4523 = vmul.f32 %v4522, 0.6931472
    %v4524 = vlog2.pop %v4397
    %v4525 = vmul.f32 %v4524, 0.6931472
    %v4526 = vlog2.pop %v4399
    %v4527 = vmul.f32 %v4526, 0.6931472
    %v4528 = vlog2.pop %v4401
    %v4529 = vmul.f32 %v4528, 0.6931472
    %v4530 = vlog2.pop %v4403
    %v4531 = vmul.f32 %v4530, 0.6931472
    %v4532 = vlog2.pop %v4405
    %v4533 = vmul.f32 %v4532, 0.6931472
    %v4534 = vlog2.pop %v4407
    %v4535 = vmul.f32 %v4534, 0.6931472
    %v4536 = vlog2.pop %v4409
    %v4537 = vmul.f32 %v4536, 0.6931472
    %v4538 = vlog2.pop %v4411
    %v4539 = vmul.f32 %v4538, 0.6931472
    %v4540 = vlog2.pop %v4413
    %v4541 = vmul.f32 %v4540, 0.6931472
    %v4542 = vlog2.pop %v4415
    %v4543 = vmul.f32 %v4542, 0.6931472
    %v4544 = vsub.f32 %v4096, %v4417
    %v4545 = vsub.f32 %v4097, %v4419
    %v4546 = vsub.f32 %v4098, %v4421
    %v4547 = vsub.f32 %v4099, %v4423
    %v4548 = vsub.f32 %v4100, %v4425
    %v4549 = vsub.f32 %v4101, %v4427
    %v4550 = vsub.f32 %v4102, %v4429
    %v4551 = vsub.f32 %v4103, %v4431
    %v4552 = vsub.f32 %v4104, %v4433
    %v4553 = vsub.f32 %v4105, %v4435
    %v4554 = vsub.f32 %v4106, %v4437
    %v4555 = vsub.f32 %v4107, %v4439
    %v4556 = vsub.f32 %v4108, %v4441
    %v4557 = vsub.f32 %v4109, %v4443
    %v4558 = vsub.f32 %v4110, %v4445
    %v4559 = vsub.f32 %v4111, %v4447
    %v4560 = vsub.f32 %v4112, %v4449
    %v4561 = vsub.f32 %v4113, %v4451
    %v4562 = vsub.f32 %v4114, %v4453
    %v4563 = vsub.f32 %v4115, %v4455
    %v4564 = vsub.f32 %v4116, %v4457
    %v4565 = vsub.f32 %v4117, %v4459
    %v4566 = vsub.f32 %v4118, %v4461
    %v4567 = vsub.f32 %v4119, %v4463
    %v4568 = vsub.f32 %v4120, %v4465
    %v4569 = vsub.f32 %v4121, %v4467
    %v4570 = vsub.f32 %v4122, %v4469
    %v4571 = vsub.f32 %v4123, %v4471
    %v4572 = vsub.f32 %v4124, %v4473
    %v4573 = vsub.f32 %v4125, %v4475
    %v4574 = vsub.f32 %v4126, %v4477
    %v4575 = vsub.f32 %v4127, %v4479
    %v4576 = vsub.f32 %v4128, %v4481
    %v4577 = vsub.f32 %v4129, %v4483
    %v4578 = vsub.f32 %v4130, %v4485
    %v4579 = vsub.f32 %v4131, %v4487
    %v4580 = vsub.f32 %v4132, %v4489
    %v4581 = vsub.f32 %v4133, %v4491
    %v4582 = vsub.f32 %v4134, %v4493
    %v4583 = vsub.f32 %v4135, %v4495
    %v4584 = vsub.f32 %v4136, %v4497
    %v4585 = vsub.f32 %v4137, %v4499
    %v4586 = vsub.f32 %v4138, %v4501
    %v4587 = vsub.f32 %v4139, %v4503
    %v4588 = vsub.f32 %v4140, %v4505
    %v4589 = vsub.f32 %v4141, %v4507
    %v4590 = vsub.f32 %v4142, %v4509
    %v4591 = vsub.f32 %v4143, %v4511
    %v4592 = vsub.f32 %v4144, %v4513
    %v4593 = vsub.f32 %v4145, %v4515
    %v4594 = vsub.f32 %v4146, %v4517
    %v4595 = vsub.f32 %v4147, %v4519
    %v4596 = vsub.f32 %v4148, %v4521
    %v4597 = vsub.f32 %v4149, %v4523
    %v4598 = vsub.f32 %v4150, %v4525
    %v4599 = vsub.f32 %v4151, %v4527
    %v4600 = vsub.f32 %v4152, %v4529
    %v4601 = vsub.f32 %v4153, %v4531
    %v4602 = vsub.f32 %v4154, %v4533
    %v4603 = vsub.f32 %v4155, %v4535
    %v4604 = vsub.f32 %v4156, %v4537
    %v4605 = vsub.f32 %v4157, %v4539
    %v4606 = vsub.f32 %v4158, %v4541
    %v4607 = vsub.f32 %v4159, %v4543
    %4608 = vst [vmem:[#allocation2] sm:$0xff] %v4544
    %4609 = vst [vmem:[#allocation2 + $0x8] sm:$0xff] %v4545
    %4610 = vst [vmem:[#allocation2 + $0x10] sm:$0xff] %v4546
    %4611 = vst [vmem:[#allocation2 + $0x18] sm:$0xff] %v4547
    %4612 = vst [vmem:[#allocation2 + $0x20] sm:$0xff] %v4548
    %4613 = vst [vmem:[#allocation2 + $0x28] sm:$0xff] %v4549
    %4614 = vst [vmem:[#allocation2 + $0x30] sm:$0xff] %v4550
    %4615 = vst [vmem:[#allocation2 + $0x38] sm:$0xff] %v4551
    %4616 = vst [vmem:[#allocation2 + $0x40] sm:$0xff] %v4552
    %4617 = vst [vmem:[#allocation2 + $0x48] sm:$0xff] %v4553
    %4618 = vst [vmem:[#allocation2 + $0x50] sm:$0xff] %v4554
    %4619 = vst [vmem:[#allocation2 + $0x58] sm:$0xff] %v4555
    %4620 = vst [vmem:[#allocation2 + $0x60] sm:$0xff] %v4556
    %4621 = vst [vmem:[#allocation2 + $0x68] sm:$0xff] %v4557
    %4622 = vst [vmem:[#allocation2 + $0x70] sm:$0xff] %v4558
    %4623 = vst [vmem:[#allocation2 + $0x78] sm:$0xff] %v4559
    %4624 = vst [vmem:[#allocation2 + $0x80] sm:$0xff] %v4560
    %4625 = vst [vmem:[#allocation2 + $0x88] sm:$0xff] %v4561
    %4626 = vst [vmem:[#allocation2 + $0x90] sm:$0xff] %v4562
    %4627 = vst [vmem:[#allocation2 + $0x98] sm:$0xff] %v4563
    %4628 = vst [vmem:[#allocation2 + $0xa0] sm:$0xff] %v4564
    %4629 = vst [vmem:[#allocation2 + $0xa8] sm:$0xff] %v4565
    %4630 = vst [vmem:[#allocation2 + $0xb0] sm:$0xff] %v4566
    %4631 = vst [vmem:[#allocation2 + $0xb8] sm:$0xff] %v4567
    %4632 = vst [vmem:[#allocation2 + $0xc0] sm:$0xff] %v4568
    %4633 = vst [vmem:[#allocation2 + $0xc8] sm:$0xff] %v4569
    %4634 = vst [vmem:[#allocation2 + $0xd0] sm:$0xff] %v4570
    %4635 = vst [vmem:[#allocation2 + $0xd8] sm:$0xff] %v4571
    %4636 = vst [vmem:[#allocation2 + $0xe0] sm:$0xff] %v4572
    %4637 = vst [vmem:[#allocation2 + $0xe8] sm:$0xff] %v4573
    %4638 = vst [vmem:[#allocation2 + $0xf0] sm:$0xff] %v4574
    %4639 = vst [vmem:[#allocation2 + $0xf8] sm:$0xff] %v4575
    %4640 = vst [vmem:[#allocation2 + $0x100] sm:$0xff] %v4576
    %4641 = vst [vmem:[#allocation2 + $0x108] sm:$0xff] %v4577
    %4642 = vst [vmem:[#allocation2 + $0x110] sm:$0xff] %v4578
    %4643 = vst [vmem:[#allocation2 + $0x118] sm:$0xff] %v4579
    %4644 = vst [vmem:[#allocation2 + $0x120] sm:$0xff] %v4580
    %4645 = vst [vmem:[#allocation2 + $0x128] sm:$0xff] %v4581
    %4646 = vst [vmem:[#allocation2 + $0x130] sm:$0xff] %v4582
    %4647 = vst [vmem:[#allocation2 + $0x138] sm:$0xff] %v4583
    %4648 = vst [vmem:[#allocation2 + $0x140] sm:$0xff] %v4584
    %4649 = vst [vmem:[#allocation2 + $0x148] sm:$0xff] %v4585
    %4650 = vst [vmem:[#allocation2 + $0x150] sm:$0xff] %v4586
    %4651 = vst [vmem:[#allocation2 + $0x158] sm:$0xff] %v4587
    %4652 = vst [vmem:[#allocation2 + $0x160] sm:$0xff] %v4588
    %4653 = vst [vmem:[#allocation2 + $0x168] sm:$0xff] %v4589
    %4654 = vst [vmem:[#allocation2 + $0x170] sm:$0xff] %v4590
    %4655 = vst [vmem:[#allocation2 + $0x178] sm:$0xff] %v4591
    %4656 = vst [vmem:[#allocation2 + $0x180] sm:$0xff] %v4592
    %4657 = vst [vmem:[#allocation2 + $0x188] sm:$0xff] %v4593
    %4658 = vst [vmem:[#allocation2 + $0x190] sm:$0xff] %v4594
    %4659 = vst [vmem:[#allocation2 + $0x198] sm:$0xff] %v4595
    %4660 = vst [vmem:[#allocation2 + $0x1a0] sm:$0xff] %v4596
    %4661 = vst [vmem:[#allocation2 + $0x1a8] sm:$0xff] %v4597
    %4662 = vst [vmem:[#allocation2 + $0x1b0] sm:$0xff] %v4598
    %4663 = vst [vmem:[#allocation2 + $0x1b8] sm:$0xff] %v4599
    %4664 = vst [vmem:[#allocation2 + $0x1c0] sm:$0xff] %v4600
    %4665 = vst [vmem:[#allocation2 + $0x1c8] sm:$0xff] %v4601
    %4666 = vst [vmem:[#allocation2 + $0x1d0] sm:$0xff] %v4602
    %4667 = vst [vmem:[#allocation2 + $0x1d8] sm:$0xff] %v4603
    %4668 = vst [vmem:[#allocation2 + $0x1e0] sm:$0xff] %v4604
    %4669 = vst [vmem:[#allocation2 + $0x1e8] sm:$0xff] %v4605
    %4670 = vst [vmem:[#allocation2 + $0x1f0] sm:$0xff] %v4606
    %4671 = vst [vmem:[#allocation2 + $0x1f8] sm:$0xff] %v4607
    // Predicated region
    $region30: #{tpu_custom_call.1} parent=1 // pred_check
      _
    $region31: #{tpu_custom_call.1} parent=1 // pred_check_branch
      %4673 = sbr.rel (0) target = $region33
    $region32: #{tpu_custom_call.1} parent=1 // pred_region
      %s4675 = ssub.s32 8192, 8192
      %4676 = vsyncadd [#allocation3], %s4675
      %s4677 = sshll.u32 [#allocation2], 4
      %s4678 = int_to_ptr.vmem [resolvable:$true] %s4677
      %4683 = dma.vmem_to_hbm [thread:$0]  %s4678, 8192, %s7, [#allocation3], 128, 128, 8
    $region33: #{tpu_custom_call.1} parent=1 // pred_fallthru
      _
    // Predicated region
    $region34: #{tpu_custom_call.1} parent=1 // pred_check
      _
    $region35: #{tpu_custom_call.1} parent=1 // pred_check_branch
      %4685 = sbr.rel (0) target = $region37
    $region36: #{tpu_custom_call.1} parent=1 // pred_region
      %4686 = dma.done [#allocation3], 8192
    $region37: #{tpu_custom_call.1} parent=1 // pred_fallthru
      _
    %4687 = vsyncpa [#allocation3], 1

</llo_original>
